<compile_context>
chip_gen: v7x
topology: tpu7x:2x2x1
jax: 0.10.0
libtpu: 0.0.40
codegen_flags: <defaults>
</compile_context>

<pallas_src>
import functools

import jax
import jax.numpy as jnp
from jax.experimental import pallas as pl
from jax.experimental.pallas import tpu as pltpu


def _basic_block_kernel(x_ref, w1_ref, b1_ref, w2_ref, b2_ref, mask_ref,
                        o_ref, hbuf_ref, *, wp: int, ofs: int):
    """Fused BasicBlock body for one image.

    x_ref    : (1, Cin, Sext)  zero-padded image, flattened spatial in lanes,
                               image data starts at lane `ofs`, zeros around it.
    w*_ref   : (9, Cin, Cout, 1)  BN-folded conv weights, tap = ky*3+kx.
    b*_ref   : (Cout, 1)          BN-folded bias.
    mask_ref : (1, Sp)            1.0 on interior pixels, 0.0 on the halo.
    o_ref    : (1, Cout, Sp)      output in the padded-flat layout.
    hbuf_ref : (Cin, Sext) VMEM   inter-layer activation with zero halo.
    """
    cin = x_ref.shape[1]
    cout = o_ref.shape[1]
    sp = o_ref.shape[2]       # flattened padded spatial, multiple of 128
    sext = x_ref.shape[2]

    mask = mask_ref[...]      # (1, sp)

    def conv3x3(tap_load, w_ref):
        # 3x3 conv as 9 shifted window loads + 36 VPU broadcast FMAs.
        acc = jnp.zeros((cout, sp), jnp.float32)
        for ky in range(3):
            for kx in range(3):
                start = ofs + (ky - 1) * wp + (kx - 1)
                tap = tap_load(start)                     # (cin, sp)
                t = ky * 3 + kx
                for ci in range(cin):
                    # (cout, 1) * (1, sp) -> (cout, sp): pure VPU, no MXU.
                    acc = acc + w_ref[t, ci] * tap[ci:ci + 1, :]
        return acc

    # ---- conv1 + folded bn1 + relu ------------------------------------
    h = conv3x3(lambda s: x_ref[0, :, s:s + sp], w1_ref)
    h = jnp.maximum(h + b1_ref[...], 0.0) * mask          # re-zero the halo

    # stage the activation in VMEM with a zero halo for conv2's taps
    hbuf_ref[...] = jnp.zeros((cin, sext), jnp.float32)
    hbuf_ref[:, ofs:ofs + sp] = h

    # ---- conv2 + folded bn2 + residual + relu --------------------------
    res = x_ref[0, :, ofs:ofs + sp]                       # residual (0 on halo)
    out = conv3x3(lambda s: hbuf_ref[:, s:s + sp], w2_ref)
    out = jnp.maximum(out + b2_ref[...] + res, 0.0)
    o_ref[0] = out.astype(o_ref.dtype)


def basic_block_forward(x_nchw, params, eps=1e-5):
    """BasicBlock forward.  x_nchw: (N, C, H, W) float32 -> (N, C, H, W)."""
    N, C, H, W = x_nchw.shape
    cout = params["w1"].shape[0]
    assert params["w1"].shape == (cout, C, 3, 3)
    assert cout == C, "BasicBlock without downsample requires inplanes == planes"
    # TODO(synk): stride>1 / dilation>1 / downsample branch not implemented
    #             (default BasicBlock config: stride=1, dilation=(1,1), residual).

    Hp, Wp = H + 2, W + 2
    sp_raw = Hp * Wp
    SP = ((sp_raw + 127) // 128) * 128        # lane-dense flattened spatial
    OFS = 128                                 # aligned halo before the image
    SEXT = OFS + SP + 128                     # + aligned halo after

    def fold(w, gamma, beta, mean, var):
        scale = gamma / jnp.sqrt(var + eps)                    # (Cout,)
        wf = w * scale[:, None, None, None]                    # fold BN scale
        bf = (beta - mean * scale)[:, None]                    # (Cout, 1)
        # (Cout, Cin, 3, 3) -> (tap, Cin, Cout, 1), tap = ky*3 + kx
        wk = jnp.transpose(wf, (2, 3, 1, 0)).reshape(9, C, cout)[..., None]
        return wk, bf

    w1k, b1k = fold(params["w1"], params["bn1_gamma"], params["bn1_beta"],
                    params["bn1_mean"], params["bn1_var"])
    w2k, b2k = fold(params["w2"], params["bn2_gamma"], params["bn2_beta"],
                    params["bn2_mean"], params["bn2_var"])

    # zero-pad spatially, flatten HxW into the lane dim, add aligned halos
    xp = jnp.pad(x_nchw, ((0, 0), (0, 0), (1, 1), (1, 1))).reshape(N, C, sp_raw)
    x_ext = jnp.pad(xp, ((0, 0), (0, 0), (OFS, SEXT - OFS - sp_raw)))

    # interior mask over the padded-flat layout
    f = jnp.arange(SP)
    yy, xx = f // Wp, f % Wp
    mask = ((f < sp_raw) & (yy >= 1) & (yy <= H) & (xx >= 1) & (xx <= W))
    mask = mask.astype(jnp.float32)[None, :]                   # (1, SP)

    kernel = functools.partial(_basic_block_kernel, wp=Wp, ofs=OFS)

    out_flat = pl.pallas_call(
        kernel,
        out_shape=jax.ShapeDtypeStruct((N, cout, SP), jnp.float32),
        grid_spec=pltpu.PrefetchScalarGridSpec(
            num_scalar_prefetch=0,
            grid=(N,),
            in_specs=[
                pl.BlockSpec((1, C, SEXT), lambda n: (n, 0, 0)),
                pl.BlockSpec((9, C, cout, 1), lambda n: (0, 0, 0, 0)),
                pl.BlockSpec((cout, 1), lambda n: (0, 0)),
                pl.BlockSpec((9, C, cout, 1), lambda n: (0, 0, 0, 0)),
                pl.BlockSpec((cout, 1), lambda n: (0, 0)),
                pl.BlockSpec((1, SP), lambda n: (0, 0)),
            ],
            out_specs=pl.BlockSpec((1, cout, SP), lambda n: (n, 0, 0)),
            scratch_shapes=[pltpu.VMEM((C, SEXT), jnp.float32)],
        ),
        compiler_params=pltpu.CompilerParams(
            dimension_semantics=("parallel",)),
    )(x_ext, w1k, b1k, w2k, b2k, mask)

    # un-flatten, drop the conv halo (tiny XLA slice on the final result)
    out = out_flat[:, :, :sp_raw].reshape(N, cout, Hp, Wp)[:, :, 1:-1, 1:-1]
    return out


def _reference(x, params, eps=1e-5):
    """Pure-JAX reference (lax conv, NCHW/OIHW like PyTorch)."""
    dn = ("NCHW", "OIHW", "NCHW")

    def bn(y, g, b, m, v):
        g = g[None, :, None, None]
        b = b[None, :, None, None]
        m = m[None, :, None, None]
        v = v[None, :, None, None]
        return (y - m) / jnp.sqrt(v + eps) * g + b

    y = jax.lax.conv_general_dilated(x, params["w1"], (1, 1), ((1, 1), (1, 1)),
                                     dimension_numbers=dn)
    y = jax.nn.relu(bn(y, params["bn1_gamma"], params["bn1_beta"],
                       params["bn1_mean"], params["bn1_var"]))
    y = jax.lax.conv_general_dilated(y, params["w2"], (1, 1), ((1, 1), (1, 1)),
                                     dimension_numbers=dn)
    y = bn(y, params["bn2_gamma"], params["bn2_beta"],
           params["bn2_mean"], params["bn2_var"])
    return jax.nn.relu(y + x)


if __name__ == "__main__":
    key = jax.random.PRNGKey(0)
    N, C, H, W = 2, 4, 16, 16               # inplanes = planes = 4
    ks = jax.random.split(key, 8)

    x = jax.random.normal(ks[0], (N, C, H, W), jnp.float32)

    params = {
        # conv weights in PyTorch OIHW layout (Cout, Cin, 3, 3)
        "w1": jax.random.normal(ks[1], (C, C, 3, 3), jnp.float32) * 0.1,
        "w2": jax.random.normal(ks[2], (C, C, 3, 3), jnp.float32) * 0.1,
        "bn1_gamma": 1.0 + 0.1 * jax.random.normal(ks[3], (C,), jnp.float32),
        "bn1_beta": 0.1 * jax.random.normal(ks[4], (C,), jnp.float32),
        "bn1_mean": 0.05 * jnp.arange(C, dtype=jnp.float32),
        "bn1_var": 1.0 + 0.02 * jnp.arange(C, dtype=jnp.float32),
        "bn2_gamma": 1.0 + 0.1 * jax.random.normal(ks[5], (C,), jnp.float32),
        "bn2_beta": 0.1 * jax.random.normal(ks[6], (C,), jnp.float32),
        "bn2_mean": 0.03 * jnp.arange(C, dtype=jnp.float32),
        "bn2_var": 1.0 + 0.01 * jnp.arange(C, dtype=jnp.float32),
    }

    out = jax.block_until_ready(basic_block_forward(x, params))
    ref = jax.block_until_ready(_reference(x, params))
    assert out.shape == (N, C, H, W)
    err = jnp.max(jnp.abs(out - ref))
    assert jnp.allclose(out, ref, atol=1e-4, rtol=1e-4), f"max err {err}"
    print("KERNEL_OK")
</pallas_src>

<mosaic_0001>
module attributes {stable_mosaic.version = 11 : i64} {
  func.func @_basic_block_kernel(%arg0: i32, %arg1: memref<1x4x640xf32, #tpu.memory_space<vmem>>, %arg2: memref<9x4x4x1xf32, #tpu.memory_space<vmem>>, %arg3: memref<4x1xf32, #tpu.memory_space<vmem>>, %arg4: memref<9x4x4x1xf32, #tpu.memory_space<vmem>>, %arg5: memref<4x1xf32, #tpu.memory_space<vmem>>, %arg6: memref<1x384xf32, #tpu.memory_space<vmem>>, %arg7: memref<1x4x384xf32, #tpu.memory_space<vmem>>, %arg8: memref<4x640xf32, #tpu.memory_space<vmem>>) attributes {dimension_semantics = [#tpu.dimension_semantics<parallel>], iteration_bounds = array<i64: 2>, scalar_prefetch = 0 : i64, scratch_operands = 1 : i64, tpu.core_type = #tpu.core_type<tc>, window_params = [{transform_indices = @transform_0, window_bounds = array<i64: 1, 4, 640>}, {pipeline_mode = #tpu.pipeline_mode<synchronous>, transform_indices = @transform_1, window_bounds = array<i64: 9, 4, 4, 1>}, {pipeline_mode = #tpu.pipeline_mode<synchronous>, transform_indices = @transform_2, window_bounds = array<i64: 4, 1>}, {pipeline_mode = #tpu.pipeline_mode<synchronous>, transform_indices = @transform_3, window_bounds = array<i64: 9, 4, 4, 1>}, {pipeline_mode = #tpu.pipeline_mode<synchronous>, transform_indices = @transform_4, window_bounds = array<i64: 4, 1>}, {pipeline_mode = #tpu.pipeline_mode<synchronous>, transform_indices = @transform_5, window_bounds = array<i64: 1, 384>}, {transform_indices = @transform_6, window_bounds = array<i64: 1, 4, 384>}]} {
    %c0 = arith.constant 0 : index
    %c0_0 = arith.constant 0 : index
    %0 = vector.load %arg6[%c0, %c0_0] : memref<1x384xf32, #tpu.memory_space<vmem>>, vector<1x384xf32>
    %cst = arith.constant 0.000000e+00 : f32
    %1 = vector.broadcast %cst : f32 to vector<4x384xf32>
    %c0_1 = arith.constant 0 : index
    %c0_2 = arith.constant 0 : index
    %c109 = arith.constant 109 : index
    %2 = vector.load %arg1[%c0_1, %c0_2, %c109] : memref<1x4x640xf32, #tpu.memory_space<vmem>>, vector<1x4x384xf32>
    %3 = vector.shape_cast %2 : vector<1x4x384xf32> to vector<4x384xf32>
    %c0_3 = arith.constant 0 : index
    %c0_4 = arith.constant 0 : index
    %c0_5 = arith.constant 0 : index
    %c0_6 = arith.constant 0 : index
    %4 = vector.load %arg2[%c0_3, %c0_4, %c0_5, %c0_6] : memref<9x4x4x1xf32, #tpu.memory_space<vmem>>, vector<1x1x4x1xf32>
    %5 = vector.shape_cast %4 : vector<1x1x4x1xf32> to vector<4x1xf32>
    %6 = vector.extract_strided_slice %3 {offsets = [0, 0], sizes = [1, 384], strides = [1, 1]} : vector<4x384xf32> to vector<1x384xf32>
    %7 = vector.broadcast %5 : vector<4x1xf32> to vector<4x384xf32>
    %8 = vector.broadcast %6 : vector<1x384xf32> to vector<4x384xf32>
    %9 = arith.mulf %7, %8 : vector<4x384xf32>
    %10 = arith.addf %1, %9 : vector<4x384xf32>
    %c0_7 = arith.constant 0 : index
    %c1 = arith.constant 1 : index
    %c0_8 = arith.constant 0 : index
    %c0_9 = arith.constant 0 : index
    %11 = vector.load %arg2[%c0_7, %c1, %c0_8, %c0_9] : memref<9x4x4x1xf32, #tpu.memory_space<vmem>>, vector<1x1x4x1xf32>
    %12 = vector.shape_cast %11 : vector<1x1x4x1xf32> to vector<4x1xf32>
    %13 = vector.extract_strided_slice %3 {offsets = [1, 0], sizes = [1, 384], strides = [1, 1]} : vector<4x384xf32> to vector<1x384xf32>
    %14 = vector.broadcast %12 : vector<4x1xf32> to vector<4x384xf32>
    %15 = vector.broadcast %13 : vector<1x384xf32> to vector<4x384xf32>
    %16 = arith.mulf %14, %15 : vector<4x384xf32>
    %17 = arith.addf %10, %16 : vector<4x384xf32>
    %c0_10 = arith.constant 0 : index
    %c2 = arith.constant 2 : index
    %c0_11 = arith.constant 0 : index
    %c0_12 = arith.constant 0 : index
    %18 = vector.load %arg2[%c0_10, %c2, %c0_11, %c0_12] : memref<9x4x4x1xf32, #tpu.memory_space<vmem>>, vector<1x1x4x1xf32>
    %19 = vector.shape_cast %18 : vector<1x1x4x1xf32> to vector<4x1xf32>
    %20 = vector.extract_strided_slice %3 {offsets = [2, 0], sizes = [1, 384], strides = [1, 1]} : vector<4x384xf32> to vector<1x384xf32>
    %21 = vector.broadcast %19 : vector<4x1xf32> to vector<4x384xf32>
    %22 = vector.broadcast %20 : vector<1x384xf32> to vector<4x384xf32>
    %23 = arith.mulf %21, %22 : vector<4x384xf32>
    %24 = arith.addf %17, %23 : vector<4x384xf32>
    %c0_13 = arith.constant 0 : index
    %c3 = arith.constant 3 : index
    %c0_14 = arith.constant 0 : index
    %c0_15 = arith.constant 0 : index
    %25 = vector.load %arg2[%c0_13, %c3, %c0_14, %c0_15] : memref<9x4x4x1xf32, #tpu.memory_space<vmem>>, vector<1x1x4x1xf32>
    %26 = vector.shape_cast %25 : vector<1x1x4x1xf32> to vector<4x1xf32>
    %27 = vector.extract_strided_slice %3 {offsets = [3, 0], sizes = [1, 384], strides = [1, 1]} : vector<4x384xf32> to vector<1x384xf32>
    %28 = vector.broadcast %26 : vector<4x1xf32> to vector<4x384xf32>
    %29 = vector.broadcast %27 : vector<1x384xf32> to vector<4x384xf32>
    %30 = arith.mulf %28, %29 : vector<4x384xf32>
    %31 = arith.addf %24, %30 : vector<4x384xf32>
    %c0_16 = arith.constant 0 : index
    %c0_17 = arith.constant 0 : index
    %c110 = arith.constant 110 : index
    %32 = vector.load %arg1[%c0_16, %c0_17, %c110] : memref<1x4x640xf32, #tpu.memory_space<vmem>>, vector<1x4x384xf32>
    %33 = vector.shape_cast %32 : vector<1x4x384xf32> to vector<4x384xf32>
    %c1_18 = arith.constant 1 : index
    %c0_19 = arith.constant 0 : index
    %c0_20 = arith.constant 0 : index
    %c0_21 = arith.constant 0 : index
    %34 = vector.load %arg2[%c1_18, %c0_19, %c0_20, %c0_21] : memref<9x4x4x1xf32, #tpu.memory_space<vmem>>, vector<1x1x4x1xf32>
    %35 = vector.shape_cast %34 : vector<1x1x4x1xf32> to vector<4x1xf32>
    %36 = vector.extract_strided_slice %33 {offsets = [0, 0], sizes = [1, 384], strides = [1, 1]} : vector<4x384xf32> to vector<1x384xf32>
    %37 = vector.broadcast %35 : vector<4x1xf32> to vector<4x384xf32>
    %38 = vector.broadcast %36 : vector<1x384xf32> to vector<4x384xf32>
    %39 = arith.mulf %37, %38 : vector<4x384xf32>
    %40 = arith.addf %31, %39 : vector<4x384xf32>
    %c1_22 = arith.constant 1 : index
    %c1_23 = arith.constant 1 : index
    %c0_24 = arith.constant 0 : index
    %c0_25 = arith.constant 0 : index
    %41 = vector.load %arg2[%c1_22, %c1_23, %c0_24, %c0_25] : memref<9x4x4x1xf32, #tpu.memory_space<vmem>>, vector<1x1x4x1xf32>
    %42 = vector.shape_cast %41 : vector<1x1x4x1xf32> to vector<4x1xf32>
    %43 = vector.extract_strided_slice %33 {offsets = [1, 0], sizes = [1, 384], strides = [1, 1]} : vector<4x384xf32> to vector<1x384xf32>
    %44 = vector.broadcast %42 : vector<4x1xf32> to vector<4x384xf32>
    %45 = vector.broadcast %43 : vector<1x384xf32> to vector<4x384xf32>
    %46 = arith.mulf %44, %45 : vector<4x384xf32>
    %47 = arith.addf %40, %46 : vector<4x384xf32>
    %c1_26 = arith.constant 1 : index
    %c2_27 = arith.constant 2 : index
    %c0_28 = arith.constant 0 : index
    %c0_29 = arith.constant 0 : index
    %48 = vector.load %arg2[%c1_26, %c2_27, %c0_28, %c0_29] : memref<9x4x4x1xf32, #tpu.memory_space<vmem>>, vector<1x1x4x1xf32>
    %49 = vector.shape_cast %48 : vector<1x1x4x1xf32> to vector<4x1xf32>
    %50 = vector.extract_strided_slice %33 {offsets = [2, 0], sizes = [1, 384], strides = [1, 1]} : vector<4x384xf32> to vector<1x384xf32>
    %51 = vector.broadcast %49 : vector<4x1xf32> to vector<4x384xf32>
    %52 = vector.broadcast %50 : vector<1x384xf32> to vector<4x384xf32>
    %53 = arith.mulf %51, %52 : vector<4x384xf32>
    %54 = arith.addf %47, %53 : vector<4x384xf32>
    %c1_30 = arith.constant 1 : index
    %c3_31 = arith.constant 3 : index
    %c0_32 = arith.constant 0 : index
    %c0_33 = arith.constant 0 : index
    %55 = vector.load %arg2[%c1_30, %c3_31, %c0_32, %c0_33] : memref<9x4x4x1xf32, #tpu.memory_space<vmem>>, vector<1x1x4x1xf32>
    %56 = vector.shape_cast %55 : vector<1x1x4x1xf32> to vector<4x1xf32>
    %57 = vector.extract_strided_slice %33 {offsets = [3, 0], sizes = [1, 384], strides = [1, 1]} : vector<4x384xf32> to vector<1x384xf32>
    %58 = vector.broadcast %56 : vector<4x1xf32> to vector<4x384xf32>
    %59 = vector.broadcast %57 : vector<1x384xf32> to vector<4x384xf32>
    %60 = arith.mulf %58, %59 : vector<4x384xf32>
    %61 = arith.addf %54, %60 : vector<4x384xf32>
    %c0_34 = arith.constant 0 : index
    %c0_35 = arith.constant 0 : index
    %c111 = arith.constant 111 : index
    %62 = vector.load %arg1[%c0_34, %c0_35, %c111] : memref<1x4x640xf32, #tpu.memory_space<vmem>>, vector<1x4x384xf32>
    %63 = vector.shape_cast %62 : vector<1x4x384xf32> to vector<4x384xf32>
    %c2_36 = arith.constant 2 : index
    %c0_37 = arith.constant 0 : index
    %c0_38 = arith.constant 0 : index
    %c0_39 = arith.constant 0 : index
    %64 = vector.load %arg2[%c2_36, %c0_37, %c0_38, %c0_39] : memref<9x4x4x1xf32, #tpu.memory_space<vmem>>, vector<1x1x4x1xf32>
    %65 = vector.shape_cast %64 : vector<1x1x4x1xf32> to vector<4x1xf32>
    %66 = vector.extract_strided_slice %63 {offsets = [0, 0], sizes = [1, 384], strides = [1, 1]} : vector<4x384xf32> to vector<1x384xf32>
    %67 = vector.broadcast %65 : vector<4x1xf32> to vector<4x384xf32>
    %68 = vector.broadcast %66 : vector<1x384xf32> to vector<4x384xf32>
    %69 = arith.mulf %67, %68 : vector<4x384xf32>
    %70 = arith.addf %61, %69 : vector<4x384xf32>
    %c2_40 = arith.constant 2 : index
    %c1_41 = arith.constant 1 : index
    %c0_42 = arith.constant 0 : index
    %c0_43 = arith.constant 0 : index
    %71 = vector.load %arg2[%c2_40, %c1_41, %c0_42, %c0_43] : memref<9x4x4x1xf32, #tpu.memory_space<vmem>>, vector<1x1x4x1xf32>
    %72 = vector.shape_cast %71 : vector<1x1x4x1xf32> to vector<4x1xf32>
    %73 = vector.extract_strided_slice %63 {offsets = [1, 0], sizes = [1, 384], strides = [1, 1]} : vector<4x384xf32> to vector<1x384xf32>
    %74 = vector.broadcast %72 : vector<4x1xf32> to vector<4x384xf32>
    %75 = vector.broadcast %73 : vector<1x384xf32> to vector<4x384xf32>
    %76 = arith.mulf %74, %75 : vector<4x384xf32>
    %77 = arith.addf %70, %76 : vector<4x384xf32>
    %c2_44 = arith.constant 2 : index
    %c2_45 = arith.constant 2 : index
    %c0_46 = arith.constant 0 : index
    %c0_47 = arith.constant 0 : index
    %78 = vector.load %arg2[%c2_44, %c2_45, %c0_46, %c0_47] : memref<9x4x4x1xf32, #tpu.memory_space<vmem>>, vector<1x1x4x1xf32>
    %79 = vector.shape_cast %78 : vector<1x1x4x1xf32> to vector<4x1xf32>
    %80 = vector.extract_strided_slice %63 {offsets = [2, 0], sizes = [1, 384], strides = [1, 1]} : vector<4x384xf32> to vector<1x384xf32>
    %81 = vector.broadcast %79 : vector<4x1xf32> to vector<4x384xf32>
    %82 = vector.broadcast %80 : vector<1x384xf32> to vector<4x384xf32>
    %83 = arith.mulf %81, %82 : vector<4x384xf32>
    %84 = arith.addf %77, %83 : vector<4x384xf32>
    %c2_48 = arith.constant 2 : index
    %c3_49 = arith.constant 3 : index
    %c0_50 = arith.constant 0 : index
    %c0_51 = arith.constant 0 : index
    %85 = vector.load %arg2[%c2_48, %c3_49, %c0_50, %c0_51] : memref<9x4x4x1xf32, #tpu.memory_space<vmem>>, vector<1x1x4x1xf32>
    %86 = vector.shape_cast %85 : vector<1x1x4x1xf32> to vector<4x1xf32>
    %87 = vector.extract_strided_slice %63 {offsets = [3, 0], sizes = [1, 384], strides = [1, 1]} : vector<4x384xf32> to vector<1x384xf32>
    %88 = vector.broadcast %86 : vector<4x1xf32> to vector<4x384xf32>
    %89 = vector.broadcast %87 : vector<1x384xf32> to vector<4x384xf32>
    %90 = arith.mulf %88, %89 : vector<4x384xf32>
    %91 = arith.addf %84, %90 : vector<4x384xf32>
    %c0_52 = arith.constant 0 : index
    %c0_53 = arith.constant 0 : index
    %c127 = arith.constant 127 : index
    %92 = vector.load %arg1[%c0_52, %c0_53, %c127] : memref<1x4x640xf32, #tpu.memory_space<vmem>>, vector<1x4x384xf32>
    %93 = vector.shape_cast %92 : vector<1x4x384xf32> to vector<4x384xf32>
    %c3_54 = arith.constant 3 : index
    %c0_55 = arith.constant 0 : index
    %c0_56 = arith.constant 0 : index
    %c0_57 = arith.constant 0 : index
    %94 = vector.load %arg2[%c3_54, %c0_55, %c0_56, %c0_57] : memref<9x4x4x1xf32, #tpu.memory_space<vmem>>, vector<1x1x4x1xf32>
    %95 = vector.shape_cast %94 : vector<1x1x4x1xf32> to vector<4x1xf32>
    %96 = vector.extract_strided_slice %93 {offsets = [0, 0], sizes = [1, 384], strides = [1, 1]} : vector<4x384xf32> to vector<1x384xf32>
    %97 = vector.broadcast %95 : vector<4x1xf32> to vector<4x384xf32>
    %98 = vector.broadcast %96 : vector<1x384xf32> to vector<4x384xf32>
    %99 = arith.mulf %97, %98 : vector<4x384xf32>
    %100 = arith.addf %91, %99 : vector<4x384xf32>
    %c3_58 = arith.constant 3 : index
    %c1_59 = arith.constant 1 : index
    %c0_60 = arith.constant 0 : index
    %c0_61 = arith.constant 0 : index
    %101 = vector.load %arg2[%c3_58, %c1_59, %c0_60, %c0_61] : memref<9x4x4x1xf32, #tpu.memory_space<vmem>>, vector<1x1x4x1xf32>
    %102 = vector.shape_cast %101 : vector<1x1x4x1xf32> to vector<4x1xf32>
    %103 = vector.extract_strided_slice %93 {offsets = [1, 0], sizes = [1, 384], strides = [1, 1]} : vector<4x384xf32> to vector<1x384xf32>
    %104 = vector.broadcast %102 : vector<4x1xf32> to vector<4x384xf32>
    %105 = vector.broadcast %103 : vector<1x384xf32> to vector<4x384xf32>
    %106 = arith.mulf %104, %105 : vector<4x384xf32>
    %107 = arith.addf %100, %106 : vector<4x384xf32>
    %c3_62 = arith.constant 3 : index
    %c2_63 = arith.constant 2 : index
    %c0_64 = arith.constant 0 : index
    %c0_65 = arith.constant 0 : index
    %108 = vector.load %arg2[%c3_62, %c2_63, %c0_64, %c0_65] : memref<9x4x4x1xf32, #tpu.memory_space<vmem>>, vector<1x1x4x1xf32>
    %109 = vector.shape_cast %108 : vector<1x1x4x1xf32> to vector<4x1xf32>
    %110 = vector.extract_strided_slice %93 {offsets = [2, 0], sizes = [1, 384], strides = [1, 1]} : vector<4x384xf32> to vector<1x384xf32>
    %111 = vector.broadcast %109 : vector<4x1xf32> to vector<4x384xf32>
    %112 = vector.broadcast %110 : vector<1x384xf32> to vector<4x384xf32>
    %113 = arith.mulf %111, %112 : vector<4x384xf32>
    %114 = arith.addf %107, %113 : vector<4x384xf32>
    %c3_66 = arith.constant 3 : index
    %c3_67 = arith.constant 3 : index
    %c0_68 = arith.constant 0 : index
    %c0_69 = arith.constant 0 : index
    %115 = vector.load %arg2[%c3_66, %c3_67, %c0_68, %c0_69] : memref<9x4x4x1xf32, #tpu.memory_space<vmem>>, vector<1x1x4x1xf32>
    %116 = vector.shape_cast %115 : vector<1x1x4x1xf32> to vector<4x1xf32>
    %117 = vector.extract_strided_slice %93 {offsets = [3, 0], sizes = [1, 384], strides = [1, 1]} : vector<4x384xf32> to vector<1x384xf32>
    %118 = vector.broadcast %116 : vector<4x1xf32> to vector<4x384xf32>
    %119 = vector.broadcast %117 : vector<1x384xf32> to vector<4x384xf32>
    %120 = arith.mulf %118, %119 : vector<4x384xf32>
    %121 = arith.addf %114, %120 : vector<4x384xf32>
    %c0_70 = arith.constant 0 : index
    %c0_71 = arith.constant 0 : index
    %c128 = arith.constant 128 : index
    %122 = vector.load %arg1[%c0_70, %c0_71, %c128] : memref<1x4x640xf32, #tpu.memory_space<vmem>>, vector<1x4x384xf32>
    %123 = vector.shape_cast %122 : vector<1x4x384xf32> to vector<4x384xf32>
    %c4 = arith.constant 4 : index
    %c0_72 = arith.constant 0 : index
    %c0_73 = arith.constant 0 : index
    %c0_74 = arith.constant 0 : index
    %124 = vector.load %arg2[%c4, %c0_72, %c0_73, %c0_74] : memref<9x4x4x1xf32, #tpu.memory_space<vmem>>, vector<1x1x4x1xf32>
    %125 = vector.shape_cast %124 : vector<1x1x4x1xf32> to vector<4x1xf32>
    %126 = vector.extract_strided_slice %123 {offsets = [0, 0], sizes = [1, 384], strides = [1, 1]} : vector<4x384xf32> to vector<1x384xf32>
    %127 = vector.broadcast %125 : vector<4x1xf32> to vector<4x384xf32>
    %128 = vector.broadcast %126 : vector<1x384xf32> to vector<4x384xf32>
    %129 = arith.mulf %127, %128 : vector<4x384xf32>
    %130 = arith.addf %121, %129 : vector<4x384xf32>
    %c4_75 = arith.constant 4 : index
    %c1_76 = arith.constant 1 : index
    %c0_77 = arith.constant 0 : index
    %c0_78 = arith.constant 0 : index
    %131 = vector.load %arg2[%c4_75, %c1_76, %c0_77, %c0_78] : memref<9x4x4x1xf32, #tpu.memory_space<vmem>>, vector<1x1x4x1xf32>
    %132 = vector.shape_cast %131 : vector<1x1x4x1xf32> to vector<4x1xf32>
    %133 = vector.extract_strided_slice %123 {offsets = [1, 0], sizes = [1, 384], strides = [1, 1]} : vector<4x384xf32> to vector<1x384xf32>
    %134 = vector.broadcast %132 : vector<4x1xf32> to vector<4x384xf32>
    %135 = vector.broadcast %133 : vector<1x384xf32> to vector<4x384xf32>
    %136 = arith.mulf %134, %135 : vector<4x384xf32>
    %137 = arith.addf %130, %136 : vector<4x384xf32>
    %c4_79 = arith.constant 4 : index
    %c2_80 = arith.constant 2 : index
    %c0_81 = arith.constant 0 : index
    %c0_82 = arith.constant 0 : index
    %138 = vector.load %arg2[%c4_79, %c2_80, %c0_81, %c0_82] : memref<9x4x4x1xf32, #tpu.memory_space<vmem>>, vector<1x1x4x1xf32>
    %139 = vector.shape_cast %138 : vector<1x1x4x1xf32> to vector<4x1xf32>
    %140 = vector.extract_strided_slice %123 {offsets = [2, 0], sizes = [1, 384], strides = [1, 1]} : vector<4x384xf32> to vector<1x384xf32>
    %141 = vector.broadcast %139 : vector<4x1xf32> to vector<4x384xf32>
    %142 = vector.broadcast %140 : vector<1x384xf32> to vector<4x384xf32>
    %143 = arith.mulf %141, %142 : vector<4x384xf32>
    %144 = arith.addf %137, %143 : vector<4x384xf32>
    %c4_83 = arith.constant 4 : index
    %c3_84 = arith.constant 3 : index
    %c0_85 = arith.constant 0 : index
    %c0_86 = arith.constant 0 : index
    %145 = vector.load %arg2[%c4_83, %c3_84, %c0_85, %c0_86] : memref<9x4x4x1xf32, #tpu.memory_space<vmem>>, vector<1x1x4x1xf32>
    %146 = vector.shape_cast %145 : vector<1x1x4x1xf32> to vector<4x1xf32>
    %147 = vector.extract_strided_slice %123 {offsets = [3, 0], sizes = [1, 384], strides = [1, 1]} : vector<4x384xf32> to vector<1x384xf32>
    %148 = vector.broadcast %146 : vector<4x1xf32> to vector<4x384xf32>
    %149 = vector.broadcast %147 : vector<1x384xf32> to vector<4x384xf32>
    %150 = arith.mulf %148, %149 : vector<4x384xf32>
    %151 = arith.addf %144, %150 : vector<4x384xf32>
    %c0_87 = arith.constant 0 : index
    %c0_88 = arith.constant 0 : index
    %c129 = arith.constant 129 : index
    %152 = vector.load %arg1[%c0_87, %c0_88, %c129] : memref<1x4x640xf32, #tpu.memory_space<vmem>>, vector<1x4x384xf32>
    %153 = vector.shape_cast %152 : vector<1x4x384xf32> to vector<4x384xf32>
    %c5 = arith.constant 5 : index
    %c0_89 = arith.constant 0 : index
    %c0_90 = arith.constant 0 : index
    %c0_91 = arith.constant 0 : index
    %154 = vector.load %arg2[%c5, %c0_89, %c0_90, %c0_91] : memref<9x4x4x1xf32, #tpu.memory_space<vmem>>, vector<1x1x4x1xf32>
    %155 = vector.shape_cast %154 : vector<1x1x4x1xf32> to vector<4x1xf32>
    %156 = vector.extract_strided_slice %153 {offsets = [0, 0], sizes = [1, 384], strides = [1, 1]} : vector<4x384xf32> to vector<1x384xf32>
    %157 = vector.broadcast %155 : vector<4x1xf32> to vector<4x384xf32>
    %158 = vector.broadcast %156 : vector<1x384xf32> to vector<4x384xf32>
    %159 = arith.mulf %157, %158 : vector<4x384xf32>
    %160 = arith.addf %151, %159 : vector<4x384xf32>
    %c5_92 = arith.constant 5 : index
    %c1_93 = arith.constant 1 : index
    %c0_94 = arith.constant 0 : index
    %c0_95 = arith.constant 0 : index
    %161 = vector.load %arg2[%c5_92, %c1_93, %c0_94, %c0_95] : memref<9x4x4x1xf32, #tpu.memory_space<vmem>>, vector<1x1x4x1xf32>
    %162 = vector.shape_cast %161 : vector<1x1x4x1xf32> to vector<4x1xf32>
    %163 = vector.extract_strided_slice %153 {offsets = [1, 0], sizes = [1, 384], strides = [1, 1]} : vector<4x384xf32> to vector<1x384xf32>
    %164 = vector.broadcast %162 : vector<4x1xf32> to vector<4x384xf32>
    %165 = vector.broadcast %163 : vector<1x384xf32> to vector<4x384xf32>
    %166 = arith.mulf %164, %165 : vector<4x384xf32>
    %167 = arith.addf %160, %166 : vector<4x384xf32>
    %c5_96 = arith.constant 5 : index
    %c2_97 = arith.constant 2 : index
    %c0_98 = arith.constant 0 : index
    %c0_99 = arith.constant 0 : index
    %168 = vector.load %arg2[%c5_96, %c2_97, %c0_98, %c0_99] : memref<9x4x4x1xf32, #tpu.memory_space<vmem>>, vector<1x1x4x1xf32>
    %169 = vector.shape_cast %168 : vector<1x1x4x1xf32> to vector<4x1xf32>
    %170 = vector.extract_strided_slice %153 {offsets = [2, 0], sizes = [1, 384], strides = [1, 1]} : vector<4x384xf32> to vector<1x384xf32>
    %171 = vector.broadcast %169 : vector<4x1xf32> to vector<4x384xf32>
    %172 = vector.broadcast %170 : vector<1x384xf32> to vector<4x384xf32>
    %173 = arith.mulf %171, %172 : vector<4x384xf32>
    %174 = arith.addf %167, %173 : vector<4x384xf32>
    %c5_100 = arith.constant 5 : index
    %c3_101 = arith.constant 3 : index
    %c0_102 = arith.constant 0 : index
    %c0_103 = arith.constant 0 : index
    %175 = vector.load %arg2[%c5_100, %c3_101, %c0_102, %c0_103] : memref<9x4x4x1xf32, #tpu.memory_space<vmem>>, vector<1x1x4x1xf32>
    %176 = vector.shape_cast %175 : vector<1x1x4x1xf32> to vector<4x1xf32>
    %177 = vector.extract_strided_slice %153 {offsets = [3, 0], sizes = [1, 384], strides = [1, 1]} : vector<4x384xf32> to vector<1x384xf32>
    %178 = vector.broadcast %176 : vector<4x1xf32> to vector<4x384xf32>
    %179 = vector.broadcast %177 : vector<1x384xf32> to vector<4x384xf32>
    %180 = arith.mulf %178, %179 : vector<4x384xf32>
    %181 = arith.addf %174, %180 : vector<4x384xf32>
    %c0_104 = arith.constant 0 : index
    %c0_105 = arith.constant 0 : index
    %c145 = arith.constant 145 : index
    %182 = vector.load %arg1[%c0_104, %c0_105, %c145] : memref<1x4x640xf32, #tpu.memory_space<vmem>>, vector<1x4x384xf32>
    %183 = vector.shape_cast %182 : vector<1x4x384xf32> to vector<4x384xf32>
    %c6 = arith.constant 6 : index
    %c0_106 = arith.constant 0 : index
    %c0_107 = arith.constant 0 : index
    %c0_108 = arith.constant 0 : index
    %184 = vector.load %arg2[%c6, %c0_106, %c0_107, %c0_108] : memref<9x4x4x1xf32, #tpu.memory_space<vmem>>, vector<1x1x4x1xf32>
    %185 = vector.shape_cast %184 : vector<1x1x4x1xf32> to vector<4x1xf32>
    %186 = vector.extract_strided_slice %183 {offsets = [0, 0], sizes = [1, 384], strides = [1, 1]} : vector<4x384xf32> to vector<1x384xf32>
    %187 = vector.broadcast %185 : vector<4x1xf32> to vector<4x384xf32>
    %188 = vector.broadcast %186 : vector<1x384xf32> to vector<4x384xf32>
    %189 = arith.mulf %187, %188 : vector<4x384xf32>
    %190 = arith.addf %181, %189 : vector<4x384xf32>
    %c6_109 = arith.constant 6 : index
    %c1_110 = arith.constant 1 : index
    %c0_111 = arith.constant 0 : index
    %c0_112 = arith.constant 0 : index
    %191 = vector.load %arg2[%c6_109, %c1_110, %c0_111, %c0_112] : memref<9x4x4x1xf32, #tpu.memory_space<vmem>>, vector<1x1x4x1xf32>
    %192 = vector.shape_cast %191 : vector<1x1x4x1xf32> to vector<4x1xf32>
    %193 = vector.extract_strided_slice %183 {offsets = [1, 0], sizes = [1, 384], strides = [1, 1]} : vector<4x384xf32> to vector<1x384xf32>
    %194 = vector.broadcast %192 : vector<4x1xf32> to vector<4x384xf32>
    %195 = vector.broadcast %193 : vector<1x384xf32> to vector<4x384xf32>
    %196 = arith.mulf %194, %195 : vector<4x384xf32>
    %197 = arith.addf %190, %196 : vector<4x384xf32>
    %c6_113 = arith.constant 6 : index
    %c2_114 = arith.constant 2 : index
    %c0_115 = arith.constant 0 : index
    %c0_116 = arith.constant 0 : index
    %198 = vector.load %arg2[%c6_113, %c2_114, %c0_115, %c0_116] : memref<9x4x4x1xf32, #tpu.memory_space<vmem>>, vector<1x1x4x1xf32>
    %199 = vector.shape_cast %198 : vector<1x1x4x1xf32> to vector<4x1xf32>
    %200 = vector.extract_strided_slice %183 {offsets = [2, 0], sizes = [1, 384], strides = [1, 1]} : vector<4x384xf32> to vector<1x384xf32>
    %201 = vector.broadcast %199 : vector<4x1xf32> to vector<4x384xf32>
    %202 = vector.broadcast %200 : vector<1x384xf32> to vector<4x384xf32>
    %203 = arith.mulf %201, %202 : vector<4x384xf32>
    %204 = arith.addf %197, %203 : vector<4x384xf32>
    %c6_117 = arith.constant 6 : index
    %c3_118 = arith.constant 3 : index
    %c0_119 = arith.constant 0 : index
    %c0_120 = arith.constant 0 : index
    %205 = vector.load %arg2[%c6_117, %c3_118, %c0_119, %c0_120] : memref<9x4x4x1xf32, #tpu.memory_space<vmem>>, vector<1x1x4x1xf32>
    %206 = vector.shape_cast %205 : vector<1x1x4x1xf32> to vector<4x1xf32>
    %207 = vector.extract_strided_slice %183 {offsets = [3, 0], sizes = [1, 384], strides = [1, 1]} : vector<4x384xf32> to vector<1x384xf32>
    %208 = vector.broadcast %206 : vector<4x1xf32> to vector<4x384xf32>
    %209 = vector.broadcast %207 : vector<1x384xf32> to vector<4x384xf32>
    %210 = arith.mulf %208, %209 : vector<4x384xf32>
    %211 = arith.addf %204, %210 : vector<4x384xf32>
    %c0_121 = arith.constant 0 : index
    %c0_122 = arith.constant 0 : index
    %c146 = arith.constant 146 : index
    %212 = vector.load %arg1[%c0_121, %c0_122, %c146] : memref<1x4x640xf32, #tpu.memory_space<vmem>>, vector<1x4x384xf32>
    %213 = vector.shape_cast %212 : vector<1x4x384xf32> to vector<4x384xf32>
    %c7 = arith.constant 7 : index
    %c0_123 = arith.constant 0 : index
    %c0_124 = arith.constant 0 : index
    %c0_125 = arith.constant 0 : index
    %214 = vector.load %arg2[%c7, %c0_123, %c0_124, %c0_125] : memref<9x4x4x1xf32, #tpu.memory_space<vmem>>, vector<1x1x4x1xf32>
    %215 = vector.shape_cast %214 : vector<1x1x4x1xf32> to vector<4x1xf32>
    %216 = vector.extract_strided_slice %213 {offsets = [0, 0], sizes = [1, 384], strides = [1, 1]} : vector<4x384xf32> to vector<1x384xf32>
    %217 = vector.broadcast %215 : vector<4x1xf32> to vector<4x384xf32>
    %218 = vector.broadcast %216 : vector<1x384xf32> to vector<4x384xf32>
    %219 = arith.mulf %217, %218 : vector<4x384xf32>
    %220 = arith.addf %211, %219 : vector<4x384xf32>
    %c7_126 = arith.constant 7 : index
    %c1_127 = arith.constant 1 : index
    %c0_128 = arith.constant 0 : index
    %c0_129 = arith.constant 0 : index
    %221 = vector.load %arg2[%c7_126, %c1_127, %c0_128, %c0_129] : memref<9x4x4x1xf32, #tpu.memory_space<vmem>>, vector<1x1x4x1xf32>
    %222 = vector.shape_cast %221 : vector<1x1x4x1xf32> to vector<4x1xf32>
    %223 = vector.extract_strided_slice %213 {offsets = [1, 0], sizes = [1, 384], strides = [1, 1]} : vector<4x384xf32> to vector<1x384xf32>
    %224 = vector.broadcast %222 : vector<4x1xf32> to vector<4x384xf32>
    %225 = vector.broadcast %223 : vector<1x384xf32> to vector<4x384xf32>
    %226 = arith.mulf %224, %225 : vector<4x384xf32>
    %227 = arith.addf %220, %226 : vector<4x384xf32>
    %c7_130 = arith.constant 7 : index
    %c2_131 = arith.constant 2 : index
    %c0_132 = arith.constant 0 : index
    %c0_133 = arith.constant 0 : index
    %228 = vector.load %arg2[%c7_130, %c2_131, %c0_132, %c0_133] : memref<9x4x4x1xf32, #tpu.memory_space<vmem>>, vector<1x1x4x1xf32>
    %229 = vector.shape_cast %228 : vector<1x1x4x1xf32> to vector<4x1xf32>
    %230 = vector.extract_strided_slice %213 {offsets = [2, 0], sizes = [1, 384], strides = [1, 1]} : vector<4x384xf32> to vector<1x384xf32>
    %231 = vector.broadcast %229 : vector<4x1xf32> to vector<4x384xf32>
    %232 = vector.broadcast %230 : vector<1x384xf32> to vector<4x384xf32>
    %233 = arith.mulf %231, %232 : vector<4x384xf32>
    %234 = arith.addf %227, %233 : vector<4x384xf32>
    %c7_134 = arith.constant 7 : index
    %c3_135 = arith.constant 3 : index
    %c0_136 = arith.constant 0 : index
    %c0_137 = arith.constant 0 : index
    %235 = vector.load %arg2[%c7_134, %c3_135, %c0_136, %c0_137] : memref<9x4x4x1xf32, #tpu.memory_space<vmem>>, vector<1x1x4x1xf32>
    %236 = vector.shape_cast %235 : vector<1x1x4x1xf32> to vector<4x1xf32>
    %237 = vector.extract_strided_slice %213 {offsets = [3, 0], sizes = [1, 384], strides = [1, 1]} : vector<4x384xf32> to vector<1x384xf32>
    %238 = vector.broadcast %236 : vector<4x1xf32> to vector<4x384xf32>
    %239 = vector.broadcast %237 : vector<1x384xf32> to vector<4x384xf32>
    %240 = arith.mulf %238, %239 : vector<4x384xf32>
    %241 = arith.addf %234, %240 : vector<4x384xf32>
    %c0_138 = arith.constant 0 : index
    %c0_139 = arith.constant 0 : index
    %c147 = arith.constant 147 : index
    %242 = vector.load %arg1[%c0_138, %c0_139, %c147] : memref<1x4x640xf32, #tpu.memory_space<vmem>>, vector<1x4x384xf32>
    %243 = vector.shape_cast %242 : vector<1x4x384xf32> to vector<4x384xf32>
    %c8 = arith.constant 8 : index
    %c0_140 = arith.constant 0 : index
    %c0_141 = arith.constant 0 : index
    %c0_142 = arith.constant 0 : index
    %244 = vector.load %arg2[%c8, %c0_140, %c0_141, %c0_142] : memref<9x4x4x1xf32, #tpu.memory_space<vmem>>, vector<1x1x4x1xf32>
    %245 = vector.shape_cast %244 : vector<1x1x4x1xf32> to vector<4x1xf32>
    %246 = vector.extract_strided_slice %243 {offsets = [0, 0], sizes = [1, 384], strides = [1, 1]} : vector<4x384xf32> to vector<1x384xf32>
    %247 = vector.broadcast %245 : vector<4x1xf32> to vector<4x384xf32>
    %248 = vector.broadcast %246 : vector<1x384xf32> to vector<4x384xf32>
    %249 = arith.mulf %247, %248 : vector<4x384xf32>
    %250 = arith.addf %241, %249 : vector<4x384xf32>
    %c8_143 = arith.constant 8 : index
    %c1_144 = arith.constant 1 : index
    %c0_145 = arith.constant 0 : index
    %c0_146 = arith.constant 0 : index
    %251 = vector.load %arg2[%c8_143, %c1_144, %c0_145, %c0_146] : memref<9x4x4x1xf32, #tpu.memory_space<vmem>>, vector<1x1x4x1xf32>
    %252 = vector.shape_cast %251 : vector<1x1x4x1xf32> to vector<4x1xf32>
    %253 = vector.extract_strided_slice %243 {offsets = [1, 0], sizes = [1, 384], strides = [1, 1]} : vector<4x384xf32> to vector<1x384xf32>
    %254 = vector.broadcast %252 : vector<4x1xf32> to vector<4x384xf32>
    %255 = vector.broadcast %253 : vector<1x384xf32> to vector<4x384xf32>
    %256 = arith.mulf %254, %255 : vector<4x384xf32>
    %257 = arith.addf %250, %256 : vector<4x384xf32>
    %c8_147 = arith.constant 8 : index
    %c2_148 = arith.constant 2 : index
    %c0_149 = arith.constant 0 : index
    %c0_150 = arith.constant 0 : index
    %258 = vector.load %arg2[%c8_147, %c2_148, %c0_149, %c0_150] : memref<9x4x4x1xf32, #tpu.memory_space<vmem>>, vector<1x1x4x1xf32>
    %259 = vector.shape_cast %258 : vector<1x1x4x1xf32> to vector<4x1xf32>
    %260 = vector.extract_strided_slice %243 {offsets = [2, 0], sizes = [1, 384], strides = [1, 1]} : vector<4x384xf32> to vector<1x384xf32>
    %261 = vector.broadcast %259 : vector<4x1xf32> to vector<4x384xf32>
    %262 = vector.broadcast %260 : vector<1x384xf32> to vector<4x384xf32>
    %263 = arith.mulf %261, %262 : vector<4x384xf32>
    %264 = arith.addf %257, %263 : vector<4x384xf32>
    %c8_151 = arith.constant 8 : index
    %c3_152 = arith.constant 3 : index
    %c0_153 = arith.constant 0 : index
    %c0_154 = arith.constant 0 : index
    %265 = vector.load %arg2[%c8_151, %c3_152, %c0_153, %c0_154] : memref<9x4x4x1xf32, #tpu.memory_space<vmem>>, vector<1x1x4x1xf32>
    %266 = vector.shape_cast %265 : vector<1x1x4x1xf32> to vector<4x1xf32>
    %267 = vector.extract_strided_slice %243 {offsets = [3, 0], sizes = [1, 384], strides = [1, 1]} : vector<4x384xf32> to vector<1x384xf32>
    %268 = vector.broadcast %266 : vector<4x1xf32> to vector<4x384xf32>
    %269 = vector.broadcast %267 : vector<1x384xf32> to vector<4x384xf32>
    %270 = arith.mulf %268, %269 : vector<4x384xf32>
    %271 = arith.addf %264, %270 : vector<4x384xf32>
    %c0_155 = arith.constant 0 : index
    %c0_156 = arith.constant 0 : index
    %272 = vector.load %arg3[%c0_155, %c0_156] : memref<4x1xf32, #tpu.memory_space<vmem>>, vector<4x1xf32>
    %273 = vector.broadcast %272 : vector<4x1xf32> to vector<4x384xf32>
    %274 = arith.addf %271, %273 : vector<4x384xf32>
    %cst_157 = arith.constant 0.000000e+00 : f32
    %275 = vector.broadcast %cst_157 : f32 to vector<4x384xf32>
    %276 = arith.maximumf %274, %275 : vector<4x384xf32>
    %277 = vector.broadcast %0 : vector<1x384xf32> to vector<4x384xf32>
    %278 = arith.mulf %276, %277 : vector<4x384xf32>
    %cst_158 = arith.constant 0.000000e+00 : f32
    %279 = vector.broadcast %cst_158 : f32 to vector<4x640xf32>
    %c0_159 = arith.constant 0 : index
    %c0_160 = arith.constant 0 : index
    %280 = vector.load %arg8[%c0_159, %c0_160] : memref<4x640xf32, #tpu.memory_space<vmem>>, vector<4x640xf32>
    tpu.vector_store %arg8[%c0_159, %c0_160], %279 {strides = array<i32>} : memref<4x640xf32, #tpu.memory_space<vmem>>, vector<4x640xf32>,
    %c0_161 = arith.constant 0 : index
    %c128_162 = arith.constant 128 : index
    %281 = vector.load %arg8[%c0_161, %c128_162] : memref<4x640xf32, #tpu.memory_space<vmem>>, vector<4x384xf32>
    tpu.vector_store %arg8[%c0_161, %c128_162], %278 {strides = array<i32>} : memref<4x640xf32, #tpu.memory_space<vmem>>, vector<4x384xf32>,
    %c0_163 = arith.constant 0 : index
    %c0_164 = arith.constant 0 : index
    %c128_165 = arith.constant 128 : index
    %282 = vector.load %arg1[%c0_163, %c0_164, %c128_165] : memref<1x4x640xf32, #tpu.memory_space<vmem>>, vector<1x4x384xf32>
    %283 = vector.shape_cast %282 : vector<1x4x384xf32> to vector<4x384xf32>
    %cst_166 = arith.constant 0.000000e+00 : f32
    %284 = vector.broadcast %cst_166 : f32 to vector<4x384xf32>
    %c0_167 = arith.constant 0 : index
    %c109_168 = arith.constant 109 : index
    %285 = vector.load %arg8[%c0_167, %c109_168] : memref<4x640xf32, #tpu.memory_space<vmem>>, vector<4x384xf32>
    %c0_169 = arith.constant 0 : index
    %c0_170 = arith.constant 0 : index
    %c0_171 = arith.constant 0 : index
    %c0_172 = arith.constant 0 : index
    %286 = vector.load %arg4[%c0_169, %c0_170, %c0_171, %c0_172] : memref<9x4x4x1xf32, #tpu.memory_space<vmem>>, vector<1x1x4x1xf32>
    %287 = vector.shape_cast %286 : vector<1x1x4x1xf32> to vector<4x1xf32>
    %288 = vector.extract_strided_slice %285 {offsets = [0, 0], sizes = [1, 384], strides = [1, 1]} : vector<4x384xf32> to vector<1x384xf32>
    %289 = vector.broadcast %287 : vector<4x1xf32> to vector<4x384xf32>
    %290 = vector.broadcast %288 : vector<1x384xf32> to vector<4x384xf32>
    %291 = arith.mulf %289, %290 : vector<4x384xf32>
    %292 = arith.addf %284, %291 : vector<4x384xf32>
    %c0_173 = arith.constant 0 : index
    %c1_174 = arith.constant 1 : index
    %c0_175 = arith.constant 0 : index
    %c0_176 = arith.constant 0 : index
    %293 = vector.load %arg4[%c0_173, %c1_174, %c0_175, %c0_176] : memref<9x4x4x1xf32, #tpu.memory_space<vmem>>, vector<1x1x4x1xf32>
    %294 = vector.shape_cast %293 : vector<1x1x4x1xf32> to vector<4x1xf32>
    %295 = vector.extract_strided_slice %285 {offsets = [1, 0], sizes = [1, 384], strides = [1, 1]} : vector<4x384xf32> to vector<1x384xf32>
    %296 = vector.broadcast %294 : vector<4x1xf32> to vector<4x384xf32>
    %297 = vector.broadcast %295 : vector<1x384xf32> to vector<4x384xf32>
    %298 = arith.mulf %296, %297 : vector<4x384xf32>
    %299 = arith.addf %292, %298 : vector<4x384xf32>
    %c0_177 = arith.constant 0 : index
    %c2_178 = arith.constant 2 : index
    %c0_179 = arith.constant 0 : index
    %c0_180 = arith.constant 0 : index
    %300 = vector.load %arg4[%c0_177, %c2_178, %c0_179, %c0_180] : memref<9x4x4x1xf32, #tpu.memory_space<vmem>>, vector<1x1x4x1xf32>
    %301 = vector.shape_cast %300 : vector<1x1x4x1xf32> to vector<4x1xf32>
    %302 = vector.extract_strided_slice %285 {offsets = [2, 0], sizes = [1, 384], strides = [1, 1]} : vector<4x384xf32> to vector<1x384xf32>
    %303 = vector.broadcast %301 : vector<4x1xf32> to vector<4x384xf32>
    %304 = vector.broadcast %302 : vector<1x384xf32> to vector<4x384xf32>
    %305 = arith.mulf %303, %304 : vector<4x384xf32>
    %306 = arith.addf %299, %305 : vector<4x384xf32>
    %c0_181 = arith.constant 0 : index
    %c3_182 = arith.constant 3 : index
    %c0_183 = arith.constant 0 : index
    %c0_184 = arith.constant 0 : index
    %307 = vector.load %arg4[%c0_181, %c3_182, %c0_183, %c0_184] : memref<9x4x4x1xf32, #tpu.memory_space<vmem>>, vector<1x1x4x1xf32>
    %308 = vector.shape_cast %307 : vector<1x1x4x1xf32> to vector<4x1xf32>
    %309 = vector.extract_strided_slice %285 {offsets = [3, 0], sizes = [1, 384], strides = [1, 1]} : vector<4x384xf32> to vector<1x384xf32>
    %310 = vector.broadcast %308 : vector<4x1xf32> to vector<4x384xf32>
    %311 = vector.broadcast %309 : vector<1x384xf32> to vector<4x384xf32>
    %312 = arith.mulf %310, %311 : vector<4x384xf32>
    %313 = arith.addf %306, %312 : vector<4x384xf32>
    %c0_185 = arith.constant 0 : index
    %c110_186 = arith.constant 110 : index
    %314 = vector.load %arg8[%c0_185, %c110_186] : memref<4x640xf32, #tpu.memory_space<vmem>>, vector<4x384xf32>
    %c1_187 = arith.constant 1 : index
    %c0_188 = arith.constant 0 : index
    %c0_189 = arith.constant 0 : index
    %c0_190 = arith.constant 0 : index
    %315 = vector.load %arg4[%c1_187, %c0_188, %c0_189, %c0_190] : memref<9x4x4x1xf32, #tpu.memory_space<vmem>>, vector<1x1x4x1xf32>
    %316 = vector.shape_cast %315 : vector<1x1x4x1xf32> to vector<4x1xf32>
    %317 = vector.extract_strided_slice %314 {offsets = [0, 0], sizes = [1, 384], strides = [1, 1]} : vector<4x384xf32> to vector<1x384xf32>
    %318 = vector.broadcast %316 : vector<4x1xf32> to vector<4x384xf32>
    %319 = vector.broadcast %317 : vector<1x384xf32> to vector<4x384xf32>
    %320 = arith.mulf %318, %319 : vector<4x384xf32>
    %321 = arith.addf %313, %320 : vector<4x384xf32>
    %c1_191 = arith.constant 1 : index
    %c1_192 = arith.constant 1 : index
    %c0_193 = arith.constant 0 : index
    %c0_194 = arith.constant 0 : index
    %322 = vector.load %arg4[%c1_191, %c1_192, %c0_193, %c0_194] : memref<9x4x4x1xf32, #tpu.memory_space<vmem>>, vector<1x1x4x1xf32>
    %323 = vector.shape_cast %322 : vector<1x1x4x1xf32> to vector<4x1xf32>
    %324 = vector.extract_strided_slice %314 {offsets = [1, 0], sizes = [1, 384], strides = [1, 1]} : vector<4x384xf32> to vector<1x384xf32>
    %325 = vector.broadcast %323 : vector<4x1xf32> to vector<4x384xf32>
    %326 = vector.broadcast %324 : vector<1x384xf32> to vector<4x384xf32>
    %327 = arith.mulf %325, %326 : vector<4x384xf32>
    %328 = arith.addf %321, %327 : vector<4x384xf32>
    %c1_195 = arith.constant 1 : index
    %c2_196 = arith.constant 2 : index
    %c0_197 = arith.constant 0 : index
    %c0_198 = arith.constant 0 : index
    %329 = vector.load %arg4[%c1_195, %c2_196, %c0_197, %c0_198] : memref<9x4x4x1xf32, #tpu.memory_space<vmem>>, vector<1x1x4x1xf32>
    %330 = vector.shape_cast %329 : vector<1x1x4x1xf32> to vector<4x1xf32>
    %331 = vector.extract_strided_slice %314 {offsets = [2, 0], sizes = [1, 384], strides = [1, 1]} : vector<4x384xf32> to vector<1x384xf32>
    %332 = vector.broadcast %330 : vector<4x1xf32> to vector<4x384xf32>
    %333 = vector.broadcast %331 : vector<1x384xf32> to vector<4x384xf32>
    %334 = arith.mulf %332, %333 : vector<4x384xf32>
    %335 = arith.addf %328, %334 : vector<4x384xf32>
    %c1_199 = arith.constant 1 : index
    %c3_200 = arith.constant 3 : index
    %c0_201 = arith.constant 0 : index
    %c0_202 = arith.constant 0 : index
    %336 = vector.load %arg4[%c1_199, %c3_200, %c0_201, %c0_202] : memref<9x4x4x1xf32, #tpu.memory_space<vmem>>, vector<1x1x4x1xf32>
    %337 = vector.shape_cast %336 : vector<1x1x4x1xf32> to vector<4x1xf32>
    %338 = vector.extract_strided_slice %314 {offsets = [3, 0], sizes = [1, 384], strides = [1, 1]} : vector<4x384xf32> to vector<1x384xf32>
    %339 = vector.broadcast %337 : vector<4x1xf32> to vector<4x384xf32>
    %340 = vector.broadcast %338 : vector<1x384xf32> to vector<4x384xf32>
    %341 = arith.mulf %339, %340 : vector<4x384xf32>
    %342 = arith.addf %335, %341 : vector<4x384xf32>
    %c0_203 = arith.constant 0 : index
    %c111_204 = arith.constant 111 : index
    %343 = vector.load %arg8[%c0_203, %c111_204] : memref<4x640xf32, #tpu.memory_space<vmem>>, vector<4x384xf32>
    %c2_205 = arith.constant 2 : index
    %c0_206 = arith.constant 0 : index
    %c0_207 = arith.constant 0 : index
    %c0_208 = arith.constant 0 : index
    %344 = vector.load %arg4[%c2_205, %c0_206, %c0_207, %c0_208] : memref<9x4x4x1xf32, #tpu.memory_space<vmem>>, vector<1x1x4x1xf32>
    %345 = vector.shape_cast %344 : vector<1x1x4x1xf32> to vector<4x1xf32>
    %346 = vector.extract_strided_slice %343 {offsets = [0, 0], sizes = [1, 384], strides = [1, 1]} : vector<4x384xf32> to vector<1x384xf32>
    %347 = vector.broadcast %345 : vector<4x1xf32> to vector<4x384xf32>
    %348 = vector.broadcast %346 : vector<1x384xf32> to vector<4x384xf32>
    %349 = arith.mulf %347, %348 : vector<4x384xf32>
    %350 = arith.addf %342, %349 : vector<4x384xf32>
    %c2_209 = arith.constant 2 : index
    %c1_210 = arith.constant 1 : index
    %c0_211 = arith.constant 0 : index
    %c0_212 = arith.constant 0 : index
    %351 = vector.load %arg4[%c2_209, %c1_210, %c0_211, %c0_212] : memref<9x4x4x1xf32, #tpu.memory_space<vmem>>, vector<1x1x4x1xf32>
    %352 = vector.shape_cast %351 : vector<1x1x4x1xf32> to vector<4x1xf32>
    %353 = vector.extract_strided_slice %343 {offsets = [1, 0], sizes = [1, 384], strides = [1, 1]} : vector<4x384xf32> to vector<1x384xf32>
    %354 = vector.broadcast %352 : vector<4x1xf32> to vector<4x384xf32>
    %355 = vector.broadcast %353 : vector<1x384xf32> to vector<4x384xf32>
    %356 = arith.mulf %354, %355 : vector<4x384xf32>
    %357 = arith.addf %350, %356 : vector<4x384xf32>
    %c2_213 = arith.constant 2 : index
    %c2_214 = arith.constant 2 : index
    %c0_215 = arith.constant 0 : index
    %c0_216 = arith.constant 0 : index
    %358 = vector.load %arg4[%c2_213, %c2_214, %c0_215, %c0_216] : memref<9x4x4x1xf32, #tpu.memory_space<vmem>>, vector<1x1x4x1xf32>
    %359 = vector.shape_cast %358 : vector<1x1x4x1xf32> to vector<4x1xf32>
    %360 = vector.extract_strided_slice %343 {offsets = [2, 0], sizes = [1, 384], strides = [1, 1]} : vector<4x384xf32> to vector<1x384xf32>
    %361 = vector.broadcast %359 : vector<4x1xf32> to vector<4x384xf32>
    %362 = vector.broadcast %360 : vector<1x384xf32> to vector<4x384xf32>
    %363 = arith.mulf %361, %362 : vector<4x384xf32>
    %364 = arith.addf %357, %363 : vector<4x384xf32>
    %c2_217 = arith.constant 2 : index
    %c3_218 = arith.constant 3 : index
    %c0_219 = arith.constant 0 : index
    %c0_220 = arith.constant 0 : index
    %365 = vector.load %arg4[%c2_217, %c3_218, %c0_219, %c0_220] : memref<9x4x4x1xf32, #tpu.memory_space<vmem>>, vector<1x1x4x1xf32>
    %366 = vector.shape_cast %365 : vector<1x1x4x1xf32> to vector<4x1xf32>
    %367 = vector.extract_strided_slice %343 {offsets = [3, 0], sizes = [1, 384], strides = [1, 1]} : vector<4x384xf32> to vector<1x384xf32>
    %368 = vector.broadcast %366 : vector<4x1xf32> to vector<4x384xf32>
    %369 = vector.broadcast %367 : vector<1x384xf32> to vector<4x384xf32>
    %370 = arith.mulf %368, %369 : vector<4x384xf32>
    %371 = arith.addf %364, %370 : vector<4x384xf32>
    %c0_221 = arith.constant 0 : index
    %c127_222 = arith.constant 127 : index
    %372 = vector.load %arg8[%c0_221, %c127_222] : memref<4x640xf32, #tpu.memory_space<vmem>>, vector<4x384xf32>
    %c3_223 = arith.constant 3 : index
    %c0_224 = arith.constant 0 : index
    %c0_225 = arith.constant 0 : index
    %c0_226 = arith.constant 0 : index
    %373 = vector.load %arg4[%c3_223, %c0_224, %c0_225, %c0_226] : memref<9x4x4x1xf32, #tpu.memory_space<vmem>>, vector<1x1x4x1xf32>
    %374 = vector.shape_cast %373 : vector<1x1x4x1xf32> to vector<4x1xf32>
    %375 = vector.extract_strided_slice %372 {offsets = [0, 0], sizes = [1, 384], strides = [1, 1]} : vector<4x384xf32> to vector<1x384xf32>
    %376 = vector.broadcast %374 : vector<4x1xf32> to vector<4x384xf32>
    %377 = vector.broadcast %375 : vector<1x384xf32> to vector<4x384xf32>
    %378 = arith.mulf %376, %377 : vector<4x384xf32>
    %379 = arith.addf %371, %378 : vector<4x384xf32>
    %c3_227 = arith.constant 3 : index
    %c1_228 = arith.constant 1 : index
    %c0_229 = arith.constant 0 : index
    %c0_230 = arith.constant 0 : index
    %380 = vector.load %arg4[%c3_227, %c1_228, %c0_229, %c0_230] : memref<9x4x4x1xf32, #tpu.memory_space<vmem>>, vector<1x1x4x1xf32>
    %381 = vector.shape_cast %380 : vector<1x1x4x1xf32> to vector<4x1xf32>
    %382 = vector.extract_strided_slice %372 {offsets = [1, 0], sizes = [1, 384], strides = [1, 1]} : vector<4x384xf32> to vector<1x384xf32>
    %383 = vector.broadcast %381 : vector<4x1xf32> to vector<4x384xf32>
    %384 = vector.broadcast %382 : vector<1x384xf32> to vector<4x384xf32>
    %385 = arith.mulf %383, %384 : vector<4x384xf32>
    %386 = arith.addf %379, %385 : vector<4x384xf32>
    %c3_231 = arith.constant 3 : index
    %c2_232 = arith.constant 2 : index
    %c0_233 = arith.constant 0 : index
    %c0_234 = arith.constant 0 : index
    %387 = vector.load %arg4[%c3_231, %c2_232, %c0_233, %c0_234] : memref<9x4x4x1xf32, #tpu.memory_space<vmem>>, vector<1x1x4x1xf32>
    %388 = vector.shape_cast %387 : vector<1x1x4x1xf32> to vector<4x1xf32>
    %389 = vector.extract_strided_slice %372 {offsets = [2, 0], sizes = [1, 384], strides = [1, 1]} : vector<4x384xf32> to vector<1x384xf32>
    %390 = vector.broadcast %388 : vector<4x1xf32> to vector<4x384xf32>
    %391 = vector.broadcast %389 : vector<1x384xf32> to vector<4x384xf32>
    %392 = arith.mulf %390, %391 : vector<4x384xf32>
    %393 = arith.addf %386, %392 : vector<4x384xf32>
    %c3_235 = arith.constant 3 : index
    %c3_236 = arith.constant 3 : index
    %c0_237 = arith.constant 0 : index
    %c0_238 = arith.constant 0 : index
    %394 = vector.load %arg4[%c3_235, %c3_236, %c0_237, %c0_238] : memref<9x4x4x1xf32, #tpu.memory_space<vmem>>, vector<1x1x4x1xf32>
    %395 = vector.shape_cast %394 : vector<1x1x4x1xf32> to vector<4x1xf32>
    %396 = vector.extract_strided_slice %372 {offsets = [3, 0], sizes = [1, 384], strides = [1, 1]} : vector<4x384xf32> to vector<1x384xf32>
    %397 = vector.broadcast %395 : vector<4x1xf32> to vector<4x384xf32>
    %398 = vector.broadcast %396 : vector<1x384xf32> to vector<4x384xf32>
    %399 = arith.mulf %397, %398 : vector<4x384xf32>
    %400 = arith.addf %393, %399 : vector<4x384xf32>
    %c0_239 = arith.constant 0 : index
    %c128_240 = arith.constant 128 : index
    %401 = vector.load %arg8[%c0_239, %c128_240] : memref<4x640xf32, #tpu.memory_space<vmem>>, vector<4x384xf32>
    %c4_241 = arith.constant 4 : index
    %c0_242 = arith.constant 0 : index
    %c0_243 = arith.constant 0 : index
    %c0_244 = arith.constant 0 : index
    %402 = vector.load %arg4[%c4_241, %c0_242, %c0_243, %c0_244] : memref<9x4x4x1xf32, #tpu.memory_space<vmem>>, vector<1x1x4x1xf32>
    %403 = vector.shape_cast %402 : vector<1x1x4x1xf32> to vector<4x1xf32>
    %404 = vector.extract_strided_slice %401 {offsets = [0, 0], sizes = [1, 384], strides = [1, 1]} : vector<4x384xf32> to vector<1x384xf32>
    %405 = vector.broadcast %403 : vector<4x1xf32> to vector<4x384xf32>
    %406 = vector.broadcast %404 : vector<1x384xf32> to vector<4x384xf32>
    %407 = arith.mulf %405, %406 : vector<4x384xf32>
    %408 = arith.addf %400, %407 : vector<4x384xf32>
    %c4_245 = arith.constant 4 : index
    %c1_246 = arith.constant 1 : index
    %c0_247 = arith.constant 0 : index
    %c0_248 = arith.constant 0 : index
    %409 = vector.load %arg4[%c4_245, %c1_246, %c0_247, %c0_248] : memref<9x4x4x1xf32, #tpu.memory_space<vmem>>, vector<1x1x4x1xf32>
    %410 = vector.shape_cast %409 : vector<1x1x4x1xf32> to vector<4x1xf32>
    %411 = vector.extract_strided_slice %401 {offsets = [1, 0], sizes = [1, 384], strides = [1, 1]} : vector<4x384xf32> to vector<1x384xf32>
    %412 = vector.broadcast %410 : vector<4x1xf32> to vector<4x384xf32>
    %413 = vector.broadcast %411 : vector<1x384xf32> to vector<4x384xf32>
    %414 = arith.mulf %412, %413 : vector<4x384xf32>
    %415 = arith.addf %408, %414 : vector<4x384xf32>
    %c4_249 = arith.constant 4 : index
    %c2_250 = arith.constant 2 : index
    %c0_251 = arith.constant 0 : index
    %c0_252 = arith.constant 0 : index
    %416 = vector.load %arg4[%c4_249, %c2_250, %c0_251, %c0_252] : memref<9x4x4x1xf32, #tpu.memory_space<vmem>>, vector<1x1x4x1xf32>
    %417 = vector.shape_cast %416 : vector<1x1x4x1xf32> to vector<4x1xf32>
    %418 = vector.extract_strided_slice %401 {offsets = [2, 0], sizes = [1, 384], strides = [1, 1]} : vector<4x384xf32> to vector<1x384xf32>
    %419 = vector.broadcast %417 : vector<4x1xf32> to vector<4x384xf32>
    %420 = vector.broadcast %418 : vector<1x384xf32> to vector<4x384xf32>
    %421 = arith.mulf %419, %420 : vector<4x384xf32>
    %422 = arith.addf %415, %421 : vector<4x384xf32>
    %c4_253 = arith.constant 4 : index
    %c3_254 = arith.constant 3 : index
    %c0_255 = arith.constant 0 : index
    %c0_256 = arith.constant 0 : index
    %423 = vector.load %arg4[%c4_253, %c3_254, %c0_255, %c0_256] : memref<9x4x4x1xf32, #tpu.memory_space<vmem>>, vector<1x1x4x1xf32>
    %424 = vector.shape_cast %423 : vector<1x1x4x1xf32> to vector<4x1xf32>
    %425 = vector.extract_strided_slice %401 {offsets = [3, 0], sizes = [1, 384], strides = [1, 1]} : vector<4x384xf32> to vector<1x384xf32>
    %426 = vector.broadcast %424 : vector<4x1xf32> to vector<4x384xf32>
    %427 = vector.broadcast %425 : vector<1x384xf32> to vector<4x384xf32>
    %428 = arith.mulf %426, %427 : vector<4x384xf32>
    %429 = arith.addf %422, %428 : vector<4x384xf32>
    %c0_257 = arith.constant 0 : index
    %c129_258 = arith.constant 129 : index
    %430 = vector.load %arg8[%c0_257, %c129_258] : memref<4x640xf32, #tpu.memory_space<vmem>>, vector<4x384xf32>
    %c5_259 = arith.constant 5 : index
    %c0_260 = arith.constant 0 : index
    %c0_261 = arith.constant 0 : index
    %c0_262 = arith.constant 0 : index
    %431 = vector.load %arg4[%c5_259, %c0_260, %c0_261, %c0_262] : memref<9x4x4x1xf32, #tpu.memory_space<vmem>>, vector<1x1x4x1xf32>
    %432 = vector.shape_cast %431 : vector<1x1x4x1xf32> to vector<4x1xf32>
    %433 = vector.extract_strided_slice %430 {offsets = [0, 0], sizes = [1, 384], strides = [1, 1]} : vector<4x384xf32> to vector<1x384xf32>
    %434 = vector.broadcast %432 : vector<4x1xf32> to vector<4x384xf32>
    %435 = vector.broadcast %433 : vector<1x384xf32> to vector<4x384xf32>
    %436 = arith.mulf %434, %435 : vector<4x384xf32>
    %437 = arith.addf %429, %436 : vector<4x384xf32>
    %c5_263 = arith.constant 5 : index
    %c1_264 = arith.constant 1 : index
    %c0_265 = arith.constant 0 : index
    %c0_266 = arith.constant 0 : index
    %438 = vector.load %arg4[%c5_263, %c1_264, %c0_265, %c0_266] : memref<9x4x4x1xf32, #tpu.memory_space<vmem>>, vector<1x1x4x1xf32>
    %439 = vector.shape_cast %438 : vector<1x1x4x1xf32> to vector<4x1xf32>
    %440 = vector.extract_strided_slice %430 {offsets = [1, 0], sizes = [1, 384], strides = [1, 1]} : vector<4x384xf32> to vector<1x384xf32>
    %441 = vector.broadcast %439 : vector<4x1xf32> to vector<4x384xf32>
    %442 = vector.broadcast %440 : vector<1x384xf32> to vector<4x384xf32>
    %443 = arith.mulf %441, %442 : vector<4x384xf32>
    %444 = arith.addf %437, %443 : vector<4x384xf32>
    %c5_267 = arith.constant 5 : index
    %c2_268 = arith.constant 2 : index
    %c0_269 = arith.constant 0 : index
    %c0_270 = arith.constant 0 : index
    %445 = vector.load %arg4[%c5_267, %c2_268, %c0_269, %c0_270] : memref<9x4x4x1xf32, #tpu.memory_space<vmem>>, vector<1x1x4x1xf32>
    %446 = vector.shape_cast %445 : vector<1x1x4x1xf32> to vector<4x1xf32>
    %447 = vector.extract_strided_slice %430 {offsets = [2, 0], sizes = [1, 384], strides = [1, 1]} : vector<4x384xf32> to vector<1x384xf32>
    %448 = vector.broadcast %446 : vector<4x1xf32> to vector<4x384xf32>
    %449 = vector.broadcast %447 : vector<1x384xf32> to vector<4x384xf32>
    %450 = arith.mulf %448, %449 : vector<4x384xf32>
    %451 = arith.addf %444, %450 : vector<4x384xf32>
    %c5_271 = arith.constant 5 : index
    %c3_272 = arith.constant 3 : index
    %c0_273 = arith.constant 0 : index
    %c0_274 = arith.constant 0 : index
    %452 = vector.load %arg4[%c5_271, %c3_272, %c0_273, %c0_274] : memref<9x4x4x1xf32, #tpu.memory_space<vmem>>, vector<1x1x4x1xf32>
    %453 = vector.shape_cast %452 : vector<1x1x4x1xf32> to vector<4x1xf32>
    %454 = vector.extract_strided_slice %430 {offsets = [3, 0], sizes = [1, 384], strides = [1, 1]} : vector<4x384xf32> to vector<1x384xf32>
    %455 = vector.broadcast %453 : vector<4x1xf32> to vector<4x384xf32>
    %456 = vector.broadcast %454 : vector<1x384xf32> to vector<4x384xf32>
    %457 = arith.mulf %455, %456 : vector<4x384xf32>
    %458 = arith.addf %451, %457 : vector<4x384xf32>
    %c0_275 = arith.constant 0 : index
    %c145_276 = arith.constant 145 : index
    %459 = vector.load %arg8[%c0_275, %c145_276] : memref<4x640xf32, #tpu.memory_space<vmem>>, vector<4x384xf32>
    %c6_277 = arith.constant 6 : index
    %c0_278 = arith.constant 0 : index
    %c0_279 = arith.constant 0 : index
    %c0_280 = arith.constant 0 : index
    %460 = vector.load %arg4[%c6_277, %c0_278, %c0_279, %c0_280] : memref<9x4x4x1xf32, #tpu.memory_space<vmem>>, vector<1x1x4x1xf32>
    %461 = vector.shape_cast %460 : vector<1x1x4x1xf32> to vector<4x1xf32>
    %462 = vector.extract_strided_slice %459 {offsets = [0, 0], sizes = [1, 384], strides = [1, 1]} : vector<4x384xf32> to vector<1x384xf32>
    %463 = vector.broadcast %461 : vector<4x1xf32> to vector<4x384xf32>
    %464 = vector.broadcast %462 : vector<1x384xf32> to vector<4x384xf32>
    %465 = arith.mulf %463, %464 : vector<4x384xf32>
    %466 = arith.addf %458, %465 : vector<4x384xf32>
    %c6_281 = arith.constant 6 : index
    %c1_282 = arith.constant 1 : index
    %c0_283 = arith.constant 0 : index
    %c0_284 = arith.constant 0 : index
    %467 = vector.load %arg4[%c6_281, %c1_282, %c0_283, %c0_284] : memref<9x4x4x1xf32, #tpu.memory_space<vmem>>, vector<1x1x4x1xf32>
    %468 = vector.shape_cast %467 : vector<1x1x4x1xf32> to vector<4x1xf32>
    %469 = vector.extract_strided_slice %459 {offsets = [1, 0], sizes = [1, 384], strides = [1, 1]} : vector<4x384xf32> to vector<1x384xf32>
    %470 = vector.broadcast %468 : vector<4x1xf32> to vector<4x384xf32>
    %471 = vector.broadcast %469 : vector<1x384xf32> to vector<4x384xf32>
    %472 = arith.mulf %470, %471 : vector<4x384xf32>
    %473 = arith.addf %466, %472 : vector<4x384xf32>
    %c6_285 = arith.constant 6 : index
    %c2_286 = arith.constant 2 : index
    %c0_287 = arith.constant 0 : index
    %c0_288 = arith.constant 0 : index
    %474 = vector.load %arg4[%c6_285, %c2_286, %c0_287, %c0_288] : memref<9x4x4x1xf32, #tpu.memory_space<vmem>>, vector<1x1x4x1xf32>
    %475 = vector.shape_cast %474 : vector<1x1x4x1xf32> to vector<4x1xf32>
    %476 = vector.extract_strided_slice %459 {offsets = [2, 0], sizes = [1, 384], strides = [1, 1]} : vector<4x384xf32> to vector<1x384xf32>
    %477 = vector.broadcast %475 : vector<4x1xf32> to vector<4x384xf32>
    %478 = vector.broadcast %476 : vector<1x384xf32> to vector<4x384xf32>
    %479 = arith.mulf %477, %478 : vector<4x384xf32>
    %480 = arith.addf %473, %479 : vector<4x384xf32>
    %c6_289 = arith.constant 6 : index
    %c3_290 = arith.constant 3 : index
    %c0_291 = arith.constant 0 : index
    %c0_292 = arith.constant 0 : index
    %481 = vector.load %arg4[%c6_289, %c3_290, %c0_291, %c0_292] : memref<9x4x4x1xf32, #tpu.memory_space<vmem>>, vector<1x1x4x1xf32>
    %482 = vector.shape_cast %481 : vector<1x1x4x1xf32> to vector<4x1xf32>
    %483 = vector.extract_strided_slice %459 {offsets = [3, 0], sizes = [1, 384], strides = [1, 1]} : vector<4x384xf32> to vector<1x384xf32>
    %484 = vector.broadcast %482 : vector<4x1xf32> to vector<4x384xf32>
    %485 = vector.broadcast %483 : vector<1x384xf32> to vector<4x384xf32>
    %486 = arith.mulf %484, %485 : vector<4x384xf32>
    %487 = arith.addf %480, %486 : vector<4x384xf32>
    %c0_293 = arith.constant 0 : index
    %c146_294 = arith.constant 146 : index
    %488 = vector.load %arg8[%c0_293, %c146_294] : memref<4x640xf32, #tpu.memory_space<vmem>>, vector<4x384xf32>
    %c7_295 = arith.constant 7 : index
    %c0_296 = arith.constant 0 : index
    %c0_297 = arith.constant 0 : index
    %c0_298 = arith.constant 0 : index
    %489 = vector.load %arg4[%c7_295, %c0_296, %c0_297, %c0_298] : memref<9x4x4x1xf32, #tpu.memory_space<vmem>>, vector<1x1x4x1xf32>
    %490 = vector.shape_cast %489 : vector<1x1x4x1xf32> to vector<4x1xf32>
    %491 = vector.extract_strided_slice %488 {offsets = [0, 0], sizes = [1, 384], strides = [1, 1]} : vector<4x384xf32> to vector<1x384xf32>
    %492 = vector.broadcast %490 : vector<4x1xf32> to vector<4x384xf32>
    %493 = vector.broadcast %491 : vector<1x384xf32> to vector<4x384xf32>
    %494 = arith.mulf %492, %493 : vector<4x384xf32>
    %495 = arith.addf %487, %494 : vector<4x384xf32>
    %c7_299 = arith.constant 7 : index
    %c1_300 = arith.constant 1 : index
    %c0_301 = arith.constant 0 : index
    %c0_302 = arith.constant 0 : index
    %496 = vector.load %arg4[%c7_299, %c1_300, %c0_301, %c0_302] : memref<9x4x4x1xf32, #tpu.memory_space<vmem>>, vector<1x1x4x1xf32>
    %497 = vector.shape_cast %496 : vector<1x1x4x1xf32> to vector<4x1xf32>
    %498 = vector.extract_strided_slice %488 {offsets = [1, 0], sizes = [1, 384], strides = [1, 1]} : vector<4x384xf32> to vector<1x384xf32>
    %499 = vector.broadcast %497 : vector<4x1xf32> to vector<4x384xf32>
    %500 = vector.broadcast %498 : vector<1x384xf32> to vector<4x384xf32>
    %501 = arith.mulf %499, %500 : vector<4x384xf32>
    %502 = arith.addf %495, %501 : vector<4x384xf32>
    %c7_303 = arith.constant 7 : index
    %c2_304 = arith.constant 2 : index
    %c0_305 = arith.constant 0 : index
    %c0_306 = arith.constant 0 : index
    %503 = vector.load %arg4[%c7_303, %c2_304, %c0_305, %c0_306] : memref<9x4x4x1xf32, #tpu.memory_space<vmem>>, vector<1x1x4x1xf32>
    %504 = vector.shape_cast %503 : vector<1x1x4x1xf32> to vector<4x1xf32>
    %505 = vector.extract_strided_slice %488 {offsets = [2, 0], sizes = [1, 384], strides = [1, 1]} : vector<4x384xf32> to vector<1x384xf32>
    %506 = vector.broadcast %504 : vector<4x1xf32> to vector<4x384xf32>
    %507 = vector.broadcast %505 : vector<1x384xf32> to vector<4x384xf32>
    %508 = arith.mulf %506, %507 : vector<4x384xf32>
    %509 = arith.addf %502, %508 : vector<4x384xf32>
    %c7_307 = arith.constant 7 : index
    %c3_308 = arith.constant 3 : index
    %c0_309 = arith.constant 0 : index
    %c0_310 = arith.constant 0 : index
    %510 = vector.load %arg4[%c7_307, %c3_308, %c0_309, %c0_310] : memref<9x4x4x1xf32, #tpu.memory_space<vmem>>, vector<1x1x4x1xf32>
    %511 = vector.shape_cast %510 : vector<1x1x4x1xf32> to vector<4x1xf32>
    %512 = vector.extract_strided_slice %488 {offsets = [3, 0], sizes = [1, 384], strides = [1, 1]} : vector<4x384xf32> to vector<1x384xf32>
    %513 = vector.broadcast %511 : vector<4x1xf32> to vector<4x384xf32>
    %514 = vector.broadcast %512 : vector<1x384xf32> to vector<4x384xf32>
    %515 = arith.mulf %513, %514 : vector<4x384xf32>
    %516 = arith.addf %509, %515 : vector<4x384xf32>
    %c0_311 = arith.constant 0 : index
    %c147_312 = arith.constant 147 : index
    %517 = vector.load %arg8[%c0_311, %c147_312] : memref<4x640xf32, #tpu.memory_space<vmem>>, vector<4x384xf32>
    %c8_313 = arith.constant 8 : index
    %c0_314 = arith.constant 0 : index
    %c0_315 = arith.constant 0 : index
    %c0_316 = arith.constant 0 : index
    %518 = vector.load %arg4[%c8_313, %c0_314, %c0_315, %c0_316] : memref<9x4x4x1xf32, #tpu.memory_space<vmem>>, vector<1x1x4x1xf32>
    %519 = vector.shape_cast %518 : vector<1x1x4x1xf32> to vector<4x1xf32>
    %520 = vector.extract_strided_slice %517 {offsets = [0, 0], sizes = [1, 384], strides = [1, 1]} : vector<4x384xf32> to vector<1x384xf32>
    %521 = vector.broadcast %519 : vector<4x1xf32> to vector<4x384xf32>
    %522 = vector.broadcast %520 : vector<1x384xf32> to vector<4x384xf32>
    %523 = arith.mulf %521, %522 : vector<4x384xf32>
    %524 = arith.addf %516, %523 : vector<4x384xf32>
    %c8_317 = arith.constant 8 : index
    %c1_318 = arith.constant 1 : index
    %c0_319 = arith.constant 0 : index
    %c0_320 = arith.constant 0 : index
    %525 = vector.load %arg4[%c8_317, %c1_318, %c0_319, %c0_320] : memref<9x4x4x1xf32, #tpu.memory_space<vmem>>, vector<1x1x4x1xf32>
    %526 = vector.shape_cast %525 : vector<1x1x4x1xf32> to vector<4x1xf32>
    %527 = vector.extract_strided_slice %517 {offsets = [1, 0], sizes = [1, 384], strides = [1, 1]} : vector<4x384xf32> to vector<1x384xf32>
    %528 = vector.broadcast %526 : vector<4x1xf32> to vector<4x384xf32>
    %529 = vector.broadcast %527 : vector<1x384xf32> to vector<4x384xf32>
    %530 = arith.mulf %528, %529 : vector<4x384xf32>
    %531 = arith.addf %524, %530 : vector<4x384xf32>
    %c8_321 = arith.constant 8 : index
    %c2_322 = arith.constant 2 : index
    %c0_323 = arith.constant 0 : index
    %c0_324 = arith.constant 0 : index
    %532 = vector.load %arg4[%c8_321, %c2_322, %c0_323, %c0_324] : memref<9x4x4x1xf32, #tpu.memory_space<vmem>>, vector<1x1x4x1xf32>
    %533 = vector.shape_cast %532 : vector<1x1x4x1xf32> to vector<4x1xf32>
    %534 = vector.extract_strided_slice %517 {offsets = [2, 0], sizes = [1, 384], strides = [1, 1]} : vector<4x384xf32> to vector<1x384xf32>
    %535 = vector.broadcast %533 : vector<4x1xf32> to vector<4x384xf32>
    %536 = vector.broadcast %534 : vector<1x384xf32> to vector<4x384xf32>
    %537 = arith.mulf %535, %536 : vector<4x384xf32>
    %538 = arith.addf %531, %537 : vector<4x384xf32>
    %c8_325 = arith.constant 8 : index
    %c3_326 = arith.constant 3 : index
    %c0_327 = arith.constant 0 : index
    %c0_328 = arith.constant 0 : index
    %539 = vector.load %arg4[%c8_325, %c3_326, %c0_327, %c0_328] : memref<9x4x4x1xf32, #tpu.memory_space<vmem>>, vector<1x1x4x1xf32>
    %540 = vector.shape_cast %539 : vector<1x1x4x1xf32> to vector<4x1xf32>
    %541 = vector.extract_strided_slice %517 {offsets = [3, 0], sizes = [1, 384], strides = [1, 1]} : vector<4x384xf32> to vector<1x384xf32>
    %542 = vector.broadcast %540 : vector<4x1xf32> to vector<4x384xf32>
    %543 = vector.broadcast %541 : vector<1x384xf32> to vector<4x384xf32>
    %544 = arith.mulf %542, %543 : vector<4x384xf32>
    %545 = arith.addf %538, %544 : vector<4x384xf32>
    %c0_329 = arith.constant 0 : index
    %c0_330 = arith.constant 0 : index
    %546 = vector.load %arg5[%c0_329, %c0_330] : memref<4x1xf32, #tpu.memory_space<vmem>>, vector<4x1xf32>
    %547 = vector.broadcast %546 : vector<4x1xf32> to vector<4x384xf32>
    %548 = arith.addf %545, %547 : vector<4x384xf32>
    %549 = arith.addf %548, %283 : vector<4x384xf32>
    %cst_331 = arith.constant 0.000000e+00 : f32
    %550 = vector.broadcast %cst_331 : f32 to vector<4x384xf32>
    %551 = arith.maximumf %549, %550 : vector<4x384xf32>
    %c0_332 = arith.constant 0 : index
    %c0_333 = arith.constant 0 : index
    %c0_334 = arith.constant 0 : index
    %552 = vector.load %arg7[%c0_332, %c0_333, %c0_334] : memref<1x4x384xf32, #tpu.memory_space<vmem>>, vector<1x4x384xf32>
    %553 = vector.shape_cast %552 : vector<1x4x384xf32> to vector<4x384xf32>
    %554 = vector.shape_cast %551 : vector<4x384xf32> to vector<1x4x384xf32>
    tpu.vector_store %arg7[%c0_332, %c0_333, %c0_334], %554 {strides = array<i32>} : memref<1x4x384xf32, #tpu.memory_space<vmem>>, vector<1x4x384xf32>,
    return
  }
  func.func @transform_0(%arg0: i32) -> (i32, i32, i32) {
    %c0_i32 = arith.constant 0 : i32
    %c0_i32_0 = arith.constant 0 : i32
    %c0_i32_1 = arith.constant 0 : i32
    return %arg0, %c0_i32, %c0_i32_0 : i32, i32, i32
  }
  func.func @transform_1(%arg0: i32) -> (i32, i32, i32, i32) {
    %c0_i32 = arith.constant 0 : i32
    %c0_i32_0 = arith.constant 0 : i32
    %c0_i32_1 = arith.constant 0 : i32
    %c0_i32_2 = arith.constant 0 : i32
    %c0_i32_3 = arith.constant 0 : i32
    return %c0_i32, %c0_i32_0, %c0_i32_1, %c0_i32_2 : i32, i32, i32, i32
  }
  func.func @transform_2(%arg0: i32) -> (i32, i32) {
    %c0_i32 = arith.constant 0 : i32
    %c0_i32_0 = arith.constant 0 : i32
    %c0_i32_1 = arith.constant 0 : i32
    return %c0_i32, %c0_i32_0 : i32, i32
  }
  func.func @transform_3(%arg0: i32) -> (i32, i32, i32, i32) {
    %c0_i32 = arith.constant 0 : i32
    %c0_i32_0 = arith.constant 0 : i32
    %c0_i32_1 = arith.constant 0 : i32
    %c0_i32_2 = arith.constant 0 : i32
    %c0_i32_3 = arith.constant 0 : i32
    return %c0_i32, %c0_i32_0, %c0_i32_1, %c0_i32_2 : i32, i32, i32, i32
  }
  func.func @transform_4(%arg0: i32) -> (i32, i32) {
    %c0_i32 = arith.constant 0 : i32
    %c0_i32_0 = arith.constant 0 : i32
    %c0_i32_1 = arith.constant 0 : i32
    return %c0_i32, %c0_i32_0 : i32, i32
  }
  func.func @transform_5(%arg0: i32) -> (i32, i32) {
    %c0_i32 = arith.constant 0 : i32
    %c0_i32_0 = arith.constant 0 : i32
    %c0_i32_1 = arith.constant 0 : i32
    return %c0_i32, %c0_i32_0 : i32, i32
  }
  func.func @transform_6(%arg0: i32) -> (i32, i32, i32) {
    %c0_i32 = arith.constant 0 : i32
    %c0_i32_0 = arith.constant 0 : i32
    %c0_i32_1 = arith.constant 0 : i32
    return %arg0, %c0_i32, %c0_i32_0 : i32, i32, i32
  }
}

</mosaic_0001>

<llo_original>
// kernel: tpu_custom_call.1
$region0: #{tpu_custom_call.1}
  #allocation0 [shape = 'u32[]', space=smem, size = 0x4, offset = 0x4, fixed_abs, tag = 'smem constant byte address 0x4 - core index']
  #allocation1 [shape = 'u32[144,128]{1,0:T(1,128)}', space=vmem, size = 0x12000, scoped, tag = 'internal scratch']
  #allocation2 [shape = 'f32[4,640]{1,0:T(4,128)}', space=vmem, size = 0x2800, scoped, tag = 'scratch operand']
  %s0 = inlined_call_operand.vmem [shape: f32[2,4,640], index: 0, kind: input, shape index: {}]
  %s1 = inlined_call_operand.vmem [shape: f32[9,4,4,1], index: 1, kind: input, shape index: {}]
  %s2 = inlined_call_operand.vmem [shape: f32[4,1], index: 2, kind: input, shape index: {}]
  %s3 = inlined_call_operand.vmem [shape: f32[9,4,4,1], index: 3, kind: input, shape index: {}]
  %s4 = inlined_call_operand.vmem [shape: f32[4,1], index: 4, kind: input, shape index: {}]
  %s5 = inlined_call_operand.vmem [shape: f32[1,384], index: 5, kind: input, shape index: {}]
  %s6 = inlined_call_operand.hbm [shape: f32[2,4,384], index: 6, kind: output, shape index: {}]
  %s7 = sld [smem:[#allocation0]]
  $region57: #{tpu_custom_call.1} parent=0
    _
  %s9 = ssub.s32 1, %s7
  %s10 = scalar_select 0, %s9, %s7
  $region1: #{tpu_custom_call.1} parent=0
    #allocation3 [shape = 'u8[12288]{0}', space=vmem, size = 0x3000, scoped, tag = 'output window, operand 0']
    #allocation4 [shape = 's32[2]{0}', space=sflag, size = 0x8, scoped, tag = 'scoped memory for tpu_custom_call.1']
    %11 = vsyncpa [#allocation4], 0
    %s12 = scalar_lea.sflag [#allocation4], 1
    %13 = vsyncpa %s12, 0
    loop: start=0, step=1, limit=4
    $region2: #{tpu_custom_call.1} parent=1 // loop_pre_header
      _
    $region3: #{tpu_custom_call.1} parent=1 // loop_header
      %s15 = sphi 0, %s19
      %p16 = scmp.ge.s32.totalorder %s15, 4
      %s25 = sphi 0, %s27
      %s28 = sphi 0, %s25
      %s29 = sphi 0, %s28
      %s45 = sphi 0, %s29
      %s49 = sphi 0, %s49
      %s51 = sphi 0, %s49
      %s52 = sphi 0, %s51
      %s66 = sphi 0, %s52
      %s70 = sphi 0, %s70
      %s72 = sphi 0, %s70
      %s73 = sphi 0, %s72
      %s87 = sphi 0, %s73
      %s91 = sphi 0, %s91
      %s93 = sphi 0, %s91
      %s94 = sphi 0, %s93
      %s108 = sphi 0, %s94
      %s112 = sphi 0, %s112
      %s114 = sphi 0, %s112
      %s115 = sphi 0, %s114
      %s129 = sphi 0, %s115
      %s133 = sphi 0, %s133
      %s135 = sphi 0, %s133
      %s136 = sphi 0, %s135
      %s150 = sphi 0, %s136
      %s156 = sphi 0, %s158
      %s159 = sphi 0, %s156
      %s160 = sphi 0, %s159
      %s176 = sphi 0, %s160
    $region4: #{tpu_custom_call.1} parent=1 // loop_header_branch
      %18 = sbr.rel (%p16) target = $region8
    $region5: #{tpu_custom_call.1} parent=1 // loop_body
      %s20 = ssub.s32 %s15, 1
      %s21 = ssub.s32 %s15, 2
      %s22 = sadd.s32 %s15, 1
      %s23 = ssub.s32 %s15, %s22
      %p24 = scmp.eq.s32.totalorder %s23, 0
      %s26 = sadd.s32 %s25, 1
      %s27 = scalar_select %p24, %s25, %s26
      %p30 = pneg %p24
      %p31 = scmp.eq.s32.totalorder %s15, 1
      %p32 = por %p30, %p31
      %p33 = scmp.ne.s32.totalorder %s25, %s28
      %p34 = scmp.eq.s32.totalorder %s15, 0
      %p35 = por %p33, %p34
      %p36 = scmp.ne.s32.totalorder %s25, %s28
      %p37 = scmp.eq.s32.totalorder %s20, 1
      %p38 = por %p36, %p37
      %p39 = scmp.ne.s32.totalorder %s28, %s29
      %p40 = scmp.eq.s32.totalorder %s20, 0
      %p41 = por %p39, %p40
      %p42 = scmp.ne.s32.totalorder %s28, %s29
      %p43 = scmp.eq.s32.totalorder %s21, 1
      %p44 = por %p42, %p43
      %p46 = scmp.ne.s32.totalorder %s29, %s45
      %p47 = scmp.eq.s32.totalorder %s21, 0
      %p48 = por %p46, %p47
      %s50 = sadd.s32 %s49, 1
      %p53 = scmp.eq.s32.totalorder %s15, 1
      %p54 = scmp.ne.s32.totalorder %s49, %s51
      %p55 = scmp.eq.s32.totalorder %s15, 0
      %p56 = por %p54, %p55
      %p57 = scmp.ne.s32.totalorder %s49, %s51
      %p58 = scmp.eq.s32.totalorder %s20, 1
      %p59 = por %p57, %p58
      %p60 = scmp.ne.s32.totalorder %s51, %s52
      %p61 = scmp.eq.s32.totalorder %s20, 0
      %p62 = por %p60, %p61
      %p63 = scmp.ne.s32.totalorder %s51, %s52
      %p64 = scmp.eq.s32.totalorder %s21, 1
      %p65 = por %p63, %p64
      %p67 = scmp.ne.s32.totalorder %s52, %s66
      %p68 = scmp.eq.s32.totalorder %s21, 0
      %p69 = por %p67, %p68
      %s71 = sadd.s32 %s70, 1
      %p74 = scmp.eq.s32.totalorder %s15, 1
      %p75 = scmp.ne.s32.totalorder %s70, %s72
      %p76 = scmp.eq.s32.totalorder %s15, 0
      %p77 = por %p75, %p76
      %p78 = scmp.ne.s32.totalorder %s70, %s72
      %p79 = scmp.eq.s32.totalorder %s20, 1
      %p80 = por %p78, %p79
      %p81 = scmp.ne.s32.totalorder %s72, %s73
      %p82 = scmp.eq.s32.totalorder %s20, 0
      %p83 = por %p81, %p82
      %p84 = scmp.ne.s32.totalorder %s72, %s73
      %p85 = scmp.eq.s32.totalorder %s21, 1
      %p86 = por %p84, %p85
      %p88 = scmp.ne.s32.totalorder %s73, %s87
      %p89 = scmp.eq.s32.totalorder %s21, 0
      %p90 = por %p88, %p89
      %s92 = sadd.s32 %s91, 1
      %p95 = scmp.eq.s32.totalorder %s15, 1
      %p96 = scmp.ne.s32.totalorder %s91, %s93
      %p97 = scmp.eq.s32.totalorder %s15, 0
      %p98 = por %p96, %p97
      %p99 = scmp.ne.s32.totalorder %s91, %s93
      %p100 = scmp.eq.s32.totalorder %s20, 1
      %p101 = por %p99, %p100
      %p102 = scmp.ne.s32.totalorder %s93, %s94
      %p103 = scmp.eq.s32.totalorder %s20, 0
      %p104 = por %p102, %p103
      %p105 = scmp.ne.s32.totalorder %s93, %s94
      %p106 = scmp.eq.s32.totalorder %s21, 1
      %p107 = por %p105, %p106
      %p109 = scmp.ne.s32.totalorder %s94, %s108
      %p110 = scmp.eq.s32.totalorder %s21, 0
      %p111 = por %p109, %p110
      %s113 = sadd.s32 %s112, 1
      %p116 = scmp.eq.s32.totalorder %s15, 1
      %p117 = scmp.ne.s32.totalorder %s112, %s114
      %p118 = scmp.eq.s32.totalorder %s15, 0
      %p119 = por %p117, %p118
      %p120 = scmp.ne.s32.totalorder %s112, %s114
      %p121 = scmp.eq.s32.totalorder %s20, 1
      %p122 = por %p120, %p121
      %p123 = scmp.ne.s32.totalorder %s114, %s115
      %p124 = scmp.eq.s32.totalorder %s20, 0
      %p125 = por %p123, %p124
      %p126 = scmp.ne.s32.totalorder %s114, %s115
      %p127 = scmp.eq.s32.totalorder %s21, 1
      %p128 = por %p126, %p127
      %p130 = scmp.ne.s32.totalorder %s115, %s129
      %p131 = scmp.eq.s32.totalorder %s21, 0
      %p132 = por %p130, %p131
      %s134 = sadd.s32 %s133, 1
      %p137 = scmp.eq.s32.totalorder %s15, 1
      %p138 = scmp.ne.s32.totalorder %s133, %s135
      %p139 = scmp.eq.s32.totalorder %s15, 0
      %p140 = por %p138, %p139
      %p141 = scmp.ne.s32.totalorder %s133, %s135
      %p142 = scmp.eq.s32.totalorder %s20, 1
      %p143 = por %p141, %p142
      %p144 = scmp.ne.s32.totalorder %s135, %s136
      %p145 = scmp.eq.s32.totalorder %s20, 0
      %p146 = por %p144, %p145
      %p147 = scmp.ne.s32.totalorder %s135, %s136
      %p148 = scmp.eq.s32.totalorder %s21, 1
      %p149 = por %p147, %p148
      %p151 = scmp.ne.s32.totalorder %s136, %s150
      %p152 = scmp.eq.s32.totalorder %s21, 0
      %p153 = por %p151, %p152
      %s154 = ssub.s32 %s15, %s22
      %p155 = scmp.eq.s32.totalorder %s154, 0
      %s157 = sadd.s32 %s156, 1
      %s158 = scalar_select %p155, %s156, %s157
      %p161 = pneg %p155
      %p162 = scmp.eq.s32.totalorder %s15, 1
      %p163 = por %p161, %p162
      %p164 = scmp.ne.s32.totalorder %s156, %s159
      %p165 = scmp.eq.s32.totalorder %s15, 0
      %p166 = por %p164, %p165
      %p167 = scmp.ne.s32.totalorder %s156, %s159
      %p168 = scmp.eq.s32.totalorder %s20, 1
      %p169 = por %p167, %p168
      %p170 = scmp.ne.s32.totalorder %s159, %s160
      %p171 = scmp.eq.s32.totalorder %s20, 0
      %p172 = por %p170, %p171
      %p173 = scmp.ne.s32.totalorder %s159, %s160
      %p174 = scmp.eq.s32.totalorder %s21, 1
      %p175 = por %p173, %p174
      %p177 = scmp.ne.s32.totalorder %s160, %s176
      %p178 = scmp.eq.s32.totalorder %s21, 0
      %p179 = por %p177, %p178
      %p180 = scmp.le.s32.totalorder 1, %s15
      %p181 = scmp.lt.s32.totalorder %s15, 3
      %p182 = pnand %p180, %p181
      %p183 = pneg %p182
      // Predicated region
      $region9: #{tpu_custom_call.1} parent=5 // pred_check
        _
      $region10: #{tpu_custom_call.1} parent=5 // pred_check_branch
        %185 = sbr.rel (%p182) target = $region12
      $region11: #{tpu_custom_call.1} parent=5 // pred_region
        %s186 = ssub.s32 %s15, 1
        // Predicated region
        $region13: #{tpu_custom_call.1} parent=11 // pred_check
          %p187 = pneg %p62
        $region14: #{tpu_custom_call.1} parent=11 // pred_check_branch
          %189 = sbr.rel (%p187) target = $region16
        $region15: #{tpu_custom_call.1} parent=11 // pred_region
          _
        $region16: #{tpu_custom_call.1} parent=11 // pred_fallthru
          _
        // Predicated region
        $region17: #{tpu_custom_call.1} parent=11 // pred_check
          %p190 = pneg %p83
        $region18: #{tpu_custom_call.1} parent=11 // pred_check_branch
          %192 = sbr.rel (%p190) target = $region20
        $region19: #{tpu_custom_call.1} parent=11 // pred_region
          _
        $region20: #{tpu_custom_call.1} parent=11 // pred_fallthru
          _
        // Predicated region
        $region21: #{tpu_custom_call.1} parent=11 // pred_check
          %p193 = pneg %p104
        $region22: #{tpu_custom_call.1} parent=11 // pred_check_branch
          %195 = sbr.rel (%p193) target = $region24
        $region23: #{tpu_custom_call.1} parent=11 // pred_region
          _
        $region24: #{tpu_custom_call.1} parent=11 // pred_fallthru
          _
        // Predicated region
        $region25: #{tpu_custom_call.1} parent=11 // pred_check
          %p196 = pneg %p125
        $region26: #{tpu_custom_call.1} parent=11 // pred_check_branch
          %198 = sbr.rel (%p196) target = $region28
        $region27: #{tpu_custom_call.1} parent=11 // pred_region
          _
        $region28: #{tpu_custom_call.1} parent=11 // pred_fallthru
          _
        // Predicated region
        $region29: #{tpu_custom_call.1} parent=11 // pred_check
          %p199 = pneg %p146
        $region30: #{tpu_custom_call.1} parent=11 // pred_check_branch
          %201 = sbr.rel (%p199) target = $region32
        $region31: #{tpu_custom_call.1} parent=11 // pred_region
          _
        $region32: #{tpu_custom_call.1} parent=11 // pred_fallthru
          _
      $region12: #{tpu_custom_call.1} parent=5 // pred_fallthru
        _
      %p202 = scmp.lt.s32.totalorder %s15, 2
      // Predicated region
      $region33: #{tpu_custom_call.1} parent=5 // pred_check
        %p203 = pneg %p202
      $region34: #{tpu_custom_call.1} parent=5 // pred_check_branch
        %205 = sbr.rel (%p203) target = $region36
      $region35: #{tpu_custom_call.1} parent=5 // pred_region
        // Predicated region
        $region37: #{tpu_custom_call.1} parent=35 // pred_check
          %p206 = pneg %p35
        $region38: #{tpu_custom_call.1} parent=35 // pred_check_branch
          %208 = sbr.rel (%p206) target = $region40
        $region39: #{tpu_custom_call.1} parent=35 // pred_region
          %p209 = scmp.lt.s32.totalorder %s15, 1
          %s210 = scalar_select %p209, %s15, 1
          %s211 = smul.addr %s210, 5
          %s212 = smul.addr %s211, 4
          %s213 = scalar_lea.vmem %s0, %s212
        $region40: #{tpu_custom_call.1} parent=35 // pred_fallthru
          _
      $region36: #{tpu_custom_call.1} parent=5 // pred_fallthru
        _
      %p214 = scmp.le.s32.totalorder 1, %s15
      %p215 = scmp.lt.s32.totalorder %s15, 3
      %p216 = pnand %p214, %p215
      %p217 = pneg %p216
      // Predicated region
      $region41: #{tpu_custom_call.1} parent=5 // pred_check
        _
      $region42: #{tpu_custom_call.1} parent=5 // pred_check_branch
        %219 = sbr.rel (%p216) target = $region44
      $region43: #{tpu_custom_call.1} parent=5 // pred_region
        %s220 = ssub.s32 %s15, 1
        %p221 = scmp.lt.s32.totalorder %s20, 1
        %s222 = scalar_select %p221, %s20, 1
        %s223 = smul.addr %s222, 5
        %s224 = smul.addr %s223, 4
        %s225 = scalar_lea.vmem %s0, %s224
        %p226 = pneg %p41
        %p227 = pneg %p38
        %p228 = pneg %p62
        %p229 = pneg %p59
        %p230 = pneg %p83
        %p231 = pneg %p80
        %p232 = pneg %p104
        %p233 = pneg %p101
        %p234 = pneg %p125
        %p235 = pneg %p122
        %p236 = pneg %p146
        %p237 = pneg %p143
        %p238 = pneg %p172
        %p239 = pneg %p169
        %s240 = sand.u32 %s159, 1
        %s241 = scalar_lea.sflag [#allocation4], %s240
        %s242 = sand.u32 %s159, 1
        %s243 = smul.addr %s242, 12
        %s244 = scalar_lea.vmem [#allocation3], %s243
        %p245 = scmp.lt.s32.totalorder %s20, 1
        %s246 = scalar_select %p245, %s20, 1
        %s247 = smul.addr %s246, 5
        %s248 = smul.addr %s247, 4
        %s249 = scalar_lea.vmem %s0, %s248
        %v250 = vld [vmem:[%s5] sm:$0x7]
        %v251 = vld [vmem:[%s249] sm:$0xff]
        %v252 = vld [vmem:[%s249 + $0x8] sm:$0xff]
        %v253 = vld [vmem:[%s1] sm:$0xf]
        %255 = vset.pattern.permute.xlu0 0
        %256 = vperm.xlu0 %255, %v253
        %v257 = vpop.permute.xlu0 %256
        %v261 = vlaneseq
        %v262 = vshrl.u32 %v261, 7
        %v263 = vsub.s32 0, %v262
        %v264 = vrot.slane %v251, %v263
        %v265 = vlaneseq
        %v266 = vshrl.u32 %v265, 7
        %v267 = vsub.s32 4, %v266
        %v268 = vrot.slane %v251, %v267
        %v269 = vlaneseq
        %v270 = vshrl.u32 %v269, 7
        %v271 = vsub.s32 0, %v270
        %v272 = vrot.slane %v252, %v271
        %v273 = vlaneseq
        %v274 = vshrl.u32 %v273, 7
        %v275 = vsub.s32 4, %v274
        %v276 = vrot.slane %v252, %v275
        %v281 = vlaneseq
        %v282 = vshrl.u32 %v281, 7
        %v283 = vsub.s32 0, %v282
        %v284 = vrot.slane %v264, %v283
        %v285 = vlaneseq
        %v286 = vshrl.u32 %v285, 7
        %v287 = vsub.s32 0, %v286
        %v288 = vrot.slane %v268, %v287
        %v289 = vlaneseq
        %v290 = vshrl.u32 %v289, 7
        %v291 = vsub.s32 0, %v290
        %v292 = vrot.slane %v272, %v291
        %v293 = vlaneseq
        %v294 = vshrl.u32 %v293, 7
        %v295 = vsub.s32 0, %v294
        %v296 = vrot.slane %v276, %v295
        %v297 = vmul.f32 %v257, %v284
        %v298 = vmul.f32 %v257, %v288
        %v299 = vmul.f32 %v257, %v292
        %v300 = vmul.f32 %v257, %v296
        %v301 = vadd.f32 %v297, 0.0
        %v302 = vadd.f32 %v298, 0.0
        %v303 = vadd.f32 %v299, 0.0
        %v304 = vadd.f32 %v300, 0.0
        %s305 = scalar_lea.vmem %s1, 4
        %v306 = vld [vmem:[%s305] sm:$0xf]
        %308 = vset.pattern.permute.xlu0 0
        %309 = vperm.xlu0 %308, %v306
        %v310 = vpop.permute.xlu0 %309
        %v312 = vlaneseq
        %v313 = vshrl.u32 %v312, 7
        %v314 = vsub.s32 1, %v313
        %v315 = vrot.slane %v251, %v314
        %v316 = vlaneseq
        %v317 = vshrl.u32 %v316, 7
        %v318 = vsub.s32 5, %v317
        %v319 = vrot.slane %v251, %v318
        %v320 = vlaneseq
        %v321 = vshrl.u32 %v320, 7
        %v322 = vsub.s32 1, %v321
        %v323 = vrot.slane %v252, %v322
        %v324 = vlaneseq
        %v325 = vshrl.u32 %v324, 7
        %v326 = vsub.s32 5, %v325
        %v327 = vrot.slane %v252, %v326
        %v332 = vlaneseq
        %v333 = vshrl.u32 %v332, 7
        %v334 = vsub.s32 1, %v333
        %v335 = vrot.slane %v315, %v334
        %v336 = vlaneseq
        %v337 = vshrl.u32 %v336, 7
        %v338 = vsub.s32 1, %v337
        %v339 = vrot.slane %v319, %v338
        %v340 = vlaneseq
        %v341 = vshrl.u32 %v340, 7
        %v342 = vsub.s32 1, %v341
        %v343 = vrot.slane %v323, %v342
        %v344 = vlaneseq
        %v345 = vshrl.u32 %v344, 7
        %v346 = vsub.s32 1, %v345
        %v347 = vrot.slane %v327, %v346
        %v348 = vmul.f32 %v310, %v335
        %v349 = vmul.f32 %v310, %v339
        %v350 = vmul.f32 %v310, %v343
        %v351 = vmul.f32 %v310, %v347
        %v352 = vadd.f32 %v301, %v348
        %v353 = vadd.f32 %v302, %v349
        %v354 = vadd.f32 %v303, %v350
        %v355 = vadd.f32 %v304, %v351
        %s356 = scalar_lea.vmem %s1, 8
        %v357 = vld [vmem:[%s356] sm:$0xf]
        %359 = vset.pattern.permute.xlu0 0
        %360 = vperm.xlu0 %359, %v357
        %v361 = vpop.permute.xlu0 %360
        %v363 = vlaneseq
        %v364 = vshrl.u32 %v363, 7
        %v365 = vsub.s32 2, %v364
        %v366 = vrot.slane %v251, %v365
        %v367 = vlaneseq
        %v368 = vshrl.u32 %v367, 7
        %v369 = vsub.s32 6, %v368
        %v370 = vrot.slane %v251, %v369
        %v371 = vlaneseq
        %v372 = vshrl.u32 %v371, 7
        %v373 = vsub.s32 2, %v372
        %v374 = vrot.slane %v252, %v373
        %v375 = vlaneseq
        %v376 = vshrl.u32 %v375, 7
        %v377 = vsub.s32 6, %v376
        %v378 = vrot.slane %v252, %v377
        %v383 = vlaneseq
        %v384 = vshrl.u32 %v383, 7
        %v385 = vsub.s32 2, %v384
        %v386 = vrot.slane %v366, %v385
        %v387 = vlaneseq
        %v388 = vshrl.u32 %v387, 7
        %v389 = vsub.s32 2, %v388
        %v390 = vrot.slane %v370, %v389
        %v391 = vlaneseq
        %v392 = vshrl.u32 %v391, 7
        %v393 = vsub.s32 2, %v392
        %v394 = vrot.slane %v374, %v393
        %v395 = vlaneseq
        %v396 = vshrl.u32 %v395, 7
        %v397 = vsub.s32 2, %v396
        %v398 = vrot.slane %v378, %v397
        %v399 = vmul.f32 %v361, %v386
        %v400 = vmul.f32 %v361, %v390
        %v401 = vmul.f32 %v361, %v394
        %v402 = vmul.f32 %v361, %v398
        %v403 = vadd.f32 %v352, %v399
        %v404 = vadd.f32 %v353, %v400
        %v405 = vadd.f32 %v354, %v401
        %v406 = vadd.f32 %v355, %v402
        %s407 = scalar_lea.vmem %s1, 12
        %v408 = vld [vmem:[%s407] sm:$0xf]
        %410 = vset.pattern.permute.xlu0 0
        %411 = vperm.xlu0 %410, %v408
        %v412 = vpop.permute.xlu0 %411
        %v414 = vlaneseq
        %v415 = vshrl.u32 %v414, 7
        %v416 = vsub.s32 3, %v415
        %v417 = vrot.slane %v251, %v416
        %v418 = vlaneseq
        %v419 = vshrl.u32 %v418, 7
        %v420 = vsub.s32 7, %v419
        %v421 = vrot.slane %v251, %v420
        %v422 = vlaneseq
        %v423 = vshrl.u32 %v422, 7
        %v424 = vsub.s32 3, %v423
        %v425 = vrot.slane %v252, %v424
        %v426 = vlaneseq
        %v427 = vshrl.u32 %v426, 7
        %v428 = vsub.s32 7, %v427
        %v429 = vrot.slane %v252, %v428
        %v434 = vlaneseq
        %v435 = vshrl.u32 %v434, 7
        %v436 = vsub.s32 3, %v435
        %v437 = vrot.slane %v417, %v436
        %v438 = vlaneseq
        %v439 = vshrl.u32 %v438, 7
        %v440 = vsub.s32 3, %v439
        %v441 = vrot.slane %v421, %v440
        %v442 = vlaneseq
        %v443 = vshrl.u32 %v442, 7
        %v444 = vsub.s32 3, %v443
        %v445 = vrot.slane %v425, %v444
        %v446 = vlaneseq
        %v447 = vshrl.u32 %v446, 7
        %v448 = vsub.s32 3, %v447
        %v449 = vrot.slane %v429, %v448
        %v450 = vmul.f32 %v412, %v437
        %v451 = vmul.f32 %v412, %v441
        %v452 = vmul.f32 %v412, %v445
        %v453 = vmul.f32 %v412, %v449
        %v454 = vadd.f32 %v403, %v450
        %v455 = vadd.f32 %v404, %v451
        %v456 = vadd.f32 %v405, %v452
        %v457 = vadd.f32 %v406, %v453
        %s458 = scalar_lea.vmem %s1, 16
        %v459 = vld [vmem:[%s458] sm:$0xf]
        %461 = vset.pattern.permute.xlu0 0
        %462 = vperm.xlu0 %461, %v459
        %v463 = vpop.permute.xlu0 %462
        %v465 = vmul.f32 %v463, %v284
        %v466 = vmul.f32 %v463, %v288
        %v467 = vmul.f32 %v463, %v292
        %v468 = vmul.f32 %v463, %v296
        %473 = vrot.lane.b32.xlu0 %v465, 127
        %v474 = vpop.permute.xlu0 %473
        %475 = vrot.lane.b32.xlu0 %v466, 127
        %v476 = vpop.permute.xlu0 %475
        %477 = vrot.lane.b32.xlu0 %v467, 127
        %v478 = vpop.permute.xlu0 %477
        %479 = vrot.lane.b32.xlu0 %v468, 127
        %v480 = vpop.permute.xlu0 %479
        %vm481 = vcmask 1039360
        %v482 = vsel %vm481, %v474, %v476
        %v483 = vsel %vm481, %v476, %v478
        %v484 = vsel %vm481, %v478, %v480
        %v489 = vadd.f32 %v454, %v482
        %v490 = vadd.f32 %v455, %v483
        %v491 = vadd.f32 %v456, %v484
        %v492 = vadd.f32 %v457, %v480
        %s493 = scalar_lea.vmem %s1, 20
        %v494 = vld [vmem:[%s493] sm:$0xf]
        %496 = vset.pattern.permute.xlu0 0
        %497 = vperm.xlu0 %496, %v494
        %v498 = vpop.permute.xlu0 %497
        %v500 = vmul.f32 %v498, %v335
        %v501 = vmul.f32 %v498, %v339
        %v502 = vmul.f32 %v498, %v343
        %v503 = vmul.f32 %v498, %v347
        %508 = vrot.lane.b32.xlu0 %v500, 127
        %v509 = vpop.permute.xlu0 %508
        %510 = vrot.lane.b32.xlu0 %v501, 127
        %v511 = vpop.permute.xlu0 %510
        %512 = vrot.lane.b32.xlu0 %v502, 127
        %v513 = vpop.permute.xlu0 %512
        %514 = vrot.lane.b32.xlu0 %v503, 127
        %v515 = vpop.permute.xlu0 %514
        %v516 = vsel %vm481, %v509, %v511
        %v517 = vsel %vm481, %v511, %v513
        %v518 = vsel %vm481, %v513, %v515
        %v523 = vadd.f32 %v489, %v516
        %v524 = vadd.f32 %v490, %v517
        %v525 = vadd.f32 %v491, %v518
        %v526 = vadd.f32 %v492, %v515
        %s527 = scalar_lea.vmem %s1, 24
        %v528 = vld [vmem:[%s527] sm:$0xf]
        %530 = vset.pattern.permute.xlu0 0
        %531 = vperm.xlu0 %530, %v528
        %v532 = vpop.permute.xlu0 %531
        %v534 = vmul.f32 %v532, %v386
        %v535 = vmul.f32 %v532, %v390
        %v536 = vmul.f32 %v532, %v394
        %v537 = vmul.f32 %v532, %v398
        %542 = vrot.lane.b32.xlu0 %v534, 127
        %v543 = vpop.permute.xlu0 %542
        %544 = vrot.lane.b32.xlu0 %v535, 127
        %v545 = vpop.permute.xlu0 %544
        %546 = vrot.lane.b32.xlu0 %v536, 127
        %v547 = vpop.permute.xlu0 %546
        %548 = vrot.lane.b32.xlu0 %v537, 127
        %v549 = vpop.permute.xlu0 %548
        %v550 = vsel %vm481, %v543, %v545
        %v551 = vsel %vm481, %v545, %v547
        %v552 = vsel %vm481, %v547, %v549
        %v557 = vadd.f32 %v523, %v550
        %v558 = vadd.f32 %v524, %v551
        %v559 = vadd.f32 %v525, %v552
        %v560 = vadd.f32 %v526, %v549
        %s561 = scalar_lea.vmem %s1, 28
        %v562 = vld [vmem:[%s561] sm:$0xf]
        %564 = vset.pattern.permute.xlu0 0
        %565 = vperm.xlu0 %564, %v562
        %v566 = vpop.permute.xlu0 %565
        %v568 = vmul.f32 %v566, %v437
        %v569 = vmul.f32 %v566, %v441
        %v570 = vmul.f32 %v566, %v445
        %v571 = vmul.f32 %v566, %v449
        %576 = vrot.lane.b32.xlu0 %v568, 127
        %v577 = vpop.permute.xlu0 %576
        %578 = vrot.lane.b32.xlu0 %v569, 127
        %v579 = vpop.permute.xlu0 %578
        %580 = vrot.lane.b32.xlu0 %v570, 127
        %v581 = vpop.permute.xlu0 %580
        %582 = vrot.lane.b32.xlu0 %v571, 127
        %v583 = vpop.permute.xlu0 %582
        %v584 = vsel %vm481, %v577, %v579
        %v585 = vsel %vm481, %v579, %v581
        %v586 = vsel %vm481, %v581, %v583
        %v591 = vadd.f32 %v557, %v584
        %v592 = vadd.f32 %v558, %v585
        %v593 = vadd.f32 %v559, %v586
        %v594 = vadd.f32 %v560, %v583
        %s595 = scalar_lea.vmem %s1, 32
        %v596 = vld [vmem:[%s595] sm:$0xf]
        %598 = vset.pattern.permute.xlu0 0
        %599 = vperm.xlu0 %598, %v596
        %v600 = vpop.permute.xlu0 %599
        %v602 = vmul.f32 %v600, %v284
        %v603 = vmul.f32 %v600, %v288
        %v604 = vmul.f32 %v600, %v292
        %v605 = vmul.f32 %v600, %v296
        %610 = vrot.lane.b32.xlu0 %v602, 126
        %v611 = vpop.permute.xlu0 %610
        %612 = vrot.lane.b32.xlu0 %v603, 126
        %v613 = vpop.permute.xlu0 %612
        %614 = vrot.lane.b32.xlu0 %v604, 126
        %v615 = vpop.permute.xlu0 %614
        %616 = vrot.lane.b32.xlu0 %v605, 126
        %v617 = vpop.permute.xlu0 %616
        %vm618 = vcmask 1031168
        %v619 = vsel %vm618, %v611, %v613
        %v620 = vsel %vm618, %v613, %v615
        %v621 = vsel %vm618, %v615, %v617
        %v626 = vadd.f32 %v591, %v619
        %v627 = vadd.f32 %v592, %v620
        %v628 = vadd.f32 %v593, %v621
        %v629 = vadd.f32 %v594, %v617
        %s630 = scalar_lea.vmem %s1, 36
        %v631 = vld [vmem:[%s630] sm:$0xf]
        %633 = vset.pattern.permute.xlu0 0
        %634 = vperm.xlu0 %633, %v631
        %v635 = vpop.permute.xlu0 %634
        %v637 = vmul.f32 %v635, %v335
        %v638 = vmul.f32 %v635, %v339
        %v639 = vmul.f32 %v635, %v343
        %v640 = vmul.f32 %v635, %v347
        %645 = vrot.lane.b32.xlu0 %v637, 126
        %v646 = vpop.permute.xlu0 %645
        %647 = vrot.lane.b32.xlu0 %v638, 126
        %v648 = vpop.permute.xlu0 %647
        %649 = vrot.lane.b32.xlu0 %v639, 126
        %v650 = vpop.permute.xlu0 %649
        %651 = vrot.lane.b32.xlu0 %v640, 126
        %v652 = vpop.permute.xlu0 %651
        %v653 = vsel %vm618, %v646, %v648
        %v654 = vsel %vm618, %v648, %v650
        %v655 = vsel %vm618, %v650, %v652
        %v660 = vadd.f32 %v626, %v653
        %v661 = vadd.f32 %v627, %v654
        %v662 = vadd.f32 %v628, %v655
        %v663 = vadd.f32 %v629, %v652
        %s664 = scalar_lea.vmem %s1, 40
        %v665 = vld [vmem:[%s664] sm:$0xf]
        %667 = vset.pattern.permute.xlu0 0
        %668 = vperm.xlu0 %667, %v665
        %v669 = vpop.permute.xlu0 %668
        %v671 = vmul.f32 %v669, %v386
        %v672 = vmul.f32 %v669, %v390
        %v673 = vmul.f32 %v669, %v394
        %v674 = vmul.f32 %v669, %v398
        %679 = vrot.lane.b32.xlu0 %v671, 126
        %v680 = vpop.permute.xlu0 %679
        %681 = vrot.lane.b32.xlu0 %v672, 126
        %v682 = vpop.permute.xlu0 %681
        %683 = vrot.lane.b32.xlu0 %v673, 126
        %v684 = vpop.permute.xlu0 %683
        %685 = vrot.lane.b32.xlu0 %v674, 126
        %v686 = vpop.permute.xlu0 %685
        %v687 = vsel %vm618, %v680, %v682
        %v688 = vsel %vm618, %v682, %v684
        %v689 = vsel %vm618, %v684, %v686
        %v694 = vadd.f32 %v660, %v687
        %v695 = vadd.f32 %v661, %v688
        %v696 = vadd.f32 %v662, %v689
        %v697 = vadd.f32 %v663, %v686
        %s698 = scalar_lea.vmem %s1, 44
        %v699 = vld [vmem:[%s698] sm:$0xf]
        %701 = vset.pattern.permute.xlu0 0
        %702 = vperm.xlu0 %701, %v699
        %v703 = vpop.permute.xlu0 %702
        %v705 = vmul.f32 %v703, %v437
        %v706 = vmul.f32 %v703, %v441
        %v707 = vmul.f32 %v703, %v445
        %v708 = vmul.f32 %v703, %v449
        %713 = vrot.lane.b32.xlu0 %v705, 126
        %v714 = vpop.permute.xlu0 %713
        %715 = vrot.lane.b32.xlu0 %v706, 126
        %v716 = vpop.permute.xlu0 %715
        %717 = vrot.lane.b32.xlu0 %v707, 126
        %v718 = vpop.permute.xlu0 %717
        %719 = vrot.lane.b32.xlu0 %v708, 126
        %v720 = vpop.permute.xlu0 %719
        %v721 = vsel %vm618, %v714, %v716
        %v722 = vsel %vm618, %v716, %v718
        %v723 = vsel %vm618, %v718, %v720
        %v728 = vadd.f32 %v694, %v721
        %v729 = vadd.f32 %v695, %v722
        %v730 = vadd.f32 %v696, %v723
        %v731 = vadd.f32 %v697, %v720
        %s732 = scalar_lea.vmem %s1, 48
        %v733 = vld [vmem:[%s732] sm:$0xf]
        %735 = vset.pattern.permute.xlu0 0
        %736 = vperm.xlu0 %735, %v733
        %v737 = vpop.permute.xlu0 %736
        %v739 = vmul.f32 %v737, %v284
        %v740 = vmul.f32 %v737, %v288
        %v741 = vmul.f32 %v737, %v292
        %v742 = vmul.f32 %v737, %v296
        %747 = vrot.lane.b32.xlu0 %v739, 110
        %v748 = vpop.permute.xlu0 %747
        %749 = vrot.lane.b32.xlu0 %v740, 110
        %v750 = vpop.permute.xlu0 %749
        %751 = vrot.lane.b32.xlu0 %v741, 110
        %v752 = vpop.permute.xlu0 %751
        %753 = vrot.lane.b32.xlu0 %v742, 110
        %v754 = vpop.permute.xlu0 %753
        %vm755 = vcmask 900096
        %v756 = vsel %vm755, %v748, %v750
        %v757 = vsel %vm755, %v750, %v752
        %v758 = vsel %vm755, %v752, %v754
        %v763 = vadd.f32 %v728, %v756
        %v764 = vadd.f32 %v729, %v757
        %v765 = vadd.f32 %v730, %v758
        %v766 = vadd.f32 %v731, %v754
        %s767 = scalar_lea.vmem %s1, 52
        %v768 = vld [vmem:[%s767] sm:$0xf]
        %770 = vset.pattern.permute.xlu0 0
        %771 = vperm.xlu0 %770, %v768
        %v772 = vpop.permute.xlu0 %771
        %v774 = vmul.f32 %v772, %v335
        %v775 = vmul.f32 %v772, %v339
        %v776 = vmul.f32 %v772, %v343
        %v777 = vmul.f32 %v772, %v347
        %782 = vrot.lane.b32.xlu0 %v774, 110
        %v783 = vpop.permute.xlu0 %782
        %784 = vrot.lane.b32.xlu0 %v775, 110
        %v785 = vpop.permute.xlu0 %784
        %786 = vrot.lane.b32.xlu0 %v776, 110
        %v787 = vpop.permute.xlu0 %786
        %788 = vrot.lane.b32.xlu0 %v777, 110
        %v789 = vpop.permute.xlu0 %788
        %v790 = vsel %vm755, %v783, %v785
        %v791 = vsel %vm755, %v785, %v787
        %v792 = vsel %vm755, %v787, %v789
        %v797 = vadd.f32 %v763, %v790
        %v798 = vadd.f32 %v764, %v791
        %v799 = vadd.f32 %v765, %v792
        %v800 = vadd.f32 %v766, %v789
        %s801 = scalar_lea.vmem %s1, 56
        %v802 = vld [vmem:[%s801] sm:$0xf]
        %804 = vset.pattern.permute.xlu0 0
        %805 = vperm.xlu0 %804, %v802
        %v806 = vpop.permute.xlu0 %805
        %v808 = vmul.f32 %v806, %v386
        %v809 = vmul.f32 %v806, %v390
        %v810 = vmul.f32 %v806, %v394
        %v811 = vmul.f32 %v806, %v398
        %816 = vrot.lane.b32.xlu0 %v808, 110
        %v817 = vpop.permute.xlu0 %816
        %818 = vrot.lane.b32.xlu0 %v809, 110
        %v819 = vpop.permute.xlu0 %818
        %820 = vrot.lane.b32.xlu0 %v810, 110
        %v821 = vpop.permute.xlu0 %820
        %822 = vrot.lane.b32.xlu0 %v811, 110
        %v823 = vpop.permute.xlu0 %822
        %v824 = vsel %vm755, %v817, %v819
        %v825 = vsel %vm755, %v819, %v821
        %v826 = vsel %vm755, %v821, %v823
        %v831 = vadd.f32 %v797, %v824
        %v832 = vadd.f32 %v798, %v825
        %v833 = vadd.f32 %v799, %v826
        %v834 = vadd.f32 %v800, %v823
        %s835 = scalar_lea.vmem %s1, 60
        %v836 = vld [vmem:[%s835] sm:$0xf]
        %838 = vset.pattern.permute.xlu0 0
        %839 = vperm.xlu0 %838, %v836
        %v840 = vpop.permute.xlu0 %839
        %v842 = vmul.f32 %v840, %v437
        %v843 = vmul.f32 %v840, %v441
        %v844 = vmul.f32 %v840, %v445
        %v845 = vmul.f32 %v840, %v449
        %850 = vrot.lane.b32.xlu0 %v842, 110
        %v851 = vpop.permute.xlu0 %850
        %852 = vrot.lane.b32.xlu0 %v843, 110
        %v853 = vpop.permute.xlu0 %852
        %854 = vrot.lane.b32.xlu0 %v844, 110
        %v855 = vpop.permute.xlu0 %854
        %856 = vrot.lane.b32.xlu0 %v845, 110
        %v857 = vpop.permute.xlu0 %856
        %v858 = vsel %vm755, %v851, %v853
        %v859 = vsel %vm755, %v853, %v855
        %v860 = vsel %vm755, %v855, %v857
        %v865 = vadd.f32 %v831, %v858
        %v866 = vadd.f32 %v832, %v859
        %v867 = vadd.f32 %v833, %v860
        %v868 = vadd.f32 %v834, %v857
        %v869 = vld [vmem:[%s249 + $0x4] sm:$0xff]
        %v870 = vld [vmem:[%s249 + $0xc] sm:$0xf]
        %s871 = scalar_lea.vmem %s1, 64
        %v872 = vld [vmem:[%s871] sm:$0xf]
        %874 = vset.pattern.permute.xlu0 0
        %875 = vperm.xlu0 %874, %v872
        %v876 = vpop.permute.xlu0 %875
        %v880 = vlaneseq
        %v881 = vshrl.u32 %v880, 7
        %v882 = vsub.s32 0, %v881
        %v883 = vrot.slane %v869, %v882
        %v884 = vlaneseq
        %v885 = vshrl.u32 %v884, 7
        %v886 = vsub.s32 4, %v885
        %v887 = vrot.slane %v869, %v886
        %v888 = vlaneseq
        %v889 = vshrl.u32 %v888, 7
        %v890 = vsub.s32 0, %v889
        %v891 = vrot.slane %v870, %v890
        %v895 = vlaneseq
        %v896 = vshrl.u32 %v895, 7
        %v897 = vsub.s32 0, %v896
        %v898 = vrot.slane %v883, %v897
        %v899 = vlaneseq
        %v900 = vshrl.u32 %v899, 7
        %v901 = vsub.s32 0, %v900
        %v902 = vrot.slane %v887, %v901
        %v903 = vlaneseq
        %v904 = vshrl.u32 %v903, 7
        %v905 = vsub.s32 0, %v904
        %v906 = vrot.slane %v891, %v905
        %v907 = vmul.f32 %v876, %v898
        %v908 = vmul.f32 %v876, %v902
        %v909 = vmul.f32 %v876, %v906
        %913 = vrot.lane.b32.xlu0 %v907, 109
        %v914 = vpop.permute.xlu0 %913
        %915 = vrot.lane.b32.xlu0 %v908, 109
        %v916 = vpop.permute.xlu0 %915
        %917 = vrot.lane.b32.xlu0 %v909, 109
        %v918 = vpop.permute.xlu0 %917
        %vm919 = vcmask 891904
        %v920 = vsel %vm919, %v914, %v916
        %v921 = vsel %vm919, %v916, %v918
        %v926 = vadd.f32 %v865, %v914
        %v927 = vadd.f32 %v866, %v920
        %v928 = vadd.f32 %v867, %v921
        %v929 = vadd.f32 %v868, %v918
        %s930 = scalar_lea.vmem %s1, 68
        %v931 = vld [vmem:[%s930] sm:$0xf]
        %933 = vset.pattern.permute.xlu0 0
        %934 = vperm.xlu0 %933, %v931
        %v935 = vpop.permute.xlu0 %934
        %v937 = vlaneseq
        %v938 = vshrl.u32 %v937, 7
        %v939 = vsub.s32 1, %v938
        %v940 = vrot.slane %v869, %v939
        %v941 = vlaneseq
        %v942 = vshrl.u32 %v941, 7
        %v943 = vsub.s32 5, %v942
        %v944 = vrot.slane %v869, %v943
        %v945 = vlaneseq
        %v946 = vshrl.u32 %v945, 7
        %v947 = vsub.s32 1, %v946
        %v948 = vrot.slane %v870, %v947
        %v952 = vlaneseq
        %v953 = vshrl.u32 %v952, 7
        %v954 = vsub.s32 1, %v953
        %v955 = vrot.slane %v940, %v954
        %v956 = vlaneseq
        %v957 = vshrl.u32 %v956, 7
        %v958 = vsub.s32 1, %v957
        %v959 = vrot.slane %v944, %v958
        %v960 = vlaneseq
        %v961 = vshrl.u32 %v960, 7
        %v962 = vsub.s32 1, %v961
        %v963 = vrot.slane %v948, %v962
        %v964 = vmul.f32 %v935, %v955
        %v965 = vmul.f32 %v935, %v959
        %v966 = vmul.f32 %v935, %v963
        %970 = vrot.lane.b32.xlu0 %v964, 109
        %v971 = vpop.permute.xlu0 %970
        %972 = vrot.lane.b32.xlu0 %v965, 109
        %v973 = vpop.permute.xlu0 %972
        %974 = vrot.lane.b32.xlu0 %v966, 109
        %v975 = vpop.permute.xlu0 %974
        %v976 = vsel %vm919, %v971, %v973
        %v977 = vsel %vm919, %v973, %v975
        %v982 = vadd.f32 %v926, %v971
        %v983 = vadd.f32 %v927, %v976
        %v984 = vadd.f32 %v928, %v977
        %v985 = vadd.f32 %v929, %v975
        %s986 = scalar_lea.vmem %s1, 72
        %v987 = vld [vmem:[%s986] sm:$0xf]
        %989 = vset.pattern.permute.xlu0 0
        %990 = vperm.xlu0 %989, %v987
        %v991 = vpop.permute.xlu0 %990
        %v993 = vlaneseq
        %v994 = vshrl.u32 %v993, 7
        %v995 = vsub.s32 2, %v994
        %v996 = vrot.slane %v869, %v995
        %v997 = vlaneseq
        %v998 = vshrl.u32 %v997, 7
        %v999 = vsub.s32 6, %v998
        %v1000 = vrot.slane %v869, %v999
        %v1001 = vlaneseq
        %v1002 = vshrl.u32 %v1001, 7
        %v1003 = vsub.s32 2, %v1002
        %v1004 = vrot.slane %v870, %v1003
        %v1008 = vlaneseq
        %v1009 = vshrl.u32 %v1008, 7
        %v1010 = vsub.s32 2, %v1009
        %v1011 = vrot.slane %v996, %v1010
        %v1012 = vlaneseq
        %v1013 = vshrl.u32 %v1012, 7
        %v1014 = vsub.s32 2, %v1013
        %v1015 = vrot.slane %v1000, %v1014
        %v1016 = vlaneseq
        %v1017 = vshrl.u32 %v1016, 7
        %v1018 = vsub.s32 2, %v1017
        %v1019 = vrot.slane %v1004, %v1018
        %v1020 = vmul.f32 %v991, %v1011
        %v1021 = vmul.f32 %v991, %v1015
        %v1022 = vmul.f32 %v991, %v1019
        %1026 = vrot.lane.b32.xlu0 %v1020, 109
        %v1027 = vpop.permute.xlu0 %1026
        %1028 = vrot.lane.b32.xlu0 %v1021, 109
        %v1029 = vpop.permute.xlu0 %1028
        %1030 = vrot.lane.b32.xlu0 %v1022, 109
        %v1031 = vpop.permute.xlu0 %1030
        %v1032 = vsel %vm919, %v1027, %v1029
        %v1033 = vsel %vm919, %v1029, %v1031
        %v1038 = vadd.f32 %v982, %v1027
        %v1039 = vadd.f32 %v983, %v1032
        %v1040 = vadd.f32 %v984, %v1033
        %v1041 = vadd.f32 %v985, %v1031
        %s1042 = scalar_lea.vmem %s1, 76
        %v1043 = vld [vmem:[%s1042] sm:$0xf]
        %1045 = vset.pattern.permute.xlu0 0
        %1046 = vperm.xlu0 %1045, %v1043
        %v1047 = vpop.permute.xlu0 %1046
        %v1049 = vlaneseq
        %v1050 = vshrl.u32 %v1049, 7
        %v1051 = vsub.s32 3, %v1050
        %v1052 = vrot.slane %v869, %v1051
        %v1053 = vlaneseq
        %v1054 = vshrl.u32 %v1053, 7
        %v1055 = vsub.s32 7, %v1054
        %v1056 = vrot.slane %v869, %v1055
        %v1057 = vlaneseq
        %v1058 = vshrl.u32 %v1057, 7
        %v1059 = vsub.s32 3, %v1058
        %v1060 = vrot.slane %v870, %v1059
        %v1064 = vlaneseq
        %v1065 = vshrl.u32 %v1064, 7
        %v1066 = vsub.s32 3, %v1065
        %v1067 = vrot.slane %v1052, %v1066
        %v1068 = vlaneseq
        %v1069 = vshrl.u32 %v1068, 7
        %v1070 = vsub.s32 3, %v1069
        %v1071 = vrot.slane %v1056, %v1070
        %v1072 = vlaneseq
        %v1073 = vshrl.u32 %v1072, 7
        %v1074 = vsub.s32 3, %v1073
        %v1075 = vrot.slane %v1060, %v1074
        %v1076 = vmul.f32 %v1047, %v1067
        %v1077 = vmul.f32 %v1047, %v1071
        %v1078 = vmul.f32 %v1047, %v1075
        %1082 = vrot.lane.b32.xlu0 %v1076, 109
        %v1083 = vpop.permute.xlu0 %1082
        %1084 = vrot.lane.b32.xlu0 %v1077, 109
        %v1085 = vpop.permute.xlu0 %1084
        %1086 = vrot.lane.b32.xlu0 %v1078, 109
        %v1087 = vpop.permute.xlu0 %1086
        %v1088 = vsel %vm919, %v1083, %v1085
        %v1089 = vsel %vm919, %v1085, %v1087
        %v1094 = vadd.f32 %v1038, %v1083
        %v1095 = vadd.f32 %v1039, %v1088
        %v1096 = vadd.f32 %v1040, %v1089
        %v1097 = vadd.f32 %v1041, %v1087
        %v1098 = vld [vmem:[%s249 + $0x4] sm:$0xff]
        %v1099 = vld [vmem:[%s249 + $0xc] sm:$0xff]
        %s1100 = scalar_lea.vmem %s1, 80
        %v1101 = vld [vmem:[%s1100] sm:$0xf]
        %1103 = vset.pattern.permute.xlu0 0
        %1104 = vperm.xlu0 %1103, %v1101
        %v1105 = vpop.permute.xlu0 %1104
        %v1109 = vlaneseq
        %v1110 = vshrl.u32 %v1109, 7
        %v1111 = vsub.s32 0, %v1110
        %v1112 = vrot.slane %v1098, %v1111
        %v1113 = vlaneseq
        %v1114 = vshrl.u32 %v1113, 7
        %v1115 = vsub.s32 4, %v1114
        %v1116 = vrot.slane %v1098, %v1115
        %v1117 = vlaneseq
        %v1118 = vshrl.u32 %v1117, 7
        %v1119 = vsub.s32 0, %v1118
        %v1120 = vrot.slane %v1099, %v1119
        %v1121 = vlaneseq
        %v1122 = vshrl.u32 %v1121, 7
        %v1123 = vsub.s32 4, %v1122
        %v1124 = vrot.slane %v1099, %v1123
        %v1129 = vlaneseq
        %v1130 = vshrl.u32 %v1129, 7
        %v1131 = vsub.s32 0, %v1130
        %v1132 = vrot.slane %v1112, %v1131
        %v1133 = vlaneseq
        %v1134 = vshrl.u32 %v1133, 7
        %v1135 = vsub.s32 0, %v1134
        %v1136 = vrot.slane %v1116, %v1135
        %v1137 = vlaneseq
        %v1138 = vshrl.u32 %v1137, 7
        %v1139 = vsub.s32 0, %v1138
        %v1140 = vrot.slane %v1120, %v1139
        %v1141 = vlaneseq
        %v1142 = vshrl.u32 %v1141, 7
        %v1143 = vsub.s32 0, %v1142
        %v1144 = vrot.slane %v1124, %v1143
        %v1145 = vmul.f32 %v1105, %v1132
        %v1146 = vmul.f32 %v1105, %v1136
        %v1147 = vmul.f32 %v1105, %v1140
        %v1148 = vmul.f32 %v1105, %v1144
        %1153 = vrot.lane.b32.xlu0 %v1145, 108
        %v1154 = vpop.permute.xlu0 %1153
        %1155 = vrot.lane.b32.xlu0 %v1146, 108
        %v1156 = vpop.permute.xlu0 %1155
        %1157 = vrot.lane.b32.xlu0 %v1147, 108
        %v1158 = vpop.permute.xlu0 %1157
        %1159 = vrot.lane.b32.xlu0 %v1148, 108
        %v1160 = vpop.permute.xlu0 %1159
        %vm1161 = vcmask 883712
        %v1162 = vsel %vm1161, %v1154, %v1156
        %v1163 = vsel %vm1161, %v1156, %v1158
        %v1164 = vsel %vm1161, %v1158, %v1160
        %v1169 = vadd.f32 %v1094, %v1154
        %v1170 = vadd.f32 %v1095, %v1162
        %v1171 = vadd.f32 %v1096, %v1163
        %v1172 = vadd.f32 %v1097, %v1164
        %s1173 = scalar_lea.vmem %s1, 84
        %v1174 = vld [vmem:[%s1173] sm:$0xf]
        %1176 = vset.pattern.permute.xlu0 0
        %1177 = vperm.xlu0 %1176, %v1174
        %v1178 = vpop.permute.xlu0 %1177
        %v1180 = vlaneseq
        %v1181 = vshrl.u32 %v1180, 7
        %v1182 = vsub.s32 1, %v1181
        %v1183 = vrot.slane %v1098, %v1182
        %v1184 = vlaneseq
        %v1185 = vshrl.u32 %v1184, 7
        %v1186 = vsub.s32 5, %v1185
        %v1187 = vrot.slane %v1098, %v1186
        %v1188 = vlaneseq
        %v1189 = vshrl.u32 %v1188, 7
        %v1190 = vsub.s32 1, %v1189
        %v1191 = vrot.slane %v1099, %v1190
        %v1192 = vlaneseq
        %v1193 = vshrl.u32 %v1192, 7
        %v1194 = vsub.s32 5, %v1193
        %v1195 = vrot.slane %v1099, %v1194
        %v1200 = vlaneseq
        %v1201 = vshrl.u32 %v1200, 7
        %v1202 = vsub.s32 1, %v1201
        %v1203 = vrot.slane %v1183, %v1202
        %v1204 = vlaneseq
        %v1205 = vshrl.u32 %v1204, 7
        %v1206 = vsub.s32 1, %v1205
        %v1207 = vrot.slane %v1187, %v1206
        %v1208 = vlaneseq
        %v1209 = vshrl.u32 %v1208, 7
        %v1210 = vsub.s32 1, %v1209
        %v1211 = vrot.slane %v1191, %v1210
        %v1212 = vlaneseq
        %v1213 = vshrl.u32 %v1212, 7
        %v1214 = vsub.s32 1, %v1213
        %v1215 = vrot.slane %v1195, %v1214
        %v1216 = vmul.f32 %v1178, %v1203
        %v1217 = vmul.f32 %v1178, %v1207
        %v1218 = vmul.f32 %v1178, %v1211
        %v1219 = vmul.f32 %v1178, %v1215
        %1224 = vrot.lane.b32.xlu0 %v1216, 108
        %v1225 = vpop.permute.xlu0 %1224
        %1226 = vrot.lane.b32.xlu0 %v1217, 108
        %v1227 = vpop.permute.xlu0 %1226
        %1228 = vrot.lane.b32.xlu0 %v1218, 108
        %v1229 = vpop.permute.xlu0 %1228
        %1230 = vrot.lane.b32.xlu0 %v1219, 108
        %v1231 = vpop.permute.xlu0 %1230
        %v1232 = vsel %vm1161, %v1225, %v1227
        %v1233 = vsel %vm1161, %v1227, %v1229
        %v1234 = vsel %vm1161, %v1229, %v1231
        %v1239 = vadd.f32 %v1169, %v1225
        %v1240 = vadd.f32 %v1170, %v1232
        %v1241 = vadd.f32 %v1171, %v1233
        %v1242 = vadd.f32 %v1172, %v1234
        %s1243 = scalar_lea.vmem %s1, 88
        %v1244 = vld [vmem:[%s1243] sm:$0xf]
        %1246 = vset.pattern.permute.xlu0 0
        %1247 = vperm.xlu0 %1246, %v1244
        %v1248 = vpop.permute.xlu0 %1247
        %v1250 = vlaneseq
        %v1251 = vshrl.u32 %v1250, 7
        %v1252 = vsub.s32 2, %v1251
        %v1253 = vrot.slane %v1098, %v1252
        %v1254 = vlaneseq
        %v1255 = vshrl.u32 %v1254, 7
        %v1256 = vsub.s32 6, %v1255
        %v1257 = vrot.slane %v1098, %v1256
        %v1258 = vlaneseq
        %v1259 = vshrl.u32 %v1258, 7
        %v1260 = vsub.s32 2, %v1259
        %v1261 = vrot.slane %v1099, %v1260
        %v1262 = vlaneseq
        %v1263 = vshrl.u32 %v1262, 7
        %v1264 = vsub.s32 6, %v1263
        %v1265 = vrot.slane %v1099, %v1264
        %v1270 = vlaneseq
        %v1271 = vshrl.u32 %v1270, 7
        %v1272 = vsub.s32 2, %v1271
        %v1273 = vrot.slane %v1253, %v1272
        %v1274 = vlaneseq
        %v1275 = vshrl.u32 %v1274, 7
        %v1276 = vsub.s32 2, %v1275
        %v1277 = vrot.slane %v1257, %v1276
        %v1278 = vlaneseq
        %v1279 = vshrl.u32 %v1278, 7
        %v1280 = vsub.s32 2, %v1279
        %v1281 = vrot.slane %v1261, %v1280
        %v1282 = vlaneseq
        %v1283 = vshrl.u32 %v1282, 7
        %v1284 = vsub.s32 2, %v1283
        %v1285 = vrot.slane %v1265, %v1284
        %v1286 = vmul.f32 %v1248, %v1273
        %v1287 = vmul.f32 %v1248, %v1277
        %v1288 = vmul.f32 %v1248, %v1281
        %v1289 = vmul.f32 %v1248, %v1285
        %1294 = vrot.lane.b32.xlu0 %v1286, 108
        %v1295 = vpop.permute.xlu0 %1294
        %1296 = vrot.lane.b32.xlu0 %v1287, 108
        %v1297 = vpop.permute.xlu0 %1296
        %1298 = vrot.lane.b32.xlu0 %v1288, 108
        %v1299 = vpop.permute.xlu0 %1298
        %1300 = vrot.lane.b32.xlu0 %v1289, 108
        %v1301 = vpop.permute.xlu0 %1300
        %v1302 = vsel %vm1161, %v1295, %v1297
        %v1303 = vsel %vm1161, %v1297, %v1299
        %v1304 = vsel %vm1161, %v1299, %v1301
        %v1309 = vadd.f32 %v1239, %v1295
        %v1310 = vadd.f32 %v1240, %v1302
        %v1311 = vadd.f32 %v1241, %v1303
        %v1312 = vadd.f32 %v1242, %v1304
        %s1313 = scalar_lea.vmem %s1, 92
        %v1314 = vld [vmem:[%s1313] sm:$0xf]
        %1316 = vset.pattern.permute.xlu0 0
        %1317 = vperm.xlu0 %1316, %v1314
        %v1318 = vpop.permute.xlu0 %1317
        %v1320 = vlaneseq
        %v1321 = vshrl.u32 %v1320, 7
        %v1322 = vsub.s32 3, %v1321
        %v1323 = vrot.slane %v1098, %v1322
        %v1324 = vlaneseq
        %v1325 = vshrl.u32 %v1324, 7
        %v1326 = vsub.s32 7, %v1325
        %v1327 = vrot.slane %v1098, %v1326
        %v1328 = vlaneseq
        %v1329 = vshrl.u32 %v1328, 7
        %v1330 = vsub.s32 3, %v1329
        %v1331 = vrot.slane %v1099, %v1330
        %v1332 = vlaneseq
        %v1333 = vshrl.u32 %v1332, 7
        %v1334 = vsub.s32 7, %v1333
        %v1335 = vrot.slane %v1099, %v1334
        %v1340 = vlaneseq
        %v1341 = vshrl.u32 %v1340, 7
        %v1342 = vsub.s32 3, %v1341
        %v1343 = vrot.slane %v1323, %v1342
        %v1344 = vlaneseq
        %v1345 = vshrl.u32 %v1344, 7
        %v1346 = vsub.s32 3, %v1345
        %v1347 = vrot.slane %v1327, %v1346
        %v1348 = vlaneseq
        %v1349 = vshrl.u32 %v1348, 7
        %v1350 = vsub.s32 3, %v1349
        %v1351 = vrot.slane %v1331, %v1350
        %v1352 = vlaneseq
        %v1353 = vshrl.u32 %v1352, 7
        %v1354 = vsub.s32 3, %v1353
        %v1355 = vrot.slane %v1335, %v1354
        %v1356 = vmul.f32 %v1318, %v1343
        %v1357 = vmul.f32 %v1318, %v1347
        %v1358 = vmul.f32 %v1318, %v1351
        %v1359 = vmul.f32 %v1318, %v1355
        %1364 = vrot.lane.b32.xlu0 %v1356, 108
        %v1365 = vpop.permute.xlu0 %1364
        %1366 = vrot.lane.b32.xlu0 %v1357, 108
        %v1367 = vpop.permute.xlu0 %1366
        %1368 = vrot.lane.b32.xlu0 %v1358, 108
        %v1369 = vpop.permute.xlu0 %1368
        %1370 = vrot.lane.b32.xlu0 %v1359, 108
        %v1371 = vpop.permute.xlu0 %1370
        %v1372 = vsel %vm1161, %v1365, %v1367
        %v1373 = vsel %vm1161, %v1367, %v1369
        %v1374 = vsel %vm1161, %v1369, %v1371
        %v1379 = vadd.f32 %v1309, %v1365
        %v1380 = vadd.f32 %v1310, %v1372
        %v1381 = vadd.f32 %v1311, %v1373
        %v1382 = vadd.f32 %v1312, %v1374
        %s1383 = scalar_lea.vmem %s1, 96
        %v1384 = vld [vmem:[%s1383] sm:$0xf]
        %1386 = vset.pattern.permute.xlu0 0
        %1387 = vperm.xlu0 %1386, %v1384
        %v1388 = vpop.permute.xlu0 %1387
        %v1390 = vmul.f32 %v1388, %v1132
        %v1391 = vmul.f32 %v1388, %v1136
        %v1392 = vmul.f32 %v1388, %v1140
        %v1393 = vmul.f32 %v1388, %v1144
        %1398 = vrot.lane.b32.xlu0 %v1390, 92
        %v1399 = vpop.permute.xlu0 %1398
        %1400 = vrot.lane.b32.xlu0 %v1391, 92
        %v1401 = vpop.permute.xlu0 %1400
        %1402 = vrot.lane.b32.xlu0 %v1392, 92
        %v1403 = vpop.permute.xlu0 %1402
        %1404 = vrot.lane.b32.xlu0 %v1393, 92
        %v1405 = vpop.permute.xlu0 %1404
        %vm1406 = vcmask 752640
        %v1407 = vsel %vm1406, %v1399, %v1401
        %v1408 = vsel %vm1406, %v1401, %v1403
        %v1409 = vsel %vm1406, %v1403, %v1405
        %v1414 = vadd.f32 %v1379, %v1399
        %v1415 = vadd.f32 %v1380, %v1407
        %v1416 = vadd.f32 %v1381, %v1408
        %v1417 = vadd.f32 %v1382, %v1409
        %s1418 = scalar_lea.vmem %s1, 100
        %v1419 = vld [vmem:[%s1418] sm:$0xf]
        %1421 = vset.pattern.permute.xlu0 0
        %1422 = vperm.xlu0 %1421, %v1419
        %v1423 = vpop.permute.xlu0 %1422
        %v1425 = vmul.f32 %v1423, %v1203
        %v1426 = vmul.f32 %v1423, %v1207
        %v1427 = vmul.f32 %v1423, %v1211
        %v1428 = vmul.f32 %v1423, %v1215
        %1433 = vrot.lane.b32.xlu0 %v1425, 92
        %v1434 = vpop.permute.xlu0 %1433
        %1435 = vrot.lane.b32.xlu0 %v1426, 92
        %v1436 = vpop.permute.xlu0 %1435
        %1437 = vrot.lane.b32.xlu0 %v1427, 92
        %v1438 = vpop.permute.xlu0 %1437
        %1439 = vrot.lane.b32.xlu0 %v1428, 92
        %v1440 = vpop.permute.xlu0 %1439
        %v1441 = vsel %vm1406, %v1434, %v1436
        %v1442 = vsel %vm1406, %v1436, %v1438
        %v1443 = vsel %vm1406, %v1438, %v1440
        %v1448 = vadd.f32 %v1414, %v1434
        %v1449 = vadd.f32 %v1415, %v1441
        %v1450 = vadd.f32 %v1416, %v1442
        %v1451 = vadd.f32 %v1417, %v1443
        %s1452 = scalar_lea.vmem %s1, 104
        %v1453 = vld [vmem:[%s1452] sm:$0xf]
        %1455 = vset.pattern.permute.xlu0 0
        %1456 = vperm.xlu0 %1455, %v1453
        %v1457 = vpop.permute.xlu0 %1456
        %v1459 = vmul.f32 %v1457, %v1273
        %v1460 = vmul.f32 %v1457, %v1277
        %v1461 = vmul.f32 %v1457, %v1281
        %v1462 = vmul.f32 %v1457, %v1285
        %1467 = vrot.lane.b32.xlu0 %v1459, 92
        %v1468 = vpop.permute.xlu0 %1467
        %1469 = vrot.lane.b32.xlu0 %v1460, 92
        %v1470 = vpop.permute.xlu0 %1469
        %1471 = vrot.lane.b32.xlu0 %v1461, 92
        %v1472 = vpop.permute.xlu0 %1471
        %1473 = vrot.lane.b32.xlu0 %v1462, 92
        %v1474 = vpop.permute.xlu0 %1473
        %v1475 = vsel %vm1406, %v1468, %v1470
        %v1476 = vsel %vm1406, %v1470, %v1472
        %v1477 = vsel %vm1406, %v1472, %v1474
        %v1482 = vadd.f32 %v1448, %v1468
        %v1483 = vadd.f32 %v1449, %v1475
        %v1484 = vadd.f32 %v1450, %v1476
        %v1485 = vadd.f32 %v1451, %v1477
        %s1486 = scalar_lea.vmem %s1, 108
        %v1487 = vld [vmem:[%s1486] sm:$0xf]
        %1489 = vset.pattern.permute.xlu0 0
        %1490 = vperm.xlu0 %1489, %v1487
        %v1491 = vpop.permute.xlu0 %1490
        %v1493 = vmul.f32 %v1491, %v1343
        %v1494 = vmul.f32 %v1491, %v1347
        %v1495 = vmul.f32 %v1491, %v1351
        %v1496 = vmul.f32 %v1491, %v1355
        %1501 = vrot.lane.b32.xlu0 %v1493, 92
        %v1502 = vpop.permute.xlu0 %1501
        %1503 = vrot.lane.b32.xlu0 %v1494, 92
        %v1504 = vpop.permute.xlu0 %1503
        %1505 = vrot.lane.b32.xlu0 %v1495, 92
        %v1506 = vpop.permute.xlu0 %1505
        %1507 = vrot.lane.b32.xlu0 %v1496, 92
        %v1508 = vpop.permute.xlu0 %1507
        %v1509 = vsel %vm1406, %v1502, %v1504
        %v1510 = vsel %vm1406, %v1504, %v1506
        %v1511 = vsel %vm1406, %v1506, %v1508
        %v1516 = vadd.f32 %v1482, %v1502
        %v1517 = vadd.f32 %v1483, %v1509
        %v1518 = vadd.f32 %v1484, %v1510
        %v1519 = vadd.f32 %v1485, %v1511
        %s1520 = scalar_lea.vmem %s1, 112
        %v1521 = vld [vmem:[%s1520] sm:$0xf]
        %1523 = vset.pattern.permute.xlu0 0
        %1524 = vperm.xlu0 %1523, %v1521
        %v1525 = vpop.permute.xlu0 %1524
        %v1527 = vmul.f32 %v1525, %v1132
        %v1528 = vmul.f32 %v1525, %v1136
        %v1529 = vmul.f32 %v1525, %v1140
        %v1530 = vmul.f32 %v1525, %v1144
        %1535 = vrot.lane.b32.xlu0 %v1527, 91
        %v1536 = vpop.permute.xlu0 %1535
        %1537 = vrot.lane.b32.xlu0 %v1528, 91
        %v1538 = vpop.permute.xlu0 %1537
        %1539 = vrot.lane.b32.xlu0 %v1529, 91
        %v1540 = vpop.permute.xlu0 %1539
        %1541 = vrot.lane.b32.xlu0 %v1530, 91
        %v1542 = vpop.permute.xlu0 %1541
        %vm1543 = vcmask 744448
        %v1544 = vsel %vm1543, %v1536, %v1538
        %v1545 = vsel %vm1543, %v1538, %v1540
        %v1546 = vsel %vm1543, %v1540, %v1542
        %v1551 = vadd.f32 %v1516, %v1536
        %v1552 = vadd.f32 %v1517, %v1544
        %v1553 = vadd.f32 %v1518, %v1545
        %v1554 = vadd.f32 %v1519, %v1546
        %s1555 = scalar_lea.vmem %s1, 116
        %v1556 = vld [vmem:[%s1555] sm:$0xf]
        %1558 = vset.pattern.permute.xlu0 0
        %1559 = vperm.xlu0 %1558, %v1556
        %v1560 = vpop.permute.xlu0 %1559
        %v1562 = vmul.f32 %v1560, %v1203
        %v1563 = vmul.f32 %v1560, %v1207
        %v1564 = vmul.f32 %v1560, %v1211
        %v1565 = vmul.f32 %v1560, %v1215
        %1570 = vrot.lane.b32.xlu0 %v1562, 91
        %v1571 = vpop.permute.xlu0 %1570
        %1572 = vrot.lane.b32.xlu0 %v1563, 91
        %v1573 = vpop.permute.xlu0 %1572
        %1574 = vrot.lane.b32.xlu0 %v1564, 91
        %v1575 = vpop.permute.xlu0 %1574
        %1576 = vrot.lane.b32.xlu0 %v1565, 91
        %v1577 = vpop.permute.xlu0 %1576
        %v1578 = vsel %vm1543, %v1571, %v1573
        %v1579 = vsel %vm1543, %v1573, %v1575
        %v1580 = vsel %vm1543, %v1575, %v1577
        %v1585 = vadd.f32 %v1551, %v1571
        %v1586 = vadd.f32 %v1552, %v1578
        %v1587 = vadd.f32 %v1553, %v1579
        %v1588 = vadd.f32 %v1554, %v1580
        %s1589 = scalar_lea.vmem %s1, 120
        %v1590 = vld [vmem:[%s1589] sm:$0xf]
        %1592 = vset.pattern.permute.xlu0 0
        %1593 = vperm.xlu0 %1592, %v1590
        %v1594 = vpop.permute.xlu0 %1593
        %v1596 = vmul.f32 %v1594, %v1273
        %v1597 = vmul.f32 %v1594, %v1277
        %v1598 = vmul.f32 %v1594, %v1281
        %v1599 = vmul.f32 %v1594, %v1285
        %1604 = vrot.lane.b32.xlu0 %v1596, 91
        %v1605 = vpop.permute.xlu0 %1604
        %1606 = vrot.lane.b32.xlu0 %v1597, 91
        %v1607 = vpop.permute.xlu0 %1606
        %1608 = vrot.lane.b32.xlu0 %v1598, 91
        %v1609 = vpop.permute.xlu0 %1608
        %1610 = vrot.lane.b32.xlu0 %v1599, 91
        %v1611 = vpop.permute.xlu0 %1610
        %v1612 = vsel %vm1543, %v1605, %v1607
        %v1613 = vsel %vm1543, %v1607, %v1609
        %v1614 = vsel %vm1543, %v1609, %v1611
        %v1619 = vadd.f32 %v1585, %v1605
        %v1620 = vadd.f32 %v1586, %v1612
        %v1621 = vadd.f32 %v1587, %v1613
        %v1622 = vadd.f32 %v1588, %v1614
        %s1623 = scalar_lea.vmem %s1, 124
        %v1624 = vld [vmem:[%s1623] sm:$0xf]
        %1626 = vset.pattern.permute.xlu0 0
        %1627 = vperm.xlu0 %1626, %v1624
        %v1628 = vpop.permute.xlu0 %1627
        %v1630 = vmul.f32 %v1628, %v1343
        %v1631 = vmul.f32 %v1628, %v1347
        %v1632 = vmul.f32 %v1628, %v1351
        %v1633 = vmul.f32 %v1628, %v1355
        %1638 = vrot.lane.b32.xlu0 %v1630, 91
        %v1639 = vpop.permute.xlu0 %1638
        %1640 = vrot.lane.b32.xlu0 %v1631, 91
        %v1641 = vpop.permute.xlu0 %1640
        %1642 = vrot.lane.b32.xlu0 %v1632, 91
        %v1643 = vpop.permute.xlu0 %1642
        %1644 = vrot.lane.b32.xlu0 %v1633, 91
        %v1645 = vpop.permute.xlu0 %1644
        %v1646 = vsel %vm1543, %v1639, %v1641
        %v1647 = vsel %vm1543, %v1641, %v1643
        %v1648 = vsel %vm1543, %v1643, %v1645
        %v1653 = vadd.f32 %v1619, %v1639
        %v1654 = vadd.f32 %v1620, %v1646
        %v1655 = vadd.f32 %v1621, %v1647
        %v1656 = vadd.f32 %v1622, %v1648
        %s1657 = scalar_lea.vmem %s1, 128
        %v1658 = vld [vmem:[%s1657] sm:$0xf]
        %1660 = vset.pattern.permute.xlu0 0
        %1661 = vperm.xlu0 %1660, %v1658
        %v1662 = vpop.permute.xlu0 %1661
        %v1664 = vmul.f32 %v1662, %v1132
        %v1665 = vmul.f32 %v1662, %v1136
        %v1666 = vmul.f32 %v1662, %v1140
        %v1667 = vmul.f32 %v1662, %v1144
        %1672 = vrot.lane.b32.xlu0 %v1664, 90
        %v1673 = vpop.permute.xlu0 %1672
        %1674 = vrot.lane.b32.xlu0 %v1665, 90
        %v1675 = vpop.permute.xlu0 %1674
        %1676 = vrot.lane.b32.xlu0 %v1666, 90
        %v1677 = vpop.permute.xlu0 %1676
        %1678 = vrot.lane.b32.xlu0 %v1667, 90
        %v1679 = vpop.permute.xlu0 %1678
        %vm1680 = vcmask 736256
        %v1681 = vsel %vm1680, %v1673, %v1675
        %v1682 = vsel %vm1680, %v1675, %v1677
        %v1683 = vsel %vm1680, %v1677, %v1679
        %v1688 = vadd.f32 %v1653, %v1673
        %v1689 = vadd.f32 %v1654, %v1681
        %v1690 = vadd.f32 %v1655, %v1682
        %v1691 = vadd.f32 %v1656, %v1683
        %s1692 = scalar_lea.vmem %s1, 132
        %v1693 = vld [vmem:[%s1692] sm:$0xf]
        %1695 = vset.pattern.permute.xlu0 0
        %1696 = vperm.xlu0 %1695, %v1693
        %v1697 = vpop.permute.xlu0 %1696
        %v1699 = vmul.f32 %v1697, %v1203
        %v1700 = vmul.f32 %v1697, %v1207
        %v1701 = vmul.f32 %v1697, %v1211
        %v1702 = vmul.f32 %v1697, %v1215
        %1707 = vrot.lane.b32.xlu0 %v1699, 90
        %v1708 = vpop.permute.xlu0 %1707
        %1709 = vrot.lane.b32.xlu0 %v1700, 90
        %v1710 = vpop.permute.xlu0 %1709
        %1711 = vrot.lane.b32.xlu0 %v1701, 90
        %v1712 = vpop.permute.xlu0 %1711
        %1713 = vrot.lane.b32.xlu0 %v1702, 90
        %v1714 = vpop.permute.xlu0 %1713
        %v1715 = vsel %vm1680, %v1708, %v1710
        %v1716 = vsel %vm1680, %v1710, %v1712
        %v1717 = vsel %vm1680, %v1712, %v1714
        %v1722 = vadd.f32 %v1688, %v1708
        %v1723 = vadd.f32 %v1689, %v1715
        %v1724 = vadd.f32 %v1690, %v1716
        %v1725 = vadd.f32 %v1691, %v1717
        %s1726 = scalar_lea.vmem %s1, 136
        %v1727 = vld [vmem:[%s1726] sm:$0xf]
        %1729 = vset.pattern.permute.xlu0 0
        %1730 = vperm.xlu0 %1729, %v1727
        %v1731 = vpop.permute.xlu0 %1730
        %v1733 = vmul.f32 %v1731, %v1273
        %v1734 = vmul.f32 %v1731, %v1277
        %v1735 = vmul.f32 %v1731, %v1281
        %v1736 = vmul.f32 %v1731, %v1285
        %1741 = vrot.lane.b32.xlu0 %v1733, 90
        %v1742 = vpop.permute.xlu0 %1741
        %1743 = vrot.lane.b32.xlu0 %v1734, 90
        %v1744 = vpop.permute.xlu0 %1743
        %1745 = vrot.lane.b32.xlu0 %v1735, 90
        %v1746 = vpop.permute.xlu0 %1745
        %1747 = vrot.lane.b32.xlu0 %v1736, 90
        %v1748 = vpop.permute.xlu0 %1747
        %v1749 = vsel %vm1680, %v1742, %v1744
        %v1750 = vsel %vm1680, %v1744, %v1746
        %v1751 = vsel %vm1680, %v1746, %v1748
        %v1756 = vadd.f32 %v1722, %v1742
        %v1757 = vadd.f32 %v1723, %v1749
        %v1758 = vadd.f32 %v1724, %v1750
        %v1759 = vadd.f32 %v1725, %v1751
        %s1760 = scalar_lea.vmem %s1, 140
        %v1761 = vld [vmem:[%s1760] sm:$0xf]
        %1763 = vset.pattern.permute.xlu0 0
        %1764 = vperm.xlu0 %1763, %v1761
        %v1765 = vpop.permute.xlu0 %1764
        %v1767 = vmul.f32 %v1765, %v1343
        %v1768 = vmul.f32 %v1765, %v1347
        %v1769 = vmul.f32 %v1765, %v1351
        %v1770 = vmul.f32 %v1765, %v1355
        %1775 = vrot.lane.b32.xlu0 %v1767, 90
        %v1776 = vpop.permute.xlu0 %1775
        %1777 = vrot.lane.b32.xlu0 %v1768, 90
        %v1778 = vpop.permute.xlu0 %1777
        %1779 = vrot.lane.b32.xlu0 %v1769, 90
        %v1780 = vpop.permute.xlu0 %1779
        %1781 = vrot.lane.b32.xlu0 %v1770, 90
        %v1782 = vpop.permute.xlu0 %1781
        %v1783 = vsel %vm1680, %v1776, %v1778
        %v1784 = vsel %vm1680, %v1778, %v1780
        %v1785 = vsel %vm1680, %v1780, %v1782
        %v1790 = vadd.f32 %v1756, %v1776
        %v1791 = vadd.f32 %v1757, %v1783
        %v1792 = vadd.f32 %v1758, %v1784
        %v1793 = vadd.f32 %v1759, %v1785
        %v1794 = vld [vmem:[%s2] sm:$0xf]
        %1796 = vset.pattern.permute.xlu0 0
        %1797 = vperm.xlu0 %1796, %v1794
        %v1798 = vpop.permute.xlu0 %1797
        %v1800 = vadd.f32 %v1790, %v1798
        %v1801 = vadd.f32 %v1791, %v1798
        %v1802 = vadd.f32 %v1792, %v1798
        %v1803 = vadd.f32 %v1793, %v1798
        %v1804 = vmax.f32 %v1800, 0.0
        %v1805 = vmax.f32 %v1801, 0.0
        %v1806 = vmax.f32 %v1802, 0.0
        %v1807 = vmax.f32 %v1803, 0.0
        %v1809 = vlaneseq
        %v1810 = vshrl.u32 %v1809, 7
        %v1811 = vsub.s32 0, %v1810
        %v1812 = vrot.slane %v250, %v1811
        %v1813 = vlaneseq
        %v1814 = vshrl.u32 %v1813, 7
        %v1815 = vsub.s32 1, %v1814
        %v1816 = vrot.slane %v250, %v1815
        %v1817 = vlaneseq
        %v1818 = vshrl.u32 %v1817, 7
        %v1819 = vsub.s32 2, %v1818
        %v1820 = vrot.slane %v250, %v1819
        %1821 = vrot.lane.b32.xlu0 %v1812, 109
        %v1822 = vpop.permute.xlu0 %1821
        %1823 = vrot.lane.b32.xlu0 %v1816, 109
        %v1824 = vpop.permute.xlu0 %1823
        %1825 = vrot.lane.b32.xlu0 %v1820, 109
        %v1826 = vpop.permute.xlu0 %1825
        %v1827 = vsel %vm919, %v1822, %v1824
        %v1828 = vsel %vm919, %v1824, %v1826
        %v1833 = vmul.f32 %v1804, %v1822
        %v1834 = vmul.f32 %v1805, %v1827
        %v1835 = vmul.f32 %v1806, %v1828
        %v1836 = vmul.f32 %v1807, %v1826
        %1837 = vst [vmem:[#allocation2] sm:$0xff] 0.0
        %1838 = vst [vmem:[#allocation2 + $0x8] sm:$0xff] 0.0
        %1839 = vst [vmem:[#allocation2 + $0x10] sm:$0xf] 0.0
        %v1844 = vcombine.low %v1833, %v1834
        %v1845 = vcombine.low %v1835, %v1836
        %1846 = vrot.lane.b32.xlu0 %v1844, 19
        %v1847 = vpop.permute.xlu0 %1846
        %1848 = vrot.lane.b32.xlu0 %v1845, 19
        %v1849 = vpop.permute.xlu0 %1848
        %v1850 = vrot.slane %v1847, 4
        %v1851 = vrot.slane %v1849, 4
        %vm1852 = vcmask 1043456
        %v1853 = vsel %vm1852, %v1850, %v1851
        %vm1854 = vcmask 154624
        %v1855 = vsel %vm1854, %v1847, %v1853
        %v1856 = vsel %vm1854, %v1849, %v1851
        %1859 = vst [vmem:[#allocation2 + $0x4] sm:$0xff] %v1855
        %1860 = vst [vmem:[#allocation2 + $0xc] sm:$0xf] %v1856
        %v1861 = vld [vmem:[%s249 + $0x4] sm:$0xff]
        %v1862 = vld [vmem:[%s249 + $0xc] sm:$0xf]
        %v1863 = vld [vmem:[#allocation2] sm:$0xff]
        %v1864 = vld [vmem:[#allocation2 + $0x8] sm:$0xff]
        %v1865 = vld [vmem:[%s3] sm:$0xf]
        %1867 = vset.pattern.permute.xlu0 0
        %1868 = vperm.xlu0 %1867, %v1865
        %v1869 = vpop.permute.xlu0 %1868
        %v1873 = vlaneseq
        %v1874 = vshrl.u32 %v1873, 7
        %v1875 = vsub.s32 0, %v1874
        %v1876 = vrot.slane %v1863, %v1875
        %v1877 = vlaneseq
        %v1878 = vshrl.u32 %v1877, 7
        %v1879 = vsub.s32 4, %v1878
        %v1880 = vrot.slane %v1863, %v1879
        %v1881 = vlaneseq
        %v1882 = vshrl.u32 %v1881, 7
        %v1883 = vsub.s32 0, %v1882
        %v1884 = vrot.slane %v1864, %v1883
        %v1885 = vlaneseq
        %v1886 = vshrl.u32 %v1885, 7
        %v1887 = vsub.s32 4, %v1886
        %v1888 = vrot.slane %v1864, %v1887
        %v1893 = vlaneseq
        %v1894 = vshrl.u32 %v1893, 7
        %v1895 = vsub.s32 0, %v1894
        %v1896 = vrot.slane %v1876, %v1895
        %v1897 = vlaneseq
        %v1898 = vshrl.u32 %v1897, 7
        %v1899 = vsub.s32 0, %v1898
        %v1900 = vrot.slane %v1880, %v1899
        %v1901 = vlaneseq
        %v1902 = vshrl.u32 %v1901, 7
        %v1903 = vsub.s32 0, %v1902
        %v1904 = vrot.slane %v1884, %v1903
        %v1905 = vlaneseq
        %v1906 = vshrl.u32 %v1905, 7
        %v1907 = vsub.s32 0, %v1906
        %v1908 = vrot.slane %v1888, %v1907
        %v1909 = vmul.f32 %v1869, %v1896
        %v1910 = vmul.f32 %v1869, %v1900
        %v1911 = vmul.f32 %v1869, %v1904
        %v1912 = vmul.f32 %v1869, %v1908
        %v1913 = vadd.f32 %v1909, 0.0
        %v1914 = vadd.f32 %v1910, 0.0
        %v1915 = vadd.f32 %v1911, 0.0
        %v1916 = vadd.f32 %v1912, 0.0
        %s1917 = scalar_lea.vmem %s3, 4
        %v1918 = vld [vmem:[%s1917] sm:$0xf]
        %1920 = vset.pattern.permute.xlu0 0
        %1921 = vperm.xlu0 %1920, %v1918
        %v1922 = vpop.permute.xlu0 %1921
        %v1924 = vlaneseq
        %v1925 = vshrl.u32 %v1924, 7
        %v1926 = vsub.s32 1, %v1925
        %v1927 = vrot.slane %v1863, %v1926
        %v1928 = vlaneseq
        %v1929 = vshrl.u32 %v1928, 7
        %v1930 = vsub.s32 5, %v1929
        %v1931 = vrot.slane %v1863, %v1930
        %v1932 = vlaneseq
        %v1933 = vshrl.u32 %v1932, 7
        %v1934 = vsub.s32 1, %v1933
        %v1935 = vrot.slane %v1864, %v1934
        %v1936 = vlaneseq
        %v1937 = vshrl.u32 %v1936, 7
        %v1938 = vsub.s32 5, %v1937
        %v1939 = vrot.slane %v1864, %v1938
        %v1944 = vlaneseq
        %v1945 = vshrl.u32 %v1944, 7
        %v1946 = vsub.s32 1, %v1945
        %v1947 = vrot.slane %v1927, %v1946
        %v1948 = vlaneseq
        %v1949 = vshrl.u32 %v1948, 7
        %v1950 = vsub.s32 1, %v1949
        %v1951 = vrot.slane %v1931, %v1950
        %v1952 = vlaneseq
        %v1953 = vshrl.u32 %v1952, 7
        %v1954 = vsub.s32 1, %v1953
        %v1955 = vrot.slane %v1935, %v1954
        %v1956 = vlaneseq
        %v1957 = vshrl.u32 %v1956, 7
        %v1958 = vsub.s32 1, %v1957
        %v1959 = vrot.slane %v1939, %v1958
        %v1960 = vmul.f32 %v1922, %v1947
        %v1961 = vmul.f32 %v1922, %v1951
        %v1962 = vmul.f32 %v1922, %v1955
        %v1963 = vmul.f32 %v1922, %v1959
        %v1964 = vadd.f32 %v1913, %v1960
        %v1965 = vadd.f32 %v1914, %v1961
        %v1966 = vadd.f32 %v1915, %v1962
        %v1967 = vadd.f32 %v1916, %v1963
        %s1968 = scalar_lea.vmem %s3, 8
        %v1969 = vld [vmem:[%s1968] sm:$0xf]
        %1971 = vset.pattern.permute.xlu0 0
        %1972 = vperm.xlu0 %1971, %v1969
        %v1973 = vpop.permute.xlu0 %1972
        %v1975 = vlaneseq
        %v1976 = vshrl.u32 %v1975, 7
        %v1977 = vsub.s32 2, %v1976
        %v1978 = vrot.slane %v1863, %v1977
        %v1979 = vlaneseq
        %v1980 = vshrl.u32 %v1979, 7
        %v1981 = vsub.s32 6, %v1980
        %v1982 = vrot.slane %v1863, %v1981
        %v1983 = vlaneseq
        %v1984 = vshrl.u32 %v1983, 7
        %v1985 = vsub.s32 2, %v1984
        %v1986 = vrot.slane %v1864, %v1985
        %v1987 = vlaneseq
        %v1988 = vshrl.u32 %v1987, 7
        %v1989 = vsub.s32 6, %v1988
        %v1990 = vrot.slane %v1864, %v1989
        %v1995 = vlaneseq
        %v1996 = vshrl.u32 %v1995, 7
        %v1997 = vsub.s32 2, %v1996
        %v1998 = vrot.slane %v1978, %v1997
        %v1999 = vlaneseq
        %v2000 = vshrl.u32 %v1999, 7
        %v2001 = vsub.s32 2, %v2000
        %v2002 = vrot.slane %v1982, %v2001
        %v2003 = vlaneseq
        %v2004 = vshrl.u32 %v2003, 7
        %v2005 = vsub.s32 2, %v2004
        %v2006 = vrot.slane %v1986, %v2005
        %v2007 = vlaneseq
        %v2008 = vshrl.u32 %v2007, 7
        %v2009 = vsub.s32 2, %v2008
        %v2010 = vrot.slane %v1990, %v2009
        %v2011 = vmul.f32 %v1973, %v1998
        %v2012 = vmul.f32 %v1973, %v2002
        %v2013 = vmul.f32 %v1973, %v2006
        %v2014 = vmul.f32 %v1973, %v2010
        %v2015 = vadd.f32 %v1964, %v2011
        %v2016 = vadd.f32 %v1965, %v2012
        %v2017 = vadd.f32 %v1966, %v2013
        %v2018 = vadd.f32 %v1967, %v2014
        %s2019 = scalar_lea.vmem %s3, 12
        %v2020 = vld [vmem:[%s2019] sm:$0xf]
        %2022 = vset.pattern.permute.xlu0 0
        %2023 = vperm.xlu0 %2022, %v2020
        %v2024 = vpop.permute.xlu0 %2023
        %v2026 = vlaneseq
        %v2027 = vshrl.u32 %v2026, 7
        %v2028 = vsub.s32 3, %v2027
        %v2029 = vrot.slane %v1863, %v2028
        %v2030 = vlaneseq
        %v2031 = vshrl.u32 %v2030, 7
        %v2032 = vsub.s32 7, %v2031
        %v2033 = vrot.slane %v1863, %v2032
        %v2034 = vlaneseq
        %v2035 = vshrl.u32 %v2034, 7
        %v2036 = vsub.s32 3, %v2035
        %v2037 = vrot.slane %v1864, %v2036
        %v2038 = vlaneseq
        %v2039 = vshrl.u32 %v2038, 7
        %v2040 = vsub.s32 7, %v2039
        %v2041 = vrot.slane %v1864, %v2040
        %v2046 = vlaneseq
        %v2047 = vshrl.u32 %v2046, 7
        %v2048 = vsub.s32 3, %v2047
        %v2049 = vrot.slane %v2029, %v2048
        %v2050 = vlaneseq
        %v2051 = vshrl.u32 %v2050, 7
        %v2052 = vsub.s32 3, %v2051
        %v2053 = vrot.slane %v2033, %v2052
        %v2054 = vlaneseq
        %v2055 = vshrl.u32 %v2054, 7
        %v2056 = vsub.s32 3, %v2055
        %v2057 = vrot.slane %v2037, %v2056
        %v2058 = vlaneseq
        %v2059 = vshrl.u32 %v2058, 7
        %v2060 = vsub.s32 3, %v2059
        %v2061 = vrot.slane %v2041, %v2060
        %v2062 = vmul.f32 %v2024, %v2049
        %v2063 = vmul.f32 %v2024, %v2053
        %v2064 = vmul.f32 %v2024, %v2057
        %v2065 = vmul.f32 %v2024, %v2061
        %v2066 = vadd.f32 %v2015, %v2062
        %v2067 = vadd.f32 %v2016, %v2063
        %v2068 = vadd.f32 %v2017, %v2064
        %v2069 = vadd.f32 %v2018, %v2065
        %s2070 = scalar_lea.vmem %s3, 16
        %v2071 = vld [vmem:[%s2070] sm:$0xf]
        %2073 = vset.pattern.permute.xlu0 0
        %2074 = vperm.xlu0 %2073, %v2071
        %v2075 = vpop.permute.xlu0 %2074
        %v2077 = vmul.f32 %v2075, %v1896
        %v2078 = vmul.f32 %v2075, %v1900
        %v2079 = vmul.f32 %v2075, %v1904
        %v2080 = vmul.f32 %v2075, %v1908
        %2085 = vrot.lane.b32.xlu0 %v2077, 127
        %v2086 = vpop.permute.xlu0 %2085
        %2087 = vrot.lane.b32.xlu0 %v2078, 127
        %v2088 = vpop.permute.xlu0 %2087
        %2089 = vrot.lane.b32.xlu0 %v2079, 127
        %v2090 = vpop.permute.xlu0 %2089
        %2091 = vrot.lane.b32.xlu0 %v2080, 127
        %v2092 = vpop.permute.xlu0 %2091
        %v2093 = vsel %vm481, %v2086, %v2088
        %v2094 = vsel %vm481, %v2088, %v2090
        %v2095 = vsel %vm481, %v2090, %v2092
        %v2100 = vadd.f32 %v2066, %v2093
        %v2101 = vadd.f32 %v2067, %v2094
        %v2102 = vadd.f32 %v2068, %v2095
        %v2103 = vadd.f32 %v2069, %v2092
        %s2104 = scalar_lea.vmem %s3, 20
        %v2105 = vld [vmem:[%s2104] sm:$0xf]
        %2107 = vset.pattern.permute.xlu0 0
        %2108 = vperm.xlu0 %2107, %v2105
        %v2109 = vpop.permute.xlu0 %2108
        %v2111 = vmul.f32 %v2109, %v1947
        %v2112 = vmul.f32 %v2109, %v1951
        %v2113 = vmul.f32 %v2109, %v1955
        %v2114 = vmul.f32 %v2109, %v1959
        %2119 = vrot.lane.b32.xlu0 %v2111, 127
        %v2120 = vpop.permute.xlu0 %2119
        %2121 = vrot.lane.b32.xlu0 %v2112, 127
        %v2122 = vpop.permute.xlu0 %2121
        %2123 = vrot.lane.b32.xlu0 %v2113, 127
        %v2124 = vpop.permute.xlu0 %2123
        %2125 = vrot.lane.b32.xlu0 %v2114, 127
        %v2126 = vpop.permute.xlu0 %2125
        %v2127 = vsel %vm481, %v2120, %v2122
        %v2128 = vsel %vm481, %v2122, %v2124
        %v2129 = vsel %vm481, %v2124, %v2126
        %v2134 = vadd.f32 %v2100, %v2127
        %v2135 = vadd.f32 %v2101, %v2128
        %v2136 = vadd.f32 %v2102, %v2129
        %v2137 = vadd.f32 %v2103, %v2126
        %s2138 = scalar_lea.vmem %s3, 24
        %v2139 = vld [vmem:[%s2138] sm:$0xf]
        %2141 = vset.pattern.permute.xlu0 0
        %2142 = vperm.xlu0 %2141, %v2139
        %v2143 = vpop.permute.xlu0 %2142
        %v2145 = vmul.f32 %v2143, %v1998
        %v2146 = vmul.f32 %v2143, %v2002
        %v2147 = vmul.f32 %v2143, %v2006
        %v2148 = vmul.f32 %v2143, %v2010
        %2153 = vrot.lane.b32.xlu0 %v2145, 127
        %v2154 = vpop.permute.xlu0 %2153
        %2155 = vrot.lane.b32.xlu0 %v2146, 127
        %v2156 = vpop.permute.xlu0 %2155
        %2157 = vrot.lane.b32.xlu0 %v2147, 127
        %v2158 = vpop.permute.xlu0 %2157
        %2159 = vrot.lane.b32.xlu0 %v2148, 127
        %v2160 = vpop.permute.xlu0 %2159
        %v2161 = vsel %vm481, %v2154, %v2156
        %v2162 = vsel %vm481, %v2156, %v2158
        %v2163 = vsel %vm481, %v2158, %v2160
        %v2168 = vadd.f32 %v2134, %v2161
        %v2169 = vadd.f32 %v2135, %v2162
        %v2170 = vadd.f32 %v2136, %v2163
        %v2171 = vadd.f32 %v2137, %v2160
        %s2172 = scalar_lea.vmem %s3, 28
        %v2173 = vld [vmem:[%s2172] sm:$0xf]
        %2175 = vset.pattern.permute.xlu0 0
        %2176 = vperm.xlu0 %2175, %v2173
        %v2177 = vpop.permute.xlu0 %2176
        %v2179 = vmul.f32 %v2177, %v2049
        %v2180 = vmul.f32 %v2177, %v2053
        %v2181 = vmul.f32 %v2177, %v2057
        %v2182 = vmul.f32 %v2177, %v2061
        %2187 = vrot.lane.b32.xlu0 %v2179, 127
        %v2188 = vpop.permute.xlu0 %2187
        %2189 = vrot.lane.b32.xlu0 %v2180, 127
        %v2190 = vpop.permute.xlu0 %2189
        %2191 = vrot.lane.b32.xlu0 %v2181, 127
        %v2192 = vpop.permute.xlu0 %2191
        %2193 = vrot.lane.b32.xlu0 %v2182, 127
        %v2194 = vpop.permute.xlu0 %2193
        %v2195 = vsel %vm481, %v2188, %v2190
        %v2196 = vsel %vm481, %v2190, %v2192
        %v2197 = vsel %vm481, %v2192, %v2194
        %v2202 = vadd.f32 %v2168, %v2195
        %v2203 = vadd.f32 %v2169, %v2196
        %v2204 = vadd.f32 %v2170, %v2197
        %v2205 = vadd.f32 %v2171, %v2194
        %s2206 = scalar_lea.vmem %s3, 32
        %v2207 = vld [vmem:[%s2206] sm:$0xf]
        %2209 = vset.pattern.permute.xlu0 0
        %2210 = vperm.xlu0 %2209, %v2207
        %v2211 = vpop.permute.xlu0 %2210
        %v2213 = vmul.f32 %v2211, %v1896
        %v2214 = vmul.f32 %v2211, %v1900
        %v2215 = vmul.f32 %v2211, %v1904
        %v2216 = vmul.f32 %v2211, %v1908
        %2221 = vrot.lane.b32.xlu0 %v2213, 126
        %v2222 = vpop.permute.xlu0 %2221
        %2223 = vrot.lane.b32.xlu0 %v2214, 126
        %v2224 = vpop.permute.xlu0 %2223
        %2225 = vrot.lane.b32.xlu0 %v2215, 126
        %v2226 = vpop.permute.xlu0 %2225
        %2227 = vrot.lane.b32.xlu0 %v2216, 126
        %v2228 = vpop.permute.xlu0 %2227
        %v2229 = vsel %vm618, %v2222, %v2224
        %v2230 = vsel %vm618, %v2224, %v2226
        %v2231 = vsel %vm618, %v2226, %v2228
        %v2236 = vadd.f32 %v2202, %v2229
        %v2237 = vadd.f32 %v2203, %v2230
        %v2238 = vadd.f32 %v2204, %v2231
        %v2239 = vadd.f32 %v2205, %v2228
        %s2240 = scalar_lea.vmem %s3, 36
        %v2241 = vld [vmem:[%s2240] sm:$0xf]
        %2243 = vset.pattern.permute.xlu0 0
        %2244 = vperm.xlu0 %2243, %v2241
        %v2245 = vpop.permute.xlu0 %2244
        %v2247 = vmul.f32 %v2245, %v1947
        %v2248 = vmul.f32 %v2245, %v1951
        %v2249 = vmul.f32 %v2245, %v1955
        %v2250 = vmul.f32 %v2245, %v1959
        %2255 = vrot.lane.b32.xlu0 %v2247, 126
        %v2256 = vpop.permute.xlu0 %2255
        %2257 = vrot.lane.b32.xlu0 %v2248, 126
        %v2258 = vpop.permute.xlu0 %2257
        %2259 = vrot.lane.b32.xlu0 %v2249, 126
        %v2260 = vpop.permute.xlu0 %2259
        %2261 = vrot.lane.b32.xlu0 %v2250, 126
        %v2262 = vpop.permute.xlu0 %2261
        %v2263 = vsel %vm618, %v2256, %v2258
        %v2264 = vsel %vm618, %v2258, %v2260
        %v2265 = vsel %vm618, %v2260, %v2262
        %v2270 = vadd.f32 %v2236, %v2263
        %v2271 = vadd.f32 %v2237, %v2264
        %v2272 = vadd.f32 %v2238, %v2265
        %v2273 = vadd.f32 %v2239, %v2262
        %s2274 = scalar_lea.vmem %s3, 40
        %v2275 = vld [vmem:[%s2274] sm:$0xf]
        %2277 = vset.pattern.permute.xlu0 0
        %2278 = vperm.xlu0 %2277, %v2275
        %v2279 = vpop.permute.xlu0 %2278
        %v2281 = vmul.f32 %v2279, %v1998
        %v2282 = vmul.f32 %v2279, %v2002
        %v2283 = vmul.f32 %v2279, %v2006
        %v2284 = vmul.f32 %v2279, %v2010
        %2289 = vrot.lane.b32.xlu0 %v2281, 126
        %v2290 = vpop.permute.xlu0 %2289
        %2291 = vrot.lane.b32.xlu0 %v2282, 126
        %v2292 = vpop.permute.xlu0 %2291
        %2293 = vrot.lane.b32.xlu0 %v2283, 126
        %v2294 = vpop.permute.xlu0 %2293
        %2295 = vrot.lane.b32.xlu0 %v2284, 126
        %v2296 = vpop.permute.xlu0 %2295
        %v2297 = vsel %vm618, %v2290, %v2292
        %v2298 = vsel %vm618, %v2292, %v2294
        %v2299 = vsel %vm618, %v2294, %v2296
        %v2304 = vadd.f32 %v2270, %v2297
        %v2305 = vadd.f32 %v2271, %v2298
        %v2306 = vadd.f32 %v2272, %v2299
        %v2307 = vadd.f32 %v2273, %v2296
        %s2308 = scalar_lea.vmem %s3, 44
        %v2309 = vld [vmem:[%s2308] sm:$0xf]
        %2311 = vset.pattern.permute.xlu0 0
        %2312 = vperm.xlu0 %2311, %v2309
        %v2313 = vpop.permute.xlu0 %2312
        %v2315 = vmul.f32 %v2313, %v2049
        %v2316 = vmul.f32 %v2313, %v2053
        %v2317 = vmul.f32 %v2313, %v2057
        %v2318 = vmul.f32 %v2313, %v2061
        %2323 = vrot.lane.b32.xlu0 %v2315, 126
        %v2324 = vpop.permute.xlu0 %2323
        %2325 = vrot.lane.b32.xlu0 %v2316, 126
        %v2326 = vpop.permute.xlu0 %2325
        %2327 = vrot.lane.b32.xlu0 %v2317, 126
        %v2328 = vpop.permute.xlu0 %2327
        %2329 = vrot.lane.b32.xlu0 %v2318, 126
        %v2330 = vpop.permute.xlu0 %2329
        %v2331 = vsel %vm618, %v2324, %v2326
        %v2332 = vsel %vm618, %v2326, %v2328
        %v2333 = vsel %vm618, %v2328, %v2330
        %v2338 = vadd.f32 %v2304, %v2331
        %v2339 = vadd.f32 %v2305, %v2332
        %v2340 = vadd.f32 %v2306, %v2333
        %v2341 = vadd.f32 %v2307, %v2330
        %s2342 = scalar_lea.vmem %s3, 48
        %v2343 = vld [vmem:[%s2342] sm:$0xf]
        %2345 = vset.pattern.permute.xlu0 0
        %2346 = vperm.xlu0 %2345, %v2343
        %v2347 = vpop.permute.xlu0 %2346
        %v2349 = vmul.f32 %v2347, %v1896
        %v2350 = vmul.f32 %v2347, %v1900
        %v2351 = vmul.f32 %v2347, %v1904
        %v2352 = vmul.f32 %v2347, %v1908
        %2357 = vrot.lane.b32.xlu0 %v2349, 110
        %v2358 = vpop.permute.xlu0 %2357
        %2359 = vrot.lane.b32.xlu0 %v2350, 110
        %v2360 = vpop.permute.xlu0 %2359
        %2361 = vrot.lane.b32.xlu0 %v2351, 110
        %v2362 = vpop.permute.xlu0 %2361
        %2363 = vrot.lane.b32.xlu0 %v2352, 110
        %v2364 = vpop.permute.xlu0 %2363
        %v2365 = vsel %vm755, %v2358, %v2360
        %v2366 = vsel %vm755, %v2360, %v2362
        %v2367 = vsel %vm755, %v2362, %v2364
        %v2372 = vadd.f32 %v2338, %v2365
        %v2373 = vadd.f32 %v2339, %v2366
        %v2374 = vadd.f32 %v2340, %v2367
        %v2375 = vadd.f32 %v2341, %v2364
        %s2376 = scalar_lea.vmem %s3, 52
        %v2377 = vld [vmem:[%s2376] sm:$0xf]
        %2379 = vset.pattern.permute.xlu0 0
        %2380 = vperm.xlu0 %2379, %v2377
        %v2381 = vpop.permute.xlu0 %2380
        %v2383 = vmul.f32 %v2381, %v1947
        %v2384 = vmul.f32 %v2381, %v1951
        %v2385 = vmul.f32 %v2381, %v1955
        %v2386 = vmul.f32 %v2381, %v1959
        %2391 = vrot.lane.b32.xlu0 %v2383, 110
        %v2392 = vpop.permute.xlu0 %2391
        %2393 = vrot.lane.b32.xlu0 %v2384, 110
        %v2394 = vpop.permute.xlu0 %2393
        %2395 = vrot.lane.b32.xlu0 %v2385, 110
        %v2396 = vpop.permute.xlu0 %2395
        %2397 = vrot.lane.b32.xlu0 %v2386, 110
        %v2398 = vpop.permute.xlu0 %2397
        %v2399 = vsel %vm755, %v2392, %v2394
        %v2400 = vsel %vm755, %v2394, %v2396
        %v2401 = vsel %vm755, %v2396, %v2398
        %v2406 = vadd.f32 %v2372, %v2399
        %v2407 = vadd.f32 %v2373, %v2400
        %v2408 = vadd.f32 %v2374, %v2401
        %v2409 = vadd.f32 %v2375, %v2398
        %s2410 = scalar_lea.vmem %s3, 56
        %v2411 = vld [vmem:[%s2410] sm:$0xf]
        %2413 = vset.pattern.permute.xlu0 0
        %2414 = vperm.xlu0 %2413, %v2411
        %v2415 = vpop.permute.xlu0 %2414
        %v2417 = vmul.f32 %v2415, %v1998
        %v2418 = vmul.f32 %v2415, %v2002
        %v2419 = vmul.f32 %v2415, %v2006
        %v2420 = vmul.f32 %v2415, %v2010
        %2425 = vrot.lane.b32.xlu0 %v2417, 110
        %v2426 = vpop.permute.xlu0 %2425
        %2427 = vrot.lane.b32.xlu0 %v2418, 110
        %v2428 = vpop.permute.xlu0 %2427
        %2429 = vrot.lane.b32.xlu0 %v2419, 110
        %v2430 = vpop.permute.xlu0 %2429
        %2431 = vrot.lane.b32.xlu0 %v2420, 110
        %v2432 = vpop.permute.xlu0 %2431
        %v2433 = vsel %vm755, %v2426, %v2428
        %v2434 = vsel %vm755, %v2428, %v2430
        %v2435 = vsel %vm755, %v2430, %v2432
        %v2440 = vadd.f32 %v2406, %v2433
        %v2441 = vadd.f32 %v2407, %v2434
        %v2442 = vadd.f32 %v2408, %v2435
        %v2443 = vadd.f32 %v2409, %v2432
        %s2444 = scalar_lea.vmem %s3, 60
        %v2445 = vld [vmem:[%s2444] sm:$0xf]
        %2447 = vset.pattern.permute.xlu0 0
        %2448 = vperm.xlu0 %2447, %v2445
        %v2449 = vpop.permute.xlu0 %2448
        %v2451 = vmul.f32 %v2449, %v2049
        %v2452 = vmul.f32 %v2449, %v2053
        %v2453 = vmul.f32 %v2449, %v2057
        %v2454 = vmul.f32 %v2449, %v2061
        %2459 = vrot.lane.b32.xlu0 %v2451, 110
        %v2460 = vpop.permute.xlu0 %2459
        %2461 = vrot.lane.b32.xlu0 %v2452, 110
        %v2462 = vpop.permute.xlu0 %2461
        %2463 = vrot.lane.b32.xlu0 %v2453, 110
        %v2464 = vpop.permute.xlu0 %2463
        %2465 = vrot.lane.b32.xlu0 %v2454, 110
        %v2466 = vpop.permute.xlu0 %2465
        %v2467 = vsel %vm755, %v2460, %v2462
        %v2468 = vsel %vm755, %v2462, %v2464
        %v2469 = vsel %vm755, %v2464, %v2466
        %v2474 = vadd.f32 %v2440, %v2467
        %v2475 = vadd.f32 %v2441, %v2468
        %v2476 = vadd.f32 %v2442, %v2469
        %v2477 = vadd.f32 %v2443, %v2466
        %v2478 = vld [vmem:[#allocation2 + $0x4] sm:$0xff]
        %v2479 = vld [vmem:[#allocation2 + $0xc] sm:$0xf]
        %s2480 = scalar_lea.vmem %s3, 64
        %v2481 = vld [vmem:[%s2480] sm:$0xf]
        %2483 = vset.pattern.permute.xlu0 0
        %2484 = vperm.xlu0 %2483, %v2481
        %v2485 = vpop.permute.xlu0 %2484
        %v2489 = vlaneseq
        %v2490 = vshrl.u32 %v2489, 7
        %v2491 = vsub.s32 0, %v2490
        %v2492 = vrot.slane %v2478, %v2491
        %v2493 = vlaneseq
        %v2494 = vshrl.u32 %v2493, 7
        %v2495 = vsub.s32 4, %v2494
        %v2496 = vrot.slane %v2478, %v2495
        %v2497 = vlaneseq
        %v2498 = vshrl.u32 %v2497, 7
        %v2499 = vsub.s32 0, %v2498
        %v2500 = vrot.slane %v2479, %v2499
        %v2504 = vlaneseq
        %v2505 = vshrl.u32 %v2504, 7
        %v2506 = vsub.s32 0, %v2505
        %v2507 = vrot.slane %v2492, %v2506
        %v2508 = vlaneseq
        %v2509 = vshrl.u32 %v2508, 7
        %v2510 = vsub.s32 0, %v2509
        %v2511 = vrot.slane %v2496, %v2510
        %v2512 = vlaneseq
        %v2513 = vshrl.u32 %v2512, 7
        %v2514 = vsub.s32 0, %v2513
        %v2515 = vrot.slane %v2500, %v2514
        %v2516 = vmul.f32 %v2485, %v2507
        %v2517 = vmul.f32 %v2485, %v2511
        %v2518 = vmul.f32 %v2485, %v2515
        %2522 = vrot.lane.b32.xlu0 %v2516, 109
        %v2523 = vpop.permute.xlu0 %2522
        %2524 = vrot.lane.b32.xlu0 %v2517, 109
        %v2525 = vpop.permute.xlu0 %2524
        %2526 = vrot.lane.b32.xlu0 %v2518, 109
        %v2527 = vpop.permute.xlu0 %2526
        %v2528 = vsel %vm919, %v2523, %v2525
        %v2529 = vsel %vm919, %v2525, %v2527
        %v2534 = vadd.f32 %v2474, %v2523
        %v2535 = vadd.f32 %v2475, %v2528
        %v2536 = vadd.f32 %v2476, %v2529
        %v2537 = vadd.f32 %v2477, %v2527
        %s2538 = scalar_lea.vmem %s3, 68
        %v2539 = vld [vmem:[%s2538] sm:$0xf]
        %2541 = vset.pattern.permute.xlu0 0
        %2542 = vperm.xlu0 %2541, %v2539
        %v2543 = vpop.permute.xlu0 %2542
        %v2545 = vlaneseq
        %v2546 = vshrl.u32 %v2545, 7
        %v2547 = vsub.s32 1, %v2546
        %v2548 = vrot.slane %v2478, %v2547
        %v2549 = vlaneseq
        %v2550 = vshrl.u32 %v2549, 7
        %v2551 = vsub.s32 5, %v2550
        %v2552 = vrot.slane %v2478, %v2551
        %v2553 = vlaneseq
        %v2554 = vshrl.u32 %v2553, 7
        %v2555 = vsub.s32 1, %v2554
        %v2556 = vrot.slane %v2479, %v2555
        %v2560 = vlaneseq
        %v2561 = vshrl.u32 %v2560, 7
        %v2562 = vsub.s32 1, %v2561
        %v2563 = vrot.slane %v2548, %v2562
        %v2564 = vlaneseq
        %v2565 = vshrl.u32 %v2564, 7
        %v2566 = vsub.s32 1, %v2565
        %v2567 = vrot.slane %v2552, %v2566
        %v2568 = vlaneseq
        %v2569 = vshrl.u32 %v2568, 7
        %v2570 = vsub.s32 1, %v2569
        %v2571 = vrot.slane %v2556, %v2570
        %v2572 = vmul.f32 %v2543, %v2563
        %v2573 = vmul.f32 %v2543, %v2567
        %v2574 = vmul.f32 %v2543, %v2571
        %2578 = vrot.lane.b32.xlu0 %v2572, 109
        %v2579 = vpop.permute.xlu0 %2578
        %2580 = vrot.lane.b32.xlu0 %v2573, 109
        %v2581 = vpop.permute.xlu0 %2580
        %2582 = vrot.lane.b32.xlu0 %v2574, 109
        %v2583 = vpop.permute.xlu0 %2582
        %v2584 = vsel %vm919, %v2579, %v2581
        %v2585 = vsel %vm919, %v2581, %v2583
        %v2590 = vadd.f32 %v2534, %v2579
        %v2591 = vadd.f32 %v2535, %v2584
        %v2592 = vadd.f32 %v2536, %v2585
        %v2593 = vadd.f32 %v2537, %v2583
        %s2594 = scalar_lea.vmem %s3, 72
        %v2595 = vld [vmem:[%s2594] sm:$0xf]
        %2597 = vset.pattern.permute.xlu0 0
        %2598 = vperm.xlu0 %2597, %v2595
        %v2599 = vpop.permute.xlu0 %2598
        %v2601 = vlaneseq
        %v2602 = vshrl.u32 %v2601, 7
        %v2603 = vsub.s32 2, %v2602
        %v2604 = vrot.slane %v2478, %v2603
        %v2605 = vlaneseq
        %v2606 = vshrl.u32 %v2605, 7
        %v2607 = vsub.s32 6, %v2606
        %v2608 = vrot.slane %v2478, %v2607
        %v2609 = vlaneseq
        %v2610 = vshrl.u32 %v2609, 7
        %v2611 = vsub.s32 2, %v2610
        %v2612 = vrot.slane %v2479, %v2611
        %v2616 = vlaneseq
        %v2617 = vshrl.u32 %v2616, 7
        %v2618 = vsub.s32 2, %v2617
        %v2619 = vrot.slane %v2604, %v2618
        %v2620 = vlaneseq
        %v2621 = vshrl.u32 %v2620, 7
        %v2622 = vsub.s32 2, %v2621
        %v2623 = vrot.slane %v2608, %v2622
        %v2624 = vlaneseq
        %v2625 = vshrl.u32 %v2624, 7
        %v2626 = vsub.s32 2, %v2625
        %v2627 = vrot.slane %v2612, %v2626
        %v2628 = vmul.f32 %v2599, %v2619
        %v2629 = vmul.f32 %v2599, %v2623
        %v2630 = vmul.f32 %v2599, %v2627
        %2634 = vrot.lane.b32.xlu0 %v2628, 109
        %v2635 = vpop.permute.xlu0 %2634
        %2636 = vrot.lane.b32.xlu0 %v2629, 109
        %v2637 = vpop.permute.xlu0 %2636
        %2638 = vrot.lane.b32.xlu0 %v2630, 109
        %v2639 = vpop.permute.xlu0 %2638
        %v2640 = vsel %vm919, %v2635, %v2637
        %v2641 = vsel %vm919, %v2637, %v2639
        %v2646 = vadd.f32 %v2590, %v2635
        %v2647 = vadd.f32 %v2591, %v2640
        %v2648 = vadd.f32 %v2592, %v2641
        %v2649 = vadd.f32 %v2593, %v2639
        %s2650 = scalar_lea.vmem %s3, 76
        %v2651 = vld [vmem:[%s2650] sm:$0xf]
        %2653 = vset.pattern.permute.xlu0 0
        %2654 = vperm.xlu0 %2653, %v2651
        %v2655 = vpop.permute.xlu0 %2654
        %v2657 = vlaneseq
        %v2658 = vshrl.u32 %v2657, 7
        %v2659 = vsub.s32 3, %v2658
        %v2660 = vrot.slane %v2478, %v2659
        %v2661 = vlaneseq
        %v2662 = vshrl.u32 %v2661, 7
        %v2663 = vsub.s32 7, %v2662
        %v2664 = vrot.slane %v2478, %v2663
        %v2665 = vlaneseq
        %v2666 = vshrl.u32 %v2665, 7
        %v2667 = vsub.s32 3, %v2666
        %v2668 = vrot.slane %v2479, %v2667
        %v2672 = vlaneseq
        %v2673 = vshrl.u32 %v2672, 7
        %v2674 = vsub.s32 3, %v2673
        %v2675 = vrot.slane %v2660, %v2674
        %v2676 = vlaneseq
        %v2677 = vshrl.u32 %v2676, 7
        %v2678 = vsub.s32 3, %v2677
        %v2679 = vrot.slane %v2664, %v2678
        %v2680 = vlaneseq
        %v2681 = vshrl.u32 %v2680, 7
        %v2682 = vsub.s32 3, %v2681
        %v2683 = vrot.slane %v2668, %v2682
        %v2684 = vmul.f32 %v2655, %v2675
        %v2685 = vmul.f32 %v2655, %v2679
        %v2686 = vmul.f32 %v2655, %v2683
        %2690 = vrot.lane.b32.xlu0 %v2684, 109
        %v2691 = vpop.permute.xlu0 %2690
        %2692 = vrot.lane.b32.xlu0 %v2685, 109
        %v2693 = vpop.permute.xlu0 %2692
        %2694 = vrot.lane.b32.xlu0 %v2686, 109
        %v2695 = vpop.permute.xlu0 %2694
        %v2696 = vsel %vm919, %v2691, %v2693
        %v2697 = vsel %vm919, %v2693, %v2695
        %v2702 = vadd.f32 %v2646, %v2691
        %v2703 = vadd.f32 %v2647, %v2696
        %v2704 = vadd.f32 %v2648, %v2697
        %v2705 = vadd.f32 %v2649, %v2695
        %v2706 = vld [vmem:[#allocation2 + $0x4] sm:$0xff]
        %v2707 = vld [vmem:[#allocation2 + $0xc] sm:$0xff]
        %s2708 = scalar_lea.vmem %s3, 80
        %v2709 = vld [vmem:[%s2708] sm:$0xf]
        %2711 = vset.pattern.permute.xlu0 0
        %2712 = vperm.xlu0 %2711, %v2709
        %v2713 = vpop.permute.xlu0 %2712
        %v2717 = vlaneseq
        %v2718 = vshrl.u32 %v2717, 7
        %v2719 = vsub.s32 0, %v2718
        %v2720 = vrot.slane %v2706, %v2719
        %v2721 = vlaneseq
        %v2722 = vshrl.u32 %v2721, 7
        %v2723 = vsub.s32 4, %v2722
        %v2724 = vrot.slane %v2706, %v2723
        %v2725 = vlaneseq
        %v2726 = vshrl.u32 %v2725, 7
        %v2727 = vsub.s32 0, %v2726
        %v2728 = vrot.slane %v2707, %v2727
        %v2729 = vlaneseq
        %v2730 = vshrl.u32 %v2729, 7
        %v2731 = vsub.s32 4, %v2730
        %v2732 = vrot.slane %v2707, %v2731
        %v2737 = vlaneseq
        %v2738 = vshrl.u32 %v2737, 7
        %v2739 = vsub.s32 0, %v2738
        %v2740 = vrot.slane %v2720, %v2739
        %v2741 = vlaneseq
        %v2742 = vshrl.u32 %v2741, 7
        %v2743 = vsub.s32 0, %v2742
        %v2744 = vrot.slane %v2724, %v2743
        %v2745 = vlaneseq
        %v2746 = vshrl.u32 %v2745, 7
        %v2747 = vsub.s32 0, %v2746
        %v2748 = vrot.slane %v2728, %v2747
        %v2749 = vlaneseq
        %v2750 = vshrl.u32 %v2749, 7
        %v2751 = vsub.s32 0, %v2750
        %v2752 = vrot.slane %v2732, %v2751
        %v2753 = vmul.f32 %v2713, %v2740
        %v2754 = vmul.f32 %v2713, %v2744
        %v2755 = vmul.f32 %v2713, %v2748
        %v2756 = vmul.f32 %v2713, %v2752
        %2761 = vrot.lane.b32.xlu0 %v2753, 108
        %v2762 = vpop.permute.xlu0 %2761
        %2763 = vrot.lane.b32.xlu0 %v2754, 108
        %v2764 = vpop.permute.xlu0 %2763
        %2765 = vrot.lane.b32.xlu0 %v2755, 108
        %v2766 = vpop.permute.xlu0 %2765
        %2767 = vrot.lane.b32.xlu0 %v2756, 108
        %v2768 = vpop.permute.xlu0 %2767
        %v2769 = vsel %vm1161, %v2762, %v2764
        %v2770 = vsel %vm1161, %v2764, %v2766
        %v2771 = vsel %vm1161, %v2766, %v2768
        %v2776 = vadd.f32 %v2702, %v2762
        %v2777 = vadd.f32 %v2703, %v2769
        %v2778 = vadd.f32 %v2704, %v2770
        %v2779 = vadd.f32 %v2705, %v2771
        %s2780 = scalar_lea.vmem %s3, 84
        %v2781 = vld [vmem:[%s2780] sm:$0xf]
        %2783 = vset.pattern.permute.xlu0 0
        %2784 = vperm.xlu0 %2783, %v2781
        %v2785 = vpop.permute.xlu0 %2784
        %v2787 = vlaneseq
        %v2788 = vshrl.u32 %v2787, 7
        %v2789 = vsub.s32 1, %v2788
        %v2790 = vrot.slane %v2706, %v2789
        %v2791 = vlaneseq
        %v2792 = vshrl.u32 %v2791, 7
        %v2793 = vsub.s32 5, %v2792
        %v2794 = vrot.slane %v2706, %v2793
        %v2795 = vlaneseq
        %v2796 = vshrl.u32 %v2795, 7
        %v2797 = vsub.s32 1, %v2796
        %v2798 = vrot.slane %v2707, %v2797
        %v2799 = vlaneseq
        %v2800 = vshrl.u32 %v2799, 7
        %v2801 = vsub.s32 5, %v2800
        %v2802 = vrot.slane %v2707, %v2801
        %v2807 = vlaneseq
        %v2808 = vshrl.u32 %v2807, 7
        %v2809 = vsub.s32 1, %v2808
        %v2810 = vrot.slane %v2790, %v2809
        %v2811 = vlaneseq
        %v2812 = vshrl.u32 %v2811, 7
        %v2813 = vsub.s32 1, %v2812
        %v2814 = vrot.slane %v2794, %v2813
        %v2815 = vlaneseq
        %v2816 = vshrl.u32 %v2815, 7
        %v2817 = vsub.s32 1, %v2816
        %v2818 = vrot.slane %v2798, %v2817
        %v2819 = vlaneseq
        %v2820 = vshrl.u32 %v2819, 7
        %v2821 = vsub.s32 1, %v2820
        %v2822 = vrot.slane %v2802, %v2821
        %v2823 = vmul.f32 %v2785, %v2810
        %v2824 = vmul.f32 %v2785, %v2814
        %v2825 = vmul.f32 %v2785, %v2818
        %v2826 = vmul.f32 %v2785, %v2822
        %2831 = vrot.lane.b32.xlu0 %v2823, 108
        %v2832 = vpop.permute.xlu0 %2831
        %2833 = vrot.lane.b32.xlu0 %v2824, 108
        %v2834 = vpop.permute.xlu0 %2833
        %2835 = vrot.lane.b32.xlu0 %v2825, 108
        %v2836 = vpop.permute.xlu0 %2835
        %2837 = vrot.lane.b32.xlu0 %v2826, 108
        %v2838 = vpop.permute.xlu0 %2837
        %v2839 = vsel %vm1161, %v2832, %v2834
        %v2840 = vsel %vm1161, %v2834, %v2836
        %v2841 = vsel %vm1161, %v2836, %v2838
        %v2846 = vadd.f32 %v2776, %v2832
        %v2847 = vadd.f32 %v2777, %v2839
        %v2848 = vadd.f32 %v2778, %v2840
        %v2849 = vadd.f32 %v2779, %v2841
        %s2850 = scalar_lea.vmem %s3, 88
        %v2851 = vld [vmem:[%s2850] sm:$0xf]
        %2853 = vset.pattern.permute.xlu0 0
        %2854 = vperm.xlu0 %2853, %v2851
        %v2855 = vpop.permute.xlu0 %2854
        %v2857 = vlaneseq
        %v2858 = vshrl.u32 %v2857, 7
        %v2859 = vsub.s32 2, %v2858
        %v2860 = vrot.slane %v2706, %v2859
        %v2861 = vlaneseq
        %v2862 = vshrl.u32 %v2861, 7
        %v2863 = vsub.s32 6, %v2862
        %v2864 = vrot.slane %v2706, %v2863
        %v2865 = vlaneseq
        %v2866 = vshrl.u32 %v2865, 7
        %v2867 = vsub.s32 2, %v2866
        %v2868 = vrot.slane %v2707, %v2867
        %v2869 = vlaneseq
        %v2870 = vshrl.u32 %v2869, 7
        %v2871 = vsub.s32 6, %v2870
        %v2872 = vrot.slane %v2707, %v2871
        %v2877 = vlaneseq
        %v2878 = vshrl.u32 %v2877, 7
        %v2879 = vsub.s32 2, %v2878
        %v2880 = vrot.slane %v2860, %v2879
        %v2881 = vlaneseq
        %v2882 = vshrl.u32 %v2881, 7
        %v2883 = vsub.s32 2, %v2882
        %v2884 = vrot.slane %v2864, %v2883
        %v2885 = vlaneseq
        %v2886 = vshrl.u32 %v2885, 7
        %v2887 = vsub.s32 2, %v2886
        %v2888 = vrot.slane %v2868, %v2887
        %v2889 = vlaneseq
        %v2890 = vshrl.u32 %v2889, 7
        %v2891 = vsub.s32 2, %v2890
        %v2892 = vrot.slane %v2872, %v2891
        %v2893 = vmul.f32 %v2855, %v2880
        %v2894 = vmul.f32 %v2855, %v2884
        %v2895 = vmul.f32 %v2855, %v2888
        %v2896 = vmul.f32 %v2855, %v2892
        %2901 = vrot.lane.b32.xlu0 %v2893, 108
        %v2902 = vpop.permute.xlu0 %2901
        %2903 = vrot.lane.b32.xlu0 %v2894, 108
        %v2904 = vpop.permute.xlu0 %2903
        %2905 = vrot.lane.b32.xlu0 %v2895, 108
        %v2906 = vpop.permute.xlu0 %2905
        %2907 = vrot.lane.b32.xlu0 %v2896, 108
        %v2908 = vpop.permute.xlu0 %2907
        %v2909 = vsel %vm1161, %v2902, %v2904
        %v2910 = vsel %vm1161, %v2904, %v2906
        %v2911 = vsel %vm1161, %v2906, %v2908
        %v2916 = vadd.f32 %v2846, %v2902
        %v2917 = vadd.f32 %v2847, %v2909
        %v2918 = vadd.f32 %v2848, %v2910
        %v2919 = vadd.f32 %v2849, %v2911
        %s2920 = scalar_lea.vmem %s3, 92
        %v2921 = vld [vmem:[%s2920] sm:$0xf]
        %2923 = vset.pattern.permute.xlu0 0
        %2924 = vperm.xlu0 %2923, %v2921
        %v2925 = vpop.permute.xlu0 %2924
        %v2927 = vlaneseq
        %v2928 = vshrl.u32 %v2927, 7
        %v2929 = vsub.s32 3, %v2928
        %v2930 = vrot.slane %v2706, %v2929
        %v2931 = vlaneseq
        %v2932 = vshrl.u32 %v2931, 7
        %v2933 = vsub.s32 7, %v2932
        %v2934 = vrot.slane %v2706, %v2933
        %v2935 = vlaneseq
        %v2936 = vshrl.u32 %v2935, 7
        %v2937 = vsub.s32 3, %v2936
        %v2938 = vrot.slane %v2707, %v2937
        %v2939 = vlaneseq
        %v2940 = vshrl.u32 %v2939, 7
        %v2941 = vsub.s32 7, %v2940
        %v2942 = vrot.slane %v2707, %v2941
        %v2947 = vlaneseq
        %v2948 = vshrl.u32 %v2947, 7
        %v2949 = vsub.s32 3, %v2948
        %v2950 = vrot.slane %v2930, %v2949
        %v2951 = vlaneseq
        %v2952 = vshrl.u32 %v2951, 7
        %v2953 = vsub.s32 3, %v2952
        %v2954 = vrot.slane %v2934, %v2953
        %v2955 = vlaneseq
        %v2956 = vshrl.u32 %v2955, 7
        %v2957 = vsub.s32 3, %v2956
        %v2958 = vrot.slane %v2938, %v2957
        %v2959 = vlaneseq
        %v2960 = vshrl.u32 %v2959, 7
        %v2961 = vsub.s32 3, %v2960
        %v2962 = vrot.slane %v2942, %v2961
        %v2963 = vmul.f32 %v2925, %v2950
        %v2964 = vmul.f32 %v2925, %v2954
        %v2965 = vmul.f32 %v2925, %v2958
        %v2966 = vmul.f32 %v2925, %v2962
        %2971 = vrot.lane.b32.xlu0 %v2963, 108
        %v2972 = vpop.permute.xlu0 %2971
        %2973 = vrot.lane.b32.xlu0 %v2964, 108
        %v2974 = vpop.permute.xlu0 %2973
        %2975 = vrot.lane.b32.xlu0 %v2965, 108
        %v2976 = vpop.permute.xlu0 %2975
        %2977 = vrot.lane.b32.xlu0 %v2966, 108
        %v2978 = vpop.permute.xlu0 %2977
        %v2979 = vsel %vm1161, %v2972, %v2974
        %v2980 = vsel %vm1161, %v2974, %v2976
        %v2981 = vsel %vm1161, %v2976, %v2978
        %v2986 = vadd.f32 %v2916, %v2972
        %v2987 = vadd.f32 %v2917, %v2979
        %v2988 = vadd.f32 %v2918, %v2980
        %v2989 = vadd.f32 %v2919, %v2981
        %s2990 = scalar_lea.vmem %s3, 96
        %v2991 = vld [vmem:[%s2990] sm:$0xf]
        %2993 = vset.pattern.permute.xlu0 0
        %2994 = vperm.xlu0 %2993, %v2991
        %v2995 = vpop.permute.xlu0 %2994
        %v2997 = vmul.f32 %v2995, %v2740
        %v2998 = vmul.f32 %v2995, %v2744
        %v2999 = vmul.f32 %v2995, %v2748
        %v3000 = vmul.f32 %v2995, %v2752
        %3005 = vrot.lane.b32.xlu0 %v2997, 92
        %v3006 = vpop.permute.xlu0 %3005
        %3007 = vrot.lane.b32.xlu0 %v2998, 92
        %v3008 = vpop.permute.xlu0 %3007
        %3009 = vrot.lane.b32.xlu0 %v2999, 92
        %v3010 = vpop.permute.xlu0 %3009
        %3011 = vrot.lane.b32.xlu0 %v3000, 92
        %v3012 = vpop.permute.xlu0 %3011
        %v3013 = vsel %vm1406, %v3006, %v3008
        %v3014 = vsel %vm1406, %v3008, %v3010
        %v3015 = vsel %vm1406, %v3010, %v3012
        %v3020 = vadd.f32 %v2986, %v3006
        %v3021 = vadd.f32 %v2987, %v3013
        %v3022 = vadd.f32 %v2988, %v3014
        %v3023 = vadd.f32 %v2989, %v3015
        %s3024 = scalar_lea.vmem %s3, 100
        %v3025 = vld [vmem:[%s3024] sm:$0xf]
        %3027 = vset.pattern.permute.xlu0 0
        %3028 = vperm.xlu0 %3027, %v3025
        %v3029 = vpop.permute.xlu0 %3028
        %v3031 = vmul.f32 %v3029, %v2810
        %v3032 = vmul.f32 %v3029, %v2814
        %v3033 = vmul.f32 %v3029, %v2818
        %v3034 = vmul.f32 %v3029, %v2822
        %3039 = vrot.lane.b32.xlu0 %v3031, 92
        %v3040 = vpop.permute.xlu0 %3039
        %3041 = vrot.lane.b32.xlu0 %v3032, 92
        %v3042 = vpop.permute.xlu0 %3041
        %3043 = vrot.lane.b32.xlu0 %v3033, 92
        %v3044 = vpop.permute.xlu0 %3043
        %3045 = vrot.lane.b32.xlu0 %v3034, 92
        %v3046 = vpop.permute.xlu0 %3045
        %v3047 = vsel %vm1406, %v3040, %v3042
        %v3048 = vsel %vm1406, %v3042, %v3044
        %v3049 = vsel %vm1406, %v3044, %v3046
        %v3054 = vadd.f32 %v3020, %v3040
        %v3055 = vadd.f32 %v3021, %v3047
        %v3056 = vadd.f32 %v3022, %v3048
        %v3057 = vadd.f32 %v3023, %v3049
        %s3058 = scalar_lea.vmem %s3, 104
        %v3059 = vld [vmem:[%s3058] sm:$0xf]
        %3061 = vset.pattern.permute.xlu0 0
        %3062 = vperm.xlu0 %3061, %v3059
        %v3063 = vpop.permute.xlu0 %3062
        %v3065 = vmul.f32 %v3063, %v2880
        %v3066 = vmul.f32 %v3063, %v2884
        %v3067 = vmul.f32 %v3063, %v2888
        %v3068 = vmul.f32 %v3063, %v2892
        %3073 = vrot.lane.b32.xlu0 %v3065, 92
        %v3074 = vpop.permute.xlu0 %3073
        %3075 = vrot.lane.b32.xlu0 %v3066, 92
        %v3076 = vpop.permute.xlu0 %3075
        %3077 = vrot.lane.b32.xlu0 %v3067, 92
        %v3078 = vpop.permute.xlu0 %3077
        %3079 = vrot.lane.b32.xlu0 %v3068, 92
        %v3080 = vpop.permute.xlu0 %3079
        %v3081 = vsel %vm1406, %v3074, %v3076
        %v3082 = vsel %vm1406, %v3076, %v3078
        %v3083 = vsel %vm1406, %v3078, %v3080
        %v3088 = vadd.f32 %v3054, %v3074
        %v3089 = vadd.f32 %v3055, %v3081
        %v3090 = vadd.f32 %v3056, %v3082
        %v3091 = vadd.f32 %v3057, %v3083
        %s3092 = scalar_lea.vmem %s3, 108
        %v3093 = vld [vmem:[%s3092] sm:$0xf]
        %3095 = vset.pattern.permute.xlu0 0
        %3096 = vperm.xlu0 %3095, %v3093
        %v3097 = vpop.permute.xlu0 %3096
        %v3099 = vmul.f32 %v3097, %v2950
        %v3100 = vmul.f32 %v3097, %v2954
        %v3101 = vmul.f32 %v3097, %v2958
        %v3102 = vmul.f32 %v3097, %v2962
        %3107 = vrot.lane.b32.xlu0 %v3099, 92
        %v3108 = vpop.permute.xlu0 %3107
        %3109 = vrot.lane.b32.xlu0 %v3100, 92
        %v3110 = vpop.permute.xlu0 %3109
        %3111 = vrot.lane.b32.xlu0 %v3101, 92
        %v3112 = vpop.permute.xlu0 %3111
        %3113 = vrot.lane.b32.xlu0 %v3102, 92
        %v3114 = vpop.permute.xlu0 %3113
        %v3115 = vsel %vm1406, %v3108, %v3110
        %v3116 = vsel %vm1406, %v3110, %v3112
        %v3117 = vsel %vm1406, %v3112, %v3114
        %v3122 = vadd.f32 %v3088, %v3108
        %v3123 = vadd.f32 %v3089, %v3115
        %v3124 = vadd.f32 %v3090, %v3116
        %v3125 = vadd.f32 %v3091, %v3117
        %s3126 = scalar_lea.vmem %s3, 112
        %v3127 = vld [vmem:[%s3126] sm:$0xf]
        %3129 = vset.pattern.permute.xlu0 0
        %3130 = vperm.xlu0 %3129, %v3127
        %v3131 = vpop.permute.xlu0 %3130
        %v3133 = vmul.f32 %v3131, %v2740
        %v3134 = vmul.f32 %v3131, %v2744
        %v3135 = vmul.f32 %v3131, %v2748
        %v3136 = vmul.f32 %v3131, %v2752
        %3141 = vrot.lane.b32.xlu0 %v3133, 91
        %v3142 = vpop.permute.xlu0 %3141
        %3143 = vrot.lane.b32.xlu0 %v3134, 91
        %v3144 = vpop.permute.xlu0 %3143
        %3145 = vrot.lane.b32.xlu0 %v3135, 91
        %v3146 = vpop.permute.xlu0 %3145
        %3147 = vrot.lane.b32.xlu0 %v3136, 91
        %v3148 = vpop.permute.xlu0 %3147
        %v3149 = vsel %vm1543, %v3142, %v3144
        %v3150 = vsel %vm1543, %v3144, %v3146
        %v3151 = vsel %vm1543, %v3146, %v3148
        %v3156 = vadd.f32 %v3122, %v3142
        %v3157 = vadd.f32 %v3123, %v3149
        %v3158 = vadd.f32 %v3124, %v3150
        %v3159 = vadd.f32 %v3125, %v3151
        %s3160 = scalar_lea.vmem %s3, 116
        %v3161 = vld [vmem:[%s3160] sm:$0xf]
        %3163 = vset.pattern.permute.xlu0 0
        %3164 = vperm.xlu0 %3163, %v3161
        %v3165 = vpop.permute.xlu0 %3164
        %v3167 = vmul.f32 %v3165, %v2810
        %v3168 = vmul.f32 %v3165, %v2814
        %v3169 = vmul.f32 %v3165, %v2818
        %v3170 = vmul.f32 %v3165, %v2822
        %3175 = vrot.lane.b32.xlu0 %v3167, 91
        %v3176 = vpop.permute.xlu0 %3175
        %3177 = vrot.lane.b32.xlu0 %v3168, 91
        %v3178 = vpop.permute.xlu0 %3177
        %3179 = vrot.lane.b32.xlu0 %v3169, 91
        %v3180 = vpop.permute.xlu0 %3179
        %3181 = vrot.lane.b32.xlu0 %v3170, 91
        %v3182 = vpop.permute.xlu0 %3181
        %v3183 = vsel %vm1543, %v3176, %v3178
        %v3184 = vsel %vm1543, %v3178, %v3180
        %v3185 = vsel %vm1543, %v3180, %v3182
        %v3190 = vadd.f32 %v3156, %v3176
        %v3191 = vadd.f32 %v3157, %v3183
        %v3192 = vadd.f32 %v3158, %v3184
        %v3193 = vadd.f32 %v3159, %v3185
        %s3194 = scalar_lea.vmem %s3, 120
        %v3195 = vld [vmem:[%s3194] sm:$0xf]
        %3197 = vset.pattern.permute.xlu0 0
        %3198 = vperm.xlu0 %3197, %v3195
        %v3199 = vpop.permute.xlu0 %3198
        %v3201 = vmul.f32 %v3199, %v2880
        %v3202 = vmul.f32 %v3199, %v2884
        %v3203 = vmul.f32 %v3199, %v2888
        %v3204 = vmul.f32 %v3199, %v2892
        %3209 = vrot.lane.b32.xlu0 %v3201, 91
        %v3210 = vpop.permute.xlu0 %3209
        %3211 = vrot.lane.b32.xlu0 %v3202, 91
        %v3212 = vpop.permute.xlu0 %3211
        %3213 = vrot.lane.b32.xlu0 %v3203, 91
        %v3214 = vpop.permute.xlu0 %3213
        %3215 = vrot.lane.b32.xlu0 %v3204, 91
        %v3216 = vpop.permute.xlu0 %3215
        %v3217 = vsel %vm1543, %v3210, %v3212
        %v3218 = vsel %vm1543, %v3212, %v3214
        %v3219 = vsel %vm1543, %v3214, %v3216
        %v3224 = vadd.f32 %v3190, %v3210
        %v3225 = vadd.f32 %v3191, %v3217
        %v3226 = vadd.f32 %v3192, %v3218
        %v3227 = vadd.f32 %v3193, %v3219
        %s3228 = scalar_lea.vmem %s3, 124
        %v3229 = vld [vmem:[%s3228] sm:$0xf]
        %3231 = vset.pattern.permute.xlu0 0
        %3232 = vperm.xlu0 %3231, %v3229
        %v3233 = vpop.permute.xlu0 %3232
        %v3235 = vmul.f32 %v3233, %v2950
        %v3236 = vmul.f32 %v3233, %v2954
        %v3237 = vmul.f32 %v3233, %v2958
        %v3238 = vmul.f32 %v3233, %v2962
        %3243 = vrot.lane.b32.xlu0 %v3235, 91
        %v3244 = vpop.permute.xlu0 %3243
        %3245 = vrot.lane.b32.xlu0 %v3236, 91
        %v3246 = vpop.permute.xlu0 %3245
        %3247 = vrot.lane.b32.xlu0 %v3237, 91
        %v3248 = vpop.permute.xlu0 %3247
        %3249 = vrot.lane.b32.xlu0 %v3238, 91
        %v3250 = vpop.permute.xlu0 %3249
        %v3251 = vsel %vm1543, %v3244, %v3246
        %v3252 = vsel %vm1543, %v3246, %v3248
        %v3253 = vsel %vm1543, %v3248, %v3250
        %v3258 = vadd.f32 %v3224, %v3244
        %v3259 = vadd.f32 %v3225, %v3251
        %v3260 = vadd.f32 %v3226, %v3252
        %v3261 = vadd.f32 %v3227, %v3253
        %s3262 = scalar_lea.vmem %s3, 128
        %v3263 = vld [vmem:[%s3262] sm:$0xf]
        %3265 = vset.pattern.permute.xlu0 0
        %3266 = vperm.xlu0 %3265, %v3263
        %v3267 = vpop.permute.xlu0 %3266
        %v3269 = vmul.f32 %v3267, %v2740
        %v3270 = vmul.f32 %v3267, %v2744
        %v3271 = vmul.f32 %v3267, %v2748
        %v3272 = vmul.f32 %v3267, %v2752
        %3277 = vrot.lane.b32.xlu0 %v3269, 90
        %v3278 = vpop.permute.xlu0 %3277
        %3279 = vrot.lane.b32.xlu0 %v3270, 90
        %v3280 = vpop.permute.xlu0 %3279
        %3281 = vrot.lane.b32.xlu0 %v3271, 90
        %v3282 = vpop.permute.xlu0 %3281
        %3283 = vrot.lane.b32.xlu0 %v3272, 90
        %v3284 = vpop.permute.xlu0 %3283
        %v3285 = vsel %vm1680, %v3278, %v3280
        %v3286 = vsel %vm1680, %v3280, %v3282
        %v3287 = vsel %vm1680, %v3282, %v3284
        %v3292 = vadd.f32 %v3258, %v3278
        %v3293 = vadd.f32 %v3259, %v3285
        %v3294 = vadd.f32 %v3260, %v3286
        %v3295 = vadd.f32 %v3261, %v3287
        %s3296 = scalar_lea.vmem %s3, 132
        %v3297 = vld [vmem:[%s3296] sm:$0xf]
        %3299 = vset.pattern.permute.xlu0 0
        %3300 = vperm.xlu0 %3299, %v3297
        %v3301 = vpop.permute.xlu0 %3300
        %v3303 = vmul.f32 %v3301, %v2810
        %v3304 = vmul.f32 %v3301, %v2814
        %v3305 = vmul.f32 %v3301, %v2818
        %v3306 = vmul.f32 %v3301, %v2822
        %3311 = vrot.lane.b32.xlu0 %v3303, 90
        %v3312 = vpop.permute.xlu0 %3311
        %3313 = vrot.lane.b32.xlu0 %v3304, 90
        %v3314 = vpop.permute.xlu0 %3313
        %3315 = vrot.lane.b32.xlu0 %v3305, 90
        %v3316 = vpop.permute.xlu0 %3315
        %3317 = vrot.lane.b32.xlu0 %v3306, 90
        %v3318 = vpop.permute.xlu0 %3317
        %v3319 = vsel %vm1680, %v3312, %v3314
        %v3320 = vsel %vm1680, %v3314, %v3316
        %v3321 = vsel %vm1680, %v3316, %v3318
        %v3326 = vadd.f32 %v3292, %v3312
        %v3327 = vadd.f32 %v3293, %v3319
        %v3328 = vadd.f32 %v3294, %v3320
        %v3329 = vadd.f32 %v3295, %v3321
        %s3330 = scalar_lea.vmem %s3, 136
        %v3331 = vld [vmem:[%s3330] sm:$0xf]
        %3333 = vset.pattern.permute.xlu0 0
        %3334 = vperm.xlu0 %3333, %v3331
        %v3335 = vpop.permute.xlu0 %3334
        %v3337 = vmul.f32 %v3335, %v2880
        %v3338 = vmul.f32 %v3335, %v2884
        %v3339 = vmul.f32 %v3335, %v2888
        %v3340 = vmul.f32 %v3335, %v2892
        %3345 = vrot.lane.b32.xlu0 %v3337, 90
        %v3346 = vpop.permute.xlu0 %3345
        %3347 = vrot.lane.b32.xlu0 %v3338, 90
        %v3348 = vpop.permute.xlu0 %3347
        %3349 = vrot.lane.b32.xlu0 %v3339, 90
        %v3350 = vpop.permute.xlu0 %3349
        %3351 = vrot.lane.b32.xlu0 %v3340, 90
        %v3352 = vpop.permute.xlu0 %3351
        %v3353 = vsel %vm1680, %v3346, %v3348
        %v3354 = vsel %vm1680, %v3348, %v3350
        %v3355 = vsel %vm1680, %v3350, %v3352
        %v3360 = vadd.f32 %v3326, %v3346
        %v3361 = vadd.f32 %v3327, %v3353
        %v3362 = vadd.f32 %v3328, %v3354
        %v3363 = vadd.f32 %v3329, %v3355
        %s3364 = scalar_lea.vmem %s3, 140
        %v3365 = vld [vmem:[%s3364] sm:$0xf]
        %3367 = vset.pattern.permute.xlu0 0
        %3368 = vperm.xlu0 %3367, %v3365
        %v3369 = vpop.permute.xlu0 %3368
        %v3371 = vmul.f32 %v3369, %v2950
        %v3372 = vmul.f32 %v3369, %v2954
        %v3373 = vmul.f32 %v3369, %v2958
        %v3374 = vmul.f32 %v3369, %v2962
        %3379 = vrot.lane.b32.xlu0 %v3371, 90
        %v3380 = vpop.permute.xlu0 %3379
        %3381 = vrot.lane.b32.xlu0 %v3372, 90
        %v3382 = vpop.permute.xlu0 %3381
        %3383 = vrot.lane.b32.xlu0 %v3373, 90
        %v3384 = vpop.permute.xlu0 %3383
        %3385 = vrot.lane.b32.xlu0 %v3374, 90
        %v3386 = vpop.permute.xlu0 %3385
        %v3387 = vsel %vm1680, %v3380, %v3382
        %v3388 = vsel %vm1680, %v3382, %v3384
        %v3389 = vsel %vm1680, %v3384, %v3386
        %v3394 = vadd.f32 %v3360, %v3380
        %v3395 = vadd.f32 %v3361, %v3387
        %v3396 = vadd.f32 %v3362, %v3388
        %v3397 = vadd.f32 %v3363, %v3389
        %v3398 = vld [vmem:[%s4] sm:$0xf]
        %3400 = vset.pattern.permute.xlu0 0
        %3401 = vperm.xlu0 %3400, %v3398
        %v3402 = vpop.permute.xlu0 %3401
        %v3404 = vadd.f32 %v3394, %v3402
        %v3405 = vadd.f32 %v3395, %v3402
        %v3406 = vadd.f32 %v3396, %v3402
        %v3407 = vadd.f32 %v3397, %v3402
        %v3410 = vcombine.high %v1861, %v1861
        %3411 = vrot.lane.b32.xlu0 %v1861, 109
        %v3412 = vpop.permute.xlu0 %3411
        %3413 = vrot.lane.b32.xlu0 %v3410, 109
        %v3414 = vpop.permute.xlu0 %3413
        %3415 = vrot.lane.b32.xlu0 %v1862, 109
        %v3416 = vpop.permute.xlu0 %3415
        %v3417 = vsel %vm919, %v3412, %v3414
        %v3418 = vsel %vm919, %v3414, %v3416
        %v3423 = vadd.f32 %v3404, %v3412
        %v3424 = vadd.f32 %v3405, %v3417
        %v3425 = vadd.f32 %v3406, %v3418
        %v3426 = vadd.f32 %v3407, %v3416
        %v3427 = vmax.f32 %v3423, 0.0
        %v3428 = vmax.f32 %v3424, 0.0
        %v3429 = vmax.f32 %v3425, 0.0
        %v3430 = vmax.f32 %v3426, 0.0
        %v3435 = vcombine.low %v3427, %v3428
        %v3436 = vcombine.low %v3429, %v3430
        %3437 = vrot.lane.b32.xlu0 %v3435, 19
        %v3438 = vpop.permute.xlu0 %3437
        %3439 = vrot.lane.b32.xlu0 %v3436, 19
        %v3440 = vpop.permute.xlu0 %3439
        %v3441 = vrot.slane %v3438, 4
        %v3442 = vrot.slane %v3440, 4
        %v3443 = vsel %vm1852, %v3441, %v3442
        %v3444 = vsel %vm1854, %v3438, %v3443
        %v3445 = vsel %vm1854, %v3440, %v3442
        %3448 = vst [vmem:[%s244] sm:$0xff] %v3444
        %3449 = vst [vmem:[%s244 + $0x8] sm:$0xf] %v3445
        %s3450 = sand.u32 %s159, 1
        %s3451 = scalar_lea.sflag [#allocation4], %s3450
        %s3452 = sand.u32 %s159, 1
        %s3453 = smul.addr %s3452, 12
        %s3454 = scalar_lea.vmem [#allocation3], %s3453
        // Predicated region
        $region45: #{tpu_custom_call.1} parent=43 // pred_check
          %p3455 = pneg %p169
        $region46: #{tpu_custom_call.1} parent=43 // pred_check_branch
          %3457 = sbr.rel (%p3455) target = $region48
        $region47: #{tpu_custom_call.1} parent=43 // pred_region
          %s3459 = ssub.s32 192, 192
          %3460 = vsyncadd %s3451, %s3459
          %s3461 = smul.addr %s20, 3
          %s3462 = smul.addr %s3461, 64
          %s3463 = scalar_lea.hbm %s6, %s3462
          %s3465 = sshll.u32 %s3454, 4
          %s3466 = int_to_ptr.vmem [resolvable:$true] %s3465
          %3468 = dma.vmem_to_hbm [thread:$0]  %s3466, 192, %s3463, %s3451
        $region48: #{tpu_custom_call.1} parent=43 // pred_fallthru
          _
      $region44: #{tpu_custom_call.1} parent=5 // pred_fallthru
        _
      %p3469 = scmp.le.s32.totalorder 2, %s15
      // Predicated region
      $region49: #{tpu_custom_call.1} parent=5 // pred_check
        %p3470 = pneg %p3469
      $region50: #{tpu_custom_call.1} parent=5 // pred_check_branch
        %3472 = sbr.rel (%p3470) target = $region52
      $region51: #{tpu_custom_call.1} parent=5 // pred_region
        %s3473 = ssub.s32 %s15, 2
        // Predicated region
        $region53: #{tpu_custom_call.1} parent=51 // pred_check
          %p3474 = pneg %p175
        $region54: #{tpu_custom_call.1} parent=51 // pred_check_branch
          %3476 = sbr.rel (%p3474) target = $region56
        $region55: #{tpu_custom_call.1} parent=51 // pred_region
          %s3477 = sand.u32 %s160, 1
          %s3478 = scalar_lea.sflag [#allocation4], %s3477
          %s3479 = sand.u32 %s160, 1
          %s3480 = smul.addr %s3479, 12
          %s3481 = scalar_lea.vmem [#allocation3], %s3480
          %3482 = dma.done %s3478, 192
        $region56: #{tpu_custom_call.1} parent=51 // pred_fallthru
          _
      $region52: #{tpu_custom_call.1} parent=5 // pred_fallthru
        _
    $region6: #{tpu_custom_call.1} parent=1 // loop_footer
      %s19 = sadd.s32 1, %s15
    $region7: #{tpu_custom_call.1} parent=1 // loop_footer_branch
      %14 = sbr.rel target = $region3
    $region8: #{tpu_custom_call.1} parent=1 // loop_exit
      _
    %3483 = vsyncpa [#allocation4], 1
    %s3484 = scalar_lea.sflag [#allocation4], 1
    %3485 = vsyncpa %s3484, 1

</llo_original>
